<compile_context>
chip_gen: v7x
topology: tpu7x:2x2x1
jax: 0.10.0
libtpu: 0.0.40
codegen_flags: <defaults>
</compile_context>

<pallas_src>
import functools

import jax
import jax.numpy as jnp
from jax.experimental import pallas as pl
from jax.experimental.pallas import tpu as pltpu


# ----------------------------------------------------------------------------
# Small config (stands in for bert-base-uncased + args)
# ----------------------------------------------------------------------------
CFG = dict(
    vocab=100,
    max_pos=16,
    type_vocab=2,
    hidden=128,      # args.hidden_size (kept lane-dense: multiple of 128)
    heads=2,
    layers=2,
    ffn=512,
    labels=2,        # self.labels_num
    batch=2,
    seq=8,
    pooling="first",  # args.pooling -> else-branch: output[:, 0, :]
    use_vm=True,
)
LN_EPS = 1e-12
CPAD = 128           # lane-padded width for 2-wide classifier / gate outputs
DP = 128             # per-head Q/K/V lane-padded width


# ----------------------------------------------------------------------------
# Fully fused kernel: embeddings-LN + L transformer layers + gate + heads
# grid = (layers,)   ("arbitrary": sequential, activations carried in VMEM)
# ----------------------------------------------------------------------------
def _bert_causal_kernel(x_emb_ref, vis_ref, mask_ref, env_ref, embg_ref, embb_ref,
                        wqkv_ref, bqkv_ref, wo_ref, bo_ref, g1_ref, b1_ref,
                        wi_ref, bi_ref, wf_ref, bf_ref, g2_ref, b2_ref,
                        acw1_ref, acb1_ref, acw2_ref, acb2_ref,
                        scw1_ref, scb1_ref, scw2_ref, scb2_ref,
                        ew1m_ref, ew1l_ref, eb1_ref, ew2_ref, eb2_ref,
                        logits_ref, envlog_ref, attn_ref, x_scr,
                        *, num_heads, eps, pooling):
    B, S, H = x_emb_ref.shape
    R = B * S
    dh = H // num_heads                    # true head dim (64); padded to DP=128
    scale = 1.0 / float(dh) ** 0.5
    bf16 = jnp.bfloat16
    f32 = jnp.float32
    l = pl.program_id(0)
    L = pl.num_programs(0)

    def ln(y, g_ref, b_ref):               # y: (R, H) f32 ; gamma/beta: (1, H)
        mu = jnp.mean(y, axis=-1, keepdims=True)
        var = jnp.mean((y - mu) ** 2, axis=-1, keepdims=True)
        return (y - mu) * jax.lax.rsqrt(var + eps) * g_ref[...] + b_ref[...]

    # ---- fold the embedding LayerNorm into the first layer step --------------
    @pl.when(l == 0)
    def _():
        x_scr[...] = ln(x_emb_ref[...].reshape(R, H), embg_ref, embb_ref)

    x = x_scr[...]                                          # (R, H) f32, VMEM-resident
    # additive attention mask built in-kernel from the bf16 visibility matrix
    mask_add = (vis_ref[...].astype(f32) - 1.0) * 10000.0   # (B, S, S)

    # ---- fused QKV projection (per-head columns lane-padded to DP) -----------
    qkv = jnp.dot(x.astype(bf16), wqkv_ref[...],
                  preferred_element_type=f32) + bqkv_ref[...]   # (R, heads*3*DP)

    ctx_parts = []
    for h in range(num_heads):              # static unroll; all slices 128-aligned
        base = h * 3 * DP
        qh = qkv[:, base:base + DP].reshape(B, S, DP).astype(bf16)
        kh = qkv[:, base + DP:base + 2 * DP].reshape(B, S, DP).astype(bf16)
        vh = qkv[:, base + 2 * DP:base + 3 * DP].reshape(B, S, DP).astype(bf16)
        s = jnp.einsum("bqd,bkd->bqk", qh, kh,
                       preferred_element_type=f32) * scale + mask_add
        s = s - jnp.max(s, axis=-1, keepdims=True)
        p = jnp.exp(s)
        p = p * pl.reciprocal(jnp.sum(p, axis=-1, keepdims=True), approx=True)
        ctx_parts.append(
            jnp.einsum("bqk,bkd->bqd", p.astype(bf16), vh,
                       preferred_element_type=f32).reshape(R, DP))
    ctx = jnp.concatenate(ctx_parts, axis=-1)               # (R, heads*DP), aligned

    attn_out = jnp.dot(ctx.astype(bf16), wo_ref[...],       # wo rows zero-padded
                       preferred_element_type=f32) + bo_ref[...]
    h1 = ln(x + attn_out, g1_ref, b1_ref)

    inter = jnp.dot(h1.astype(bf16), wi_ref[...],
                    preferred_element_type=f32) + bi_ref[...]
    inter = 0.5 * inter * (1.0 + jnp.tanh(
        0.7978845608028654 * (inter + 0.044715 * inter ** 3)))
    ffn = jnp.dot(inter.astype(bf16), wf_ref[...],
                  preferred_element_type=f32) + bf_ref[...]
    x_scr[...] = ln(h1 + ffn, g2_ref, b2_ref)

    # ---- heads fused into the last layer step ---------------------------------
    @pl.when(l == L - 1)
    def _():
        CP = acw2_ref.shape[1]              # lane-padded logit width (128)
        xo = x_scr[...]                     # (R, H) f32  == bert output rows
        x3 = xo.reshape(B, S, H)
        mask3 = mask_ref[...]               # (B, S, 1) f32

        def mlp2(inp, w1, b1, w2, b2):      # Linear -> ReLU -> Linear (bf16 MXU)
            hdn = jnp.maximum(
                jnp.dot(inp.astype(bf16), w1[...], preferred_element_type=f32)
                + b1[...], 0.0)
            return jnp.dot(hdn.astype(bf16), w2[...],
                           preferred_element_type=f32) + b2[...]

        # causal_masking (Attention_Layer): hard straight-through gate.
        # Reference uses eq(attention, max): ties -> 1.0 in BOTH channels.
        a = mlp2(xo, acw1_ref, acb1_ref, acw2_ref, acb2_ref).reshape(B, S, CP)
        a0 = a[..., 0:1]
        a1 = a[..., 1:2]
        amax = jnp.maximum(a0, a1)
        hard0 = (a0 == amax).astype(f32)
        hard1 = (a1 == amax).astype(f32)
        am0 = hard0 * mask3
        am1 = hard1 * mask3 + (1.0 - mask3)
        # lane-dense store of the gate output (real width 2, padded to CP)
        attn_ref[...] = jnp.concatenate(
            [am0, am1, jnp.zeros((B, S, CP - 2), f32)], axis=-1)

        masked = x3 * am0                   # == output * attention_mask[:, :, 0:1]
        env_tok = env_ref[...] * mask3      # (B,1,1)*(B,S,1) -> (B,S,1) == env_masked

        if pooling == "mean":
            pooled = jnp.mean(masked, axis=1)
            env_scalar = jnp.mean(env_tok, axis=1)
        elif pooling == "max":
            pooled = jnp.max(masked, axis=1)
            env_scalar = jnp.max(env_tok, axis=1)
        elif pooling == "last":
            pooled = masked[:, S - 1, :]
            env_scalar = env_tok[:, S - 1, :]
        else:  # default / "first" branch
            pooled = masked[:, 0, :]
            env_scalar = env_tok[:, 0, :]

        # sc head
        logits_ref[...] = mlp2(pooled, scw1_ref, scb1_ref, scw2_ref, scb2_ref)

        # env_sc head: input is concat([pooled, env_scalar], -1); the (H+1, H)
        # first Linear is split so no 129-wide lane shape is ever materialized.
        eh = jnp.maximum(
            jnp.dot(pooled.astype(bf16), ew1m_ref[...],
                    preferred_element_type=f32)
            + env_scalar * ew1l_ref[...] + eb1_ref[...], 0.0)
        envlog_ref[...] = jnp.dot(eh.astype(bf16), ew2_ref[...],
                                  preferred_element_type=f32) + eb2_ref[...]


def fused_forward(x_emb, vis, mask3, env3, enc, hp, cfg):
    B, S, H = x_emb.shape
    L = cfg["layers"]

    def shared(shape):        # same block at every grid step (DMA'd once)
        return pl.BlockSpec(shape, lambda l, n=len(shape): (0,) * n)

    def layer(shape):         # per-layer stacked weights, leading dim squeezed
        return pl.BlockSpec((None,) + shape[1:],
                            lambda l, n=len(shape) - 1: (l,) + (0,) * n)

    wkeys = ("wqkv", "bqkv", "wo", "bo", "g1", "b1",
             "wi", "bi", "wf", "bf", "g2", "b2")
    hkeys = ("ac_w1", "ac_b1", "ac_w2", "ac_b2",
             "sc_w1", "sc_b1", "sc_w2", "sc_b2",
             "ew1_main", "ew1_last", "eb1", "ew2", "eb2")

    args = [x_emb, vis, mask3, env3, enc["emb_g"], enc["emb_b"]]
    in_specs = [shared(a.shape) for a in args]
    args += [enc[k] for k in wkeys]
    in_specs += [layer(enc[k].shape) for k in wkeys]
    args += [hp[k] for k in hkeys]
    in_specs += [shared(hp[k].shape) for k in hkeys]

    out_shapes = (jax.ShapeDtypeStruct((B, CPAD), jnp.float32),
                  jax.ShapeDtypeStruct((B, CPAD), jnp.float32),
                  jax.ShapeDtypeStruct((B, S, CPAD), jnp.float32))
    out_specs = (pl.BlockSpec((B, CPAD), lambda l: (0, 0)),
                 pl.BlockSpec((B, CPAD), lambda l: (0, 0)),
                 pl.BlockSpec((B, S, CPAD), lambda l: (0, 0, 0)))

    return pl.pallas_call(
        functools.partial(_bert_causal_kernel, num_heads=cfg["heads"],
                          eps=LN_EPS, pooling=cfg["pooling"]),
        out_shape=out_shapes,
        grid=(L,),
        in_specs=in_specs,
        out_specs=out_specs,
        scratch_shapes=[pltpu.VMEM((B * S, H), jnp.float32)],
        compiler_params=pltpu.CompilerParams(
            dimension_semantics=("arbitrary",)),
    )(*args)


# ----------------------------------------------------------------------------
# Parameters (deterministic synthetic init) + packing for the fused kernel
# ----------------------------------------------------------------------------
def init_params(key, cfg):
    H, F, C = cfg["hidden"], cfg["ffn"], cfg["labels"]

    def nrm(k, shape, scale=0.02):
        return (scale * jax.random.normal(k, shape)).astype(jnp.float32)

    keys = iter(jax.random.split(key, 64))
    p = dict(
        word_emb=nrm(next(keys), (cfg["vocab"], H)),
        pos_emb=nrm(next(keys), (cfg["max_pos"], H)),
        type_emb=nrm(next(keys), (cfg["type_vocab"], H)),
        emb_ln_g=jnp.ones((H,), jnp.float32),
        emb_ln_b=jnp.zeros((H,), jnp.float32),
        layers=[],
        # causal_masking.ac : Linear(H,H) -> ReLU -> Linear(H,2)
        ac_w1=nrm(next(keys), (H, H)), ac_b1=jnp.zeros((H,), jnp.float32),
        ac_w2=nrm(next(keys), (H, C)), ac_b2=jnp.zeros((C,), jnp.float32),
        # sc : Linear(H,H) -> ReLU -> Linear(H,2)
        sc_w1=nrm(next(keys), (H, H)), sc_b1=jnp.zeros((H,), jnp.float32),
        sc_w2=nrm(next(keys), (H, C)), sc_b2=jnp.zeros((C,), jnp.float32),
        # env_sc : Linear(H+1,H) -> ReLU -> Linear(H,2)
        env_w1=nrm(next(keys), (H + 1, H)), env_b1=jnp.zeros((H,), jnp.float32),
        env_w2=nrm(next(keys), (H, C)), env_b2=jnp.zeros((C,), jnp.float32),
    )
    lkeys = iter(jax.random.split(jax.random.fold_in(key, 7), 8 * cfg["layers"]))
    for _ in range(cfg["layers"]):
        p["layers"].append(dict(
            wq=nrm(next(lkeys), (H, H)), bq=jnp.zeros((H,), jnp.float32),
            wk=nrm(next(lkeys), (H, H)), bk=jnp.zeros((H,), jnp.float32),
            wv=nrm(next(lkeys), (H, H)), bv=jnp.zeros((H,), jnp.float32),
            wo=nrm(next(lkeys), (H, H)), bo=jnp.zeros((H,), jnp.float32),
            ln1_g=jnp.ones((H,), jnp.float32), ln1_b=jnp.zeros((H,), jnp.float32),
            wi=nrm(next(lkeys), (H, F)), bi=jnp.zeros((F,), jnp.float32),
            wf=nrm(next(lkeys), (F, H)), bf=jnp.zeros((H,), jnp.float32),
            ln2_g=jnp.ones((H,), jnp.float32), ln2_b=jnp.zeros((H,), jnp.float32),
        ))
    return p


def pack_params(p, cfg):
    """Stack per-layer weights (bf16 MXU operands), lane-pad per-head QKV/Wo
    blocks to 128, and pad 2-wide classifier widths to CPAD."""
    H, F, L = cfg["hidden"], cfg["ffn"], cfg["layers"]
    heads = cfg["heads"]
    dh = H // heads
    bf16 = jnp.bfloat16

    def stack(name):
        return jnp.stack([lp[name] for lp in p["layers"]], axis=0)

    def pad_cols(w):   # (H, dh) -> (H, DP), zero columns are exact (dot w/ 0)
        return jnp.pad(w, ((0, 0), (0, DP - dh)))

    def pad_vec(b):    # (dh,) -> (DP,)
        return jnp.pad(b, (0, DP - dh))

    wqkv_list, bqkv_list, wo_list = [], [], []
    for lp in p["layers"]:
        cols, bcols, rows = [], [], []
        for h in range(heads):
            sl = slice(h * dh, (h + 1) * dh)
            cols += [pad_cols(lp["wq"][:, sl]),
                     pad_cols(lp["wk"][:, sl]),
                     pad_cols(lp["wv"][:, sl])]
            bcols += [pad_vec(lp["bq"][sl]),
                      pad_vec(lp["bk"][sl]),
                      pad_vec(lp["bv"][sl])]
            rows.append(jnp.pad(lp["wo"][sl, :], ((0, DP - dh), (0, 0))))
        wqkv_list.append(jnp.concatenate(cols, axis=1))   # (H, heads*3*DP)
        bqkv_list.append(jnp.concatenate(bcols))          # (heads*3*DP,)
        wo_list.append(jnp.concatenate(rows, axis=0))     # (heads*DP, H)

    enc = dict(
        emb_g=p["emb_ln_g"].reshape(1, H),
        emb_b=p["emb_ln_b"].reshape(1, H),
        wqkv=jnp.stack(wqkv_list).astype(bf16),
        bqkv=jnp.stack(bqkv_list).reshape(L, 1, heads * 3 * DP),
        wo=jnp.stack(wo_list).astype(bf16),
        bo=stack("bo").reshape(L, 1, H),
        g1=stack("ln1_g").reshape(L, 1, H), b1=stack("ln1_b").reshape(L, 1, H),
        wi=stack("wi").astype(bf16), bi=stack("bi").reshape(L, 1, F),
        wf=stack("wf").astype(bf16), bf=stack("bf").reshape(L, 1, H),
        g2=stack("ln2_g").reshape(L, 1, H), b2=stack("ln2_b").reshape(L, 1, H),
    )

    def pad_w2(w):   # (H, labels) -> (H, CPAD) lane-dense
        return jnp.pad(w, ((0, 0), (0, CPAD - w.shape[1])))

    def pad_b2(b):   # (labels,) -> (1, CPAD)
        return jnp.pad(b, (0, CPAD - b.shape[0])).reshape(1, CPAD)

    hp = dict(
        ac_w1=p["ac_w1"].astype(bf16), ac_b1=p["ac_b1"].reshape(1, H),
        ac_w2=pad_w2(p["ac_w2"]).astype(bf16), ac_b2=pad_b2(p["ac_b2"]),
        sc_w1=p["sc_w1"].astype(bf16), sc_b1=p["sc_b1"].reshape(1, H),
        sc_w2=pad_w2(p["sc_w2"]).astype(bf16), sc_b2=pad_b2(p["sc_b2"]),
        ew1_main=p["env_w1"][:H].astype(bf16),
        ew1_last=p["env_w1"][H:H + 1],          # (1, H) f32 (elementwise use)
        eb1=p["env_b1"].reshape(1, H),
        ew2=pad_w2(p["env_w2"]).astype(bf16), eb2=pad_b2(p["env_b2"]),
    )
    return enc, hp


# ----------------------------------------------------------------------------
# Model (mirrors BertCausal.forward)
# ----------------------------------------------------------------------------
def embed(params, tokens, pos):
    # TODO(synk): embedding gathers stay in plain XLA (gather kernel not worth it here).
    B, S = tokens.shape
    we = jnp.take(params["word_emb"], tokens, axis=0)
    if pos is None:
        pos = jnp.broadcast_to(jnp.arange(S, dtype=jnp.int32), (B, S))
    pe = jnp.take(params["pos_emb"], pos, axis=0)
    te = jnp.take(params["type_emb"], jnp.zeros_like(tokens), axis=0)
    return (we + pe + te).astype(jnp.float32)


def bert_causal_forward(params, enc, hp, cfg, src, mask, env, pos=None, vm=None):
    B, S = src.shape
    x_emb = embed(params, src, pos)                          # (B, S, H)

    if vm is not None and cfg["use_vm"]:
        vis = vm                                             # KBERT visible matrix
    else:
        vis = jnp.broadcast_to(mask[:, None, :], (B, S, S))  # padding mask
    vis = vis.astype(jnp.bfloat16)                           # additive mask built in-kernel
    mask3 = mask.astype(jnp.float32).reshape(B, S, 1)
    env3 = env.astype(jnp.float32).reshape(B, 1, 1)          # env.dim() == 1

    logits_pad, env_pad, attn_pad = fused_forward(
        x_emb, vis, mask3, env3, enc, hp, cfg)

    n = cfg["labels"]
    return logits_pad[:, :n], env_pad[:, :n], attn_pad[:, :, :2]


# ----------------------------------------------------------------------------
# Demo
# ----------------------------------------------------------------------------
if __name__ == "__main__":
    key = jax.random.PRNGKey(0)
    kp, ks, kv, ke = jax.random.split(key, 4)
    params = init_params(kp, CFG)
    enc, hp = pack_params(params, CFG)

    B, S = CFG["batch"], CFG["seq"]
    src = jax.random.randint(ks, (B, S), 0, CFG["vocab"], dtype=jnp.int32)
    mask = jnp.ones((B, S), jnp.float32)
    env = jax.random.randint(ke, (B,), 0, 2).astype(jnp.float32)   # env.dim() == 1
    pos = jnp.broadcast_to(jnp.arange(S, dtype=jnp.int32), (B, S))
    vm = (jax.random.uniform(kv, (B, S, S)) > 0.1).astype(jnp.float32)
    vm = jnp.maximum(vm, jnp.eye(S, dtype=jnp.float32)[None])  # tokens see themselves

    logits, env_logits, attention_mask = bert_causal_forward(
        params, enc, hp, CFG, src, mask, env, pos=pos, vm=vm)

    jax.block_until_ready((logits, env_logits, attention_mask))
    assert logits.shape == (B, CFG["labels"])
    assert env_logits.shape == (B, CFG["labels"])
    assert attention_mask.shape == (B, S, 2)
    print("KERNEL_OK")
</pallas_src>

<mosaic_0001>
module attributes {stable_mosaic.version = 11 : i64} {
  func.func @_bert_causal_kernel(%arg0: i32, %arg1: memref<2x8x128xf32, #tpu.memory_space<vmem>>, %arg2: memref<2x8x8xbf16, #tpu.memory_space<vmem>>, %arg3: memref<2x8x1xf32, #tpu.memory_space<vmem>>, %arg4: memref<2x1x1xf32, #tpu.memory_space<vmem>>, %arg5: memref<1x128xf32, #tpu.memory_space<vmem>>, %arg6: memref<1x128xf32, #tpu.memory_space<vmem>>, %arg7: memref<1x128x768xbf16, #tpu.memory_space<vmem>>, %arg8: memref<1x1x768xf32, #tpu.memory_space<vmem>>, %arg9: memref<1x256x128xbf16, #tpu.memory_space<vmem>>, %arg10: memref<1x1x128xf32, #tpu.memory_space<vmem>>, %arg11: memref<1x1x128xf32, #tpu.memory_space<vmem>>, %arg12: memref<1x1x128xf32, #tpu.memory_space<vmem>>, %arg13: memref<1x128x512xbf16, #tpu.memory_space<vmem>>, %arg14: memref<1x1x512xf32, #tpu.memory_space<vmem>>, %arg15: memref<1x512x128xbf16, #tpu.memory_space<vmem>>, %arg16: memref<1x1x128xf32, #tpu.memory_space<vmem>>, %arg17: memref<1x1x128xf32, #tpu.memory_space<vmem>>, %arg18: memref<1x1x128xf32, #tpu.memory_space<vmem>>, %arg19: memref<128x128xbf16, #tpu.memory_space<vmem>>, %arg20: memref<1x128xf32, #tpu.memory_space<vmem>>, %arg21: memref<128x128xbf16, #tpu.memory_space<vmem>>, %arg22: memref<1x128xf32, #tpu.memory_space<vmem>>, %arg23: memref<128x128xbf16, #tpu.memory_space<vmem>>, %arg24: memref<1x128xf32, #tpu.memory_space<vmem>>, %arg25: memref<128x128xbf16, #tpu.memory_space<vmem>>, %arg26: memref<1x128xf32, #tpu.memory_space<vmem>>, %arg27: memref<128x128xbf16, #tpu.memory_space<vmem>>, %arg28: memref<1x128xf32, #tpu.memory_space<vmem>>, %arg29: memref<1x128xf32, #tpu.memory_space<vmem>>, %arg30: memref<128x128xbf16, #tpu.memory_space<vmem>>, %arg31: memref<1x128xf32, #tpu.memory_space<vmem>>, %arg32: memref<2x128xf32, #tpu.memory_space<vmem>>, %arg33: memref<2x128xf32, #tpu.memory_space<vmem>>, %arg34: memref<2x8x128xf32, #tpu.memory_space<vmem>>, %arg35: memref<16x128xf32, #tpu.memory_space<vmem>>) attributes {dimension_semantics = [#tpu.dimension_semantics<arbitrary>], iteration_bounds = array<i64: 2>, scalar_prefetch = 0 : i64, scratch_operands = 1 : i64, tpu.core_type = #tpu.core_type<tc>, window_params = [{pipeline_mode = #tpu.pipeline_mode<synchronous>, transform_indices = @transform_0, window_bounds = array<i64: 2, 8, 128>}, {pipeline_mode = #tpu.pipeline_mode<synchronous>, transform_indices = @transform_1, window_bounds = array<i64: 2, 8, 8>}, {pipeline_mode = #tpu.pipeline_mode<synchronous>, transform_indices = @transform_2, window_bounds = array<i64: 2, 8, 1>}, {pipeline_mode = #tpu.pipeline_mode<synchronous>, transform_indices = @transform_3, window_bounds = array<i64: 2, 1, 1>}, {pipeline_mode = #tpu.pipeline_mode<synchronous>, transform_indices = @transform_4, window_bounds = array<i64: 1, 128>}, {pipeline_mode = #tpu.pipeline_mode<synchronous>, transform_indices = @transform_5, window_bounds = array<i64: 1, 128>}, {transform_indices = @transform_6, window_bounds = array<i64: 1, 128, 768>}, {transform_indices = @transform_7, window_bounds = array<i64: 1, 1, 768>}, {transform_indices = @transform_8, window_bounds = array<i64: 1, 256, 128>}, {transform_indices = @transform_9, window_bounds = array<i64: 1, 1, 128>}, {transform_indices = @transform_10, window_bounds = array<i64: 1, 1, 128>}, {transform_indices = @transform_11, window_bounds = array<i64: 1, 1, 128>}, {transform_indices = @transform_12, window_bounds = array<i64: 1, 128, 512>}, {transform_indices = @transform_13, window_bounds = array<i64: 1, 1, 512>}, {transform_indices = @transform_14, window_bounds = array<i64: 1, 512, 128>}, {transform_indices = @transform_15, window_bounds = array<i64: 1, 1, 128>}, {transform_indices = @transform_16, window_bounds = array<i64: 1, 1, 128>}, {transform_indices = @transform_17, window_bounds = array<i64: 1, 1, 128>}, {pipeline_mode = #tpu.pipeline_mode<synchronous>, transform_indices = @transform_18, window_bounds = array<i64: 128, 128>}, {pipeline_mode = #tpu.pipeline_mode<synchronous>, transform_indices = @transform_19, window_bounds = array<i64: 1, 128>}, {pipeline_mode = #tpu.pipeline_mode<synchronous>, transform_indices = @transform_20, window_bounds = array<i64: 128, 128>}, {pipeline_mode = #tpu.pipeline_mode<synchronous>, transform_indices = @transform_21, window_bounds = array<i64: 1, 128>}, {pipeline_mode = #tpu.pipeline_mode<synchronous>, transform_indices = @transform_22, window_bounds = array<i64: 128, 128>}, {pipeline_mode = #tpu.pipeline_mode<synchronous>, transform_indices = @transform_23, window_bounds = array<i64: 1, 128>}, {pipeline_mode = #tpu.pipeline_mode<synchronous>, transform_indices = @transform_24, window_bounds = array<i64: 128, 128>}, {pipeline_mode = #tpu.pipeline_mode<synchronous>, transform_indices = @transform_25, window_bounds = array<i64: 1, 128>}, {pipeline_mode = #tpu.pipeline_mode<synchronous>, transform_indices = @transform_26, window_bounds = array<i64: 128, 128>}, {pipeline_mode = #tpu.pipeline_mode<synchronous>, transform_indices = @transform_27, window_bounds = array<i64: 1, 128>}, {pipeline_mode = #tpu.pipeline_mode<synchronous>, transform_indices = @transform_28, window_bounds = array<i64: 1, 128>}, {pipeline_mode = #tpu.pipeline_mode<synchronous>, transform_indices = @transform_29, window_bounds = array<i64: 128, 128>}, {pipeline_mode = #tpu.pipeline_mode<synchronous>, transform_indices = @transform_30, window_bounds = array<i64: 1, 128>}, {pipeline_mode = #tpu.pipeline_mode<synchronous>, transform_indices = @transform_31, window_bounds = array<i64: 2, 128>}, {pipeline_mode = #tpu.pipeline_mode<synchronous>, transform_indices = @transform_32, window_bounds = array<i64: 2, 128>}, {pipeline_mode = #tpu.pipeline_mode<synchronous>, transform_indices = @transform_33, window_bounds = array<i64: 2, 8, 128>}]} {
    %c0_i32 = arith.constant 0 : i32
    %0 = arith.cmpi eq, %arg0, %c0_i32 : i32
    %1 = arith.extui %0 : i1 to i32
    %c0_i32_0 = arith.constant 0 : i32
    %2 = arith.cmpi ne, %1, %c0_i32_0 : i32
    scf.if %2 {
      %c0_73 = arith.constant 0 : index
      %c0_74 = arith.constant 0 : index
      %c0_75 = arith.constant 0 : index
      %166 = vector.load %arg1[%c0_73, %c0_74, %c0_75] : memref<2x8x128xf32, #tpu.memory_space<vmem>>, vector<2x8x128xf32>
      %167 = vector.shape_cast %166 : vector<2x8x128xf32> to vector<16x128xf32>
      %cst_76 = arith.constant dense<0.000000e+00> : vector<16xf32>
      %168 = vector.multi_reduction <add>, %167, %cst_76 [1] : vector<16x128xf32> to vector<16xf32>
      %169 = vector.shape_cast %168 : vector<16xf32> to vector<16x1xf32>
      %cst_77 = arith.constant 1.280000e+02 : f32
      %170 = vector.broadcast %cst_77 : f32 to vector<16x1xf32>
      %171 = arith.divf %169, %170 : vector<16x1xf32>
      %172 = vector.broadcast %171 : vector<16x1xf32> to vector<16x128xf32>
      %173 = arith.subf %167, %172 : vector<16x128xf32>
      %174 = arith.mulf %173, %173 : vector<16x128xf32>
      %cst_78 = arith.constant dense<0.000000e+00> : vector<16xf32>
      %175 = vector.multi_reduction <add>, %174, %cst_78 [1] : vector<16x128xf32> to vector<16xf32>
      %176 = vector.shape_cast %175 : vector<16xf32> to vector<16x1xf32>
      %cst_79 = arith.constant 1.280000e+02 : f32
      %177 = vector.broadcast %cst_79 : f32 to vector<16x1xf32>
      %178 = arith.divf %176, %177 : vector<16x1xf32>
      %179 = vector.broadcast %171 : vector<16x1xf32> to vector<16x128xf32>
      %180 = arith.subf %167, %179 : vector<16x128xf32>
      %cst_80 = arith.constant 9.99999996E-13 : f32
      %181 = vector.broadcast %cst_80 : f32 to vector<16x1xf32>
      %182 = arith.addf %178, %181 : vector<16x1xf32>
      %183 = math.rsqrt %182 : vector<16x1xf32>
      %184 = vector.broadcast %183 : vector<16x1xf32> to vector<16x128xf32>
      %185 = arith.mulf %180, %184 : vector<16x128xf32>
      %c0_81 = arith.constant 0 : index
      %c0_82 = arith.constant 0 : index
      %186 = vector.load %arg5[%c0_81, %c0_82] : memref<1x128xf32, #tpu.memory_space<vmem>>, vector<1x128xf32>
      %187 = vector.broadcast %186 : vector<1x128xf32> to vector<16x128xf32>
      %188 = arith.mulf %185, %187 : vector<16x128xf32>
      %c0_83 = arith.constant 0 : index
      %c0_84 = arith.constant 0 : index
      %189 = vector.load %arg6[%c0_83, %c0_84] : memref<1x128xf32, #tpu.memory_space<vmem>>, vector<1x128xf32>
      %190 = vector.broadcast %189 : vector<1x128xf32> to vector<16x128xf32>
      %191 = arith.addf %188, %190 : vector<16x128xf32>
      %c0_85 = arith.constant 0 : index
      %c0_86 = arith.constant 0 : index
      %192 = vector.load %arg35[%c0_85, %c0_86] : memref<16x128xf32, #tpu.memory_space<vmem>>, vector<16x128xf32>
      tpu.vector_store %arg35[%c0_85, %c0_86], %191 {strides = array<i32>} : memref<16x128xf32, #tpu.memory_space<vmem>>, vector<16x128xf32>,
    } else {
    }
    %c0 = arith.constant 0 : index
    %c0_1 = arith.constant 0 : index
    %3 = vector.load %arg35[%c0, %c0_1] : memref<16x128xf32, #tpu.memory_space<vmem>>, vector<16x128xf32>
    %c0_2 = arith.constant 0 : index
    %c0_3 = arith.constant 0 : index
    %c0_4 = arith.constant 0 : index
    %4 = vector.load %arg2[%c0_2, %c0_3, %c0_4] : memref<2x8x8xbf16, #tpu.memory_space<vmem>>, vector<2x8x8xbf16>
    %5 = arith.extf %4 : vector<2x8x8xbf16> to vector<2x8x8xf32>
    %cst = arith.constant 1.000000e+00 : f32
    %6 = vector.broadcast %cst : f32 to vector<2x8x8xf32>
    %7 = arith.subf %5, %6 : vector<2x8x8xf32>
    %cst_5 = arith.constant 1.000000e+04 : f32
    %8 = vector.broadcast %cst_5 : f32 to vector<2x8x8xf32>
    %9 = arith.mulf %7, %8 : vector<2x8x8xf32>
    %10 = arith.truncf %3 : vector<16x128xf32> to vector<16x128xbf16>
    %c0_6 = arith.constant 0 : index
    %c0_7 = arith.constant 0 : index
    %c0_8 = arith.constant 0 : index
    %11 = vector.load %arg7[%c0_6, %c0_7, %c0_8] : memref<1x128x768xbf16, #tpu.memory_space<vmem>>, vector<1x128x768xbf16>
    %12 = vector.shape_cast %11 : vector<1x128x768xbf16> to vector<128x768xbf16>
    %cst_9 = arith.constant dense<0.000000e+00> : vector<16x768xf32>
    %13 = tpu.matmul %10, %12, %cst_9 {dimension_numbers = #tpu.dot_dimension_numbers<[1], [0], [0], [1], [0, 0, 1, 1], [], []>} : vector<16x128xbf16>, vector<128x768xbf16>, vector<16x768xf32> -> vector<16x768xf32>
    %c0_10 = arith.constant 0 : index
    %c0_11 = arith.constant 0 : index
    %c0_12 = arith.constant 0 : index
    %14 = vector.load %arg8[%c0_10, %c0_11, %c0_12] : memref<1x1x768xf32, #tpu.memory_space<vmem>>, vector<1x1x768xf32>
    %15 = vector.shape_cast %14 : vector<1x1x768xf32> to vector<1x768xf32>
    %16 = vector.broadcast %15 : vector<1x768xf32> to vector<16x768xf32>
    %17 = arith.addf %13, %16 : vector<16x768xf32>
    %18 = vector.extract_strided_slice %17 {offsets = [0, 0], sizes = [16, 128], strides = [1, 1]} : vector<16x768xf32> to vector<16x128xf32>
    %19 = vector.shape_cast %18 : vector<16x128xf32> to vector<2x8x128xf32>
    %20 = arith.truncf %19 : vector<2x8x128xf32> to vector<2x8x128xbf16>
    %21 = vector.extract_strided_slice %17 {offsets = [0, 128], sizes = [16, 128], strides = [1, 1]} : vector<16x768xf32> to vector<16x128xf32>
    %22 = vector.shape_cast %21 : vector<16x128xf32> to vector<2x8x128xf32>
    %23 = arith.truncf %22 : vector<2x8x128xf32> to vector<2x8x128xbf16>
    %24 = vector.extract_strided_slice %17 {offsets = [0, 256], sizes = [16, 128], strides = [1, 1]} : vector<16x768xf32> to vector<16x128xf32>
    %25 = vector.shape_cast %24 : vector<16x128xf32> to vector<2x8x128xf32>
    %26 = arith.truncf %25 : vector<2x8x128xf32> to vector<2x8x128xbf16>
    "tpu.trace_start"() <{level = 10 : i32, message = "bqd,bkd->bqk"}> : () -> ()
    %cst_13 = arith.constant dense<0.000000e+00> : vector<2x8x8xf32>
    %27 = tpu.matmul %20, %23, %cst_13 {dimension_numbers = #tpu.dot_dimension_numbers<[2], [2], [1], [1], [0, 0, 0, 1, 1, 1], [0], [0]>} : vector<2x8x128xbf16>, vector<2x8x128xbf16>, vector<2x8x8xf32> -> vector<2x8x8xf32>
    "tpu.trace_stop"() : () -> ()
    %cst_14 = arith.constant 1.250000e-01 : f32
    %28 = vector.broadcast %cst_14 : f32 to vector<2x8x8xf32>
    %29 = arith.mulf %27, %28 : vector<2x8x8xf32>
    %30 = arith.addf %29, %9 : vector<2x8x8xf32>
    %cst_15 = arith.constant dense<0xFF800000> : vector<2x8xf32>
    %31 = vector.multi_reduction <maximumf>, %30, %cst_15 [2] : vector<2x8x8xf32> to vector<2x8xf32>
    %32 = vector.shape_cast %31 : vector<2x8xf32> to vector<2x8x1xf32>
    %33 = vector.broadcast %32 : vector<2x8x1xf32> to vector<2x8x8xf32>
    %34 = arith.subf %30, %33 : vector<2x8x8xf32>
    %35 = math.exp %34 : vector<2x8x8xf32>
    %cst_16 = arith.constant dense<0.000000e+00> : vector<2x8xf32>
    %36 = vector.multi_reduction <add>, %35, %cst_16 [2] : vector<2x8x8xf32> to vector<2x8xf32>
    %37 = vector.shape_cast %36 : vector<2x8xf32> to vector<2x8x1xf32>
    %38 = tpu.reciprocal %37 {approx = true} : vector<2x8x1xf32> -> vector<2x8x1xf32>
    %39 = vector.broadcast %38 : vector<2x8x1xf32> to vector<2x8x8xf32>
    %40 = arith.mulf %35, %39 : vector<2x8x8xf32>
    %41 = arith.truncf %40 : vector<2x8x8xf32> to vector<2x8x8xbf16>
    "tpu.trace_start"() <{level = 10 : i32, message = "bqk,bkd->bqd"}> : () -> ()
    %cst_17 = arith.constant dense<0.000000e+00> : vector<2x8x128xf32>
    %42 = tpu.matmul %41, %26, %cst_17 {dimension_numbers = #tpu.dot_dimension_numbers<[2], [1], [1], [2], [0, 0, 0, 1, 1, 2], [0], [0]>} : vector<2x8x8xbf16>, vector<2x8x128xbf16>, vector<2x8x128xf32> -> vector<2x8x128xf32>
    "tpu.trace_stop"() : () -> ()
    %43 = vector.shape_cast %42 : vector<2x8x128xf32> to vector<16x128xf32>
    %44 = vector.extract_strided_slice %17 {offsets = [0, 384], sizes = [16, 128], strides = [1, 1]} : vector<16x768xf32> to vector<16x128xf32>
    %45 = vector.shape_cast %44 : vector<16x128xf32> to vector<2x8x128xf32>
    %46 = arith.truncf %45 : vector<2x8x128xf32> to vector<2x8x128xbf16>
    %47 = vector.extract_strided_slice %17 {offsets = [0, 512], sizes = [16, 128], strides = [1, 1]} : vector<16x768xf32> to vector<16x128xf32>
    %48 = vector.shape_cast %47 : vector<16x128xf32> to vector<2x8x128xf32>
    %49 = arith.truncf %48 : vector<2x8x128xf32> to vector<2x8x128xbf16>
    %50 = vector.extract_strided_slice %17 {offsets = [0, 640], sizes = [16, 128], strides = [1, 1]} : vector<16x768xf32> to vector<16x128xf32>
    %51 = vector.shape_cast %50 : vector<16x128xf32> to vector<2x8x128xf32>
    %52 = arith.truncf %51 : vector<2x8x128xf32> to vector<2x8x128xbf16>
    "tpu.trace_start"() <{level = 10 : i32, message = "bqd,bkd->bqk"}> : () -> ()
    %cst_18 = arith.constant dense<0.000000e+00> : vector<2x8x8xf32>
    %53 = tpu.matmul %46, %49, %cst_18 {dimension_numbers = #tpu.dot_dimension_numbers<[2], [2], [1], [1], [0, 0, 0, 1, 1, 1], [0], [0]>} : vector<2x8x128xbf16>, vector<2x8x128xbf16>, vector<2x8x8xf32> -> vector<2x8x8xf32>
    "tpu.trace_stop"() : () -> ()
    %cst_19 = arith.constant 1.250000e-01 : f32
    %54 = vector.broadcast %cst_19 : f32 to vector<2x8x8xf32>
    %55 = arith.mulf %53, %54 : vector<2x8x8xf32>
    %56 = arith.addf %55, %9 : vector<2x8x8xf32>
    %cst_20 = arith.constant dense<0xFF800000> : vector<2x8xf32>
    %57 = vector.multi_reduction <maximumf>, %56, %cst_20 [2] : vector<2x8x8xf32> to vector<2x8xf32>
    %58 = vector.shape_cast %57 : vector<2x8xf32> to vector<2x8x1xf32>
    %59 = vector.broadcast %58 : vector<2x8x1xf32> to vector<2x8x8xf32>
    %60 = arith.subf %56, %59 : vector<2x8x8xf32>
    %61 = math.exp %60 : vector<2x8x8xf32>
    %cst_21 = arith.constant dense<0.000000e+00> : vector<2x8xf32>
    %62 = vector.multi_reduction <add>, %61, %cst_21 [2] : vector<2x8x8xf32> to vector<2x8xf32>
    %63 = vector.shape_cast %62 : vector<2x8xf32> to vector<2x8x1xf32>
    %64 = tpu.reciprocal %63 {approx = true} : vector<2x8x1xf32> -> vector<2x8x1xf32>
    %65 = vector.broadcast %64 : vector<2x8x1xf32> to vector<2x8x8xf32>
    %66 = arith.mulf %61, %65 : vector<2x8x8xf32>
    %67 = arith.truncf %66 : vector<2x8x8xf32> to vector<2x8x8xbf16>
    "tpu.trace_start"() <{level = 10 : i32, message = "bqk,bkd->bqd"}> : () -> ()
    %cst_22 = arith.constant dense<0.000000e+00> : vector<2x8x128xf32>
    %68 = tpu.matmul %67, %52, %cst_22 {dimension_numbers = #tpu.dot_dimension_numbers<[2], [1], [1], [2], [0, 0, 0, 1, 1, 2], [0], [0]>} : vector<2x8x8xbf16>, vector<2x8x128xbf16>, vector<2x8x128xf32> -> vector<2x8x128xf32>
    "tpu.trace_stop"() : () -> ()
    %69 = vector.shape_cast %68 : vector<2x8x128xf32> to vector<16x128xf32>
    %70 = tpu.concatenate %43, %69 in 1 : vector<16x128xf32>, vector<16x128xf32> -> vector<16x256xf32>
    %71 = arith.truncf %70 : vector<16x256xf32> to vector<16x256xbf16>
    %c0_23 = arith.constant 0 : index
    %c0_24 = arith.constant 0 : index
    %c0_25 = arith.constant 0 : index
    %72 = vector.load %arg9[%c0_23, %c0_24, %c0_25] : memref<1x256x128xbf16, #tpu.memory_space<vmem>>, vector<1x256x128xbf16>
    %73 = vector.shape_cast %72 : vector<1x256x128xbf16> to vector<256x128xbf16>
    %cst_26 = arith.constant dense<0.000000e+00> : vector<16x128xf32>
    %74 = tpu.matmul %71, %73, %cst_26 {dimension_numbers = #tpu.dot_dimension_numbers<[1], [0], [0], [1], [0, 0, 1, 1], [], []>} : vector<16x256xbf16>, vector<256x128xbf16>, vector<16x128xf32> -> vector<16x128xf32>
    %c0_27 = arith.constant 0 : index
    %c0_28 = arith.constant 0 : index
    %c0_29 = arith.constant 0 : index
    %75 = vector.load %arg10[%c0_27, %c0_28, %c0_29] : memref<1x1x128xf32, #tpu.memory_space<vmem>>, vector<1x1x128xf32>
    %76 = vector.shape_cast %75 : vector<1x1x128xf32> to vector<1x128xf32>
    %77 = vector.broadcast %76 : vector<1x128xf32> to vector<16x128xf32>
    %78 = arith.addf %74, %77 : vector<16x128xf32>
    %79 = arith.addf %3, %78 : vector<16x128xf32>
    %cst_30 = arith.constant dense<0.000000e+00> : vector<16xf32>
    %80 = vector.multi_reduction <add>, %79, %cst_30 [1] : vector<16x128xf32> to vector<16xf32>
    %81 = vector.shape_cast %80 : vector<16xf32> to vector<16x1xf32>
    %cst_31 = arith.constant 1.280000e+02 : f32
    %82 = vector.broadcast %cst_31 : f32 to vector<16x1xf32>
    %83 = arith.divf %81, %82 : vector<16x1xf32>
    %84 = vector.broadcast %83 : vector<16x1xf32> to vector<16x128xf32>
    %85 = arith.subf %79, %84 : vector<16x128xf32>
    %86 = arith.mulf %85, %85 : vector<16x128xf32>
    %cst_32 = arith.constant dense<0.000000e+00> : vector<16xf32>
    %87 = vector.multi_reduction <add>, %86, %cst_32 [1] : vector<16x128xf32> to vector<16xf32>
    %88 = vector.shape_cast %87 : vector<16xf32> to vector<16x1xf32>
    %cst_33 = arith.constant 1.280000e+02 : f32
    %89 = vector.broadcast %cst_33 : f32 to vector<16x1xf32>
    %90 = arith.divf %88, %89 : vector<16x1xf32>
    %91 = vector.broadcast %83 : vector<16x1xf32> to vector<16x128xf32>
    %92 = arith.subf %79, %91 : vector<16x128xf32>
    %cst_34 = arith.constant 9.99999996E-13 : f32
    %93 = vector.broadcast %cst_34 : f32 to vector<16x1xf32>
    %94 = arith.addf %90, %93 : vector<16x1xf32>
    %95 = math.rsqrt %94 : vector<16x1xf32>
    %96 = vector.broadcast %95 : vector<16x1xf32> to vector<16x128xf32>
    %97 = arith.mulf %92, %96 : vector<16x128xf32>
    %c0_35 = arith.constant 0 : index
    %c0_36 = arith.constant 0 : index
    %c0_37 = arith.constant 0 : index
    %98 = vector.load %arg11[%c0_35, %c0_36, %c0_37] : memref<1x1x128xf32, #tpu.memory_space<vmem>>, vector<1x1x128xf32>
    %99 = vector.shape_cast %98 : vector<1x1x128xf32> to vector<1x128xf32>
    %100 = vector.broadcast %99 : vector<1x128xf32> to vector<16x128xf32>
    %101 = arith.mulf %97, %100 : vector<16x128xf32>
    %c0_38 = arith.constant 0 : index
    %c0_39 = arith.constant 0 : index
    %c0_40 = arith.constant 0 : index
    %102 = vector.load %arg12[%c0_38, %c0_39, %c0_40] : memref<1x1x128xf32, #tpu.memory_space<vmem>>, vector<1x1x128xf32>
    %103 = vector.shape_cast %102 : vector<1x1x128xf32> to vector<1x128xf32>
    %104 = vector.broadcast %103 : vector<1x128xf32> to vector<16x128xf32>
    %105 = arith.addf %101, %104 : vector<16x128xf32>
    %106 = arith.truncf %105 : vector<16x128xf32> to vector<16x128xbf16>
    %c0_41 = arith.constant 0 : index
    %c0_42 = arith.constant 0 : index
    %c0_43 = arith.constant 0 : index
    %107 = vector.load %arg13[%c0_41, %c0_42, %c0_43] : memref<1x128x512xbf16, #tpu.memory_space<vmem>>, vector<1x128x512xbf16>
    %108 = vector.shape_cast %107 : vector<1x128x512xbf16> to vector<128x512xbf16>
    %cst_44 = arith.constant dense<0.000000e+00> : vector<16x512xf32>
    %109 = tpu.matmul %106, %108, %cst_44 {dimension_numbers = #tpu.dot_dimension_numbers<[1], [0], [0], [1], [0, 0, 1, 1], [], []>} : vector<16x128xbf16>, vector<128x512xbf16>, vector<16x512xf32> -> vector<16x512xf32>
    %c0_45 = arith.constant 0 : index
    %c0_46 = arith.constant 0 : index
    %c0_47 = arith.constant 0 : index
    %110 = vector.load %arg14[%c0_45, %c0_46, %c0_47] : memref<1x1x512xf32, #tpu.memory_space<vmem>>, vector<1x1x512xf32>
    %111 = vector.shape_cast %110 : vector<1x1x512xf32> to vector<1x512xf32>
    %112 = vector.broadcast %111 : vector<1x512xf32> to vector<16x512xf32>
    %113 = arith.addf %109, %112 : vector<16x512xf32>
    %cst_48 = arith.constant 5.000000e-01 : f32
    %114 = vector.broadcast %cst_48 : f32 to vector<16x512xf32>
    %115 = arith.mulf %114, %113 : vector<16x512xf32>
    %116 = arith.mulf %113, %113 : vector<16x512xf32>
    %117 = arith.mulf %113, %116 : vector<16x512xf32>
    %cst_49 = arith.constant 4.471500e-02 : f32
    %118 = vector.broadcast %cst_49 : f32 to vector<16x512xf32>
    %119 = arith.mulf %118, %117 : vector<16x512xf32>
    %120 = arith.addf %113, %119 : vector<16x512xf32>
    %cst_50 = arith.constant 0.797884583 : f32
    %121 = vector.broadcast %cst_50 : f32 to vector<16x512xf32>
    %122 = arith.mulf %121, %120 : vector<16x512xf32>
    %123 = math.tanh %122 : vector<16x512xf32>
    %cst_51 = arith.constant 1.000000e+00 : f32
    %124 = vector.broadcast %cst_51 : f32 to vector<16x512xf32>
    %125 = arith.addf %124, %123 : vector<16x512xf32>
    %126 = arith.mulf %115, %125 : vector<16x512xf32>
    %127 = arith.truncf %126 : vector<16x512xf32> to vector<16x512xbf16>
    %c0_52 = arith.constant 0 : index
    %c0_53 = arith.constant 0 : index
    %c0_54 = arith.constant 0 : index
    %128 = vector.load %arg15[%c0_52, %c0_53, %c0_54] : memref<1x512x128xbf16, #tpu.memory_space<vmem>>, vector<1x512x128xbf16>
    %129 = vector.shape_cast %128 : vector<1x512x128xbf16> to vector<512x128xbf16>
    %cst_55 = arith.constant dense<0.000000e+00> : vector<16x128xf32>
    %130 = tpu.matmul %127, %129, %cst_55 {dimension_numbers = #tpu.dot_dimension_numbers<[1], [0], [0], [1], [0, 0, 1, 1], [], []>} : vector<16x512xbf16>, vector<512x128xbf16>, vector<16x128xf32> -> vector<16x128xf32>
    %c0_56 = arith.constant 0 : index
    %c0_57 = arith.constant 0 : index
    %c0_58 = arith.constant 0 : index
    %131 = vector.load %arg16[%c0_56, %c0_57, %c0_58] : memref<1x1x128xf32, #tpu.memory_space<vmem>>, vector<1x1x128xf32>
    %132 = vector.shape_cast %131 : vector<1x1x128xf32> to vector<1x128xf32>
    %133 = vector.broadcast %132 : vector<1x128xf32> to vector<16x128xf32>
    %134 = arith.addf %130, %133 : vector<16x128xf32>
    %135 = arith.addf %105, %134 : vector<16x128xf32>
    %cst_59 = arith.constant dense<0.000000e+00> : vector<16xf32>
    %136 = vector.multi_reduction <add>, %135, %cst_59 [1] : vector<16x128xf32> to vector<16xf32>
    %137 = vector.shape_cast %136 : vector<16xf32> to vector<16x1xf32>
    %cst_60 = arith.constant 1.280000e+02 : f32
    %138 = vector.broadcast %cst_60 : f32 to vector<16x1xf32>
    %139 = arith.divf %137, %138 : vector<16x1xf32>
    %140 = vector.broadcast %139 : vector<16x1xf32> to vector<16x128xf32>
    %141 = arith.subf %135, %140 : vector<16x128xf32>
    %142 = arith.mulf %141, %141 : vector<16x128xf32>
    %cst_61 = arith.constant dense<0.000000e+00> : vector<16xf32>
    %143 = vector.multi_reduction <add>, %142, %cst_61 [1] : vector<16x128xf32> to vector<16xf32>
    %144 = vector.shape_cast %143 : vector<16xf32> to vector<16x1xf32>
    %cst_62 = arith.constant 1.280000e+02 : f32
    %145 = vector.broadcast %cst_62 : f32 to vector<16x1xf32>
    %146 = arith.divf %144, %145 : vector<16x1xf32>
    %147 = vector.broadcast %139 : vector<16x1xf32> to vector<16x128xf32>
    %148 = arith.subf %135, %147 : vector<16x128xf32>
    %cst_63 = arith.constant 9.99999996E-13 : f32
    %149 = vector.broadcast %cst_63 : f32 to vector<16x1xf32>
    %150 = arith.addf %146, %149 : vector<16x1xf32>
    %151 = math.rsqrt %150 : vector<16x1xf32>
    %152 = vector.broadcast %151 : vector<16x1xf32> to vector<16x128xf32>
    %153 = arith.mulf %148, %152 : vector<16x128xf32>
    %c0_64 = arith.constant 0 : index
    %c0_65 = arith.constant 0 : index
    %c0_66 = arith.constant 0 : index
    %154 = vector.load %arg17[%c0_64, %c0_65, %c0_66] : memref<1x1x128xf32, #tpu.memory_space<vmem>>, vector<1x1x128xf32>
    %155 = vector.shape_cast %154 : vector<1x1x128xf32> to vector<1x128xf32>
    %156 = vector.broadcast %155 : vector<1x128xf32> to vector<16x128xf32>
    %157 = arith.mulf %153, %156 : vector<16x128xf32>
    %c0_67 = arith.constant 0 : index
    %c0_68 = arith.constant 0 : index
    %c0_69 = arith.constant 0 : index
    %158 = vector.load %arg18[%c0_67, %c0_68, %c0_69] : memref<1x1x128xf32, #tpu.memory_space<vmem>>, vector<1x1x128xf32>
    %159 = vector.shape_cast %158 : vector<1x1x128xf32> to vector<1x128xf32>
    %160 = vector.broadcast %159 : vector<1x128xf32> to vector<16x128xf32>
    %161 = arith.addf %157, %160 : vector<16x128xf32>
    %c0_70 = arith.constant 0 : index
    %c0_71 = arith.constant 0 : index
    %162 = vector.load %arg35[%c0_70, %c0_71] : memref<16x128xf32, #tpu.memory_space<vmem>>, vector<16x128xf32>
    tpu.vector_store %arg35[%c0_70, %c0_71], %161 {strides = array<i32>} : memref<16x128xf32, #tpu.memory_space<vmem>>, vector<16x128xf32>,
    %c1_i32 = arith.constant 1 : i32
    %163 = arith.cmpi eq, %arg0, %c1_i32 : i32
    %164 = arith.extui %163 : i1 to i32
    %c0_i32_72 = arith.constant 0 : i32
    %165 = arith.cmpi ne, %164, %c0_i32_72 : i32
    scf.if %165 {
      %c0_73 = arith.constant 0 : index
      %c0_74 = arith.constant 0 : index
      %166 = vector.load %arg35[%c0_73, %c0_74] : memref<16x128xf32, #tpu.memory_space<vmem>>, vector<16x128xf32>
      %167 = vector.shape_cast %166 : vector<16x128xf32> to vector<2x8x128xf32>
      %c0_75 = arith.constant 0 : index
      %c0_76 = arith.constant 0 : index
      %c0_77 = arith.constant 0 : index
      %168 = vector.load %arg3[%c0_75, %c0_76, %c0_77] : memref<2x8x1xf32, #tpu.memory_space<vmem>>, vector<2x8x1xf32>
      %169 = arith.truncf %166 : vector<16x128xf32> to vector<16x128xbf16>
      %c0_78 = arith.constant 0 : index
      %c0_79 = arith.constant 0 : index
      %170 = vector.load %arg19[%c0_78, %c0_79] : memref<128x128xbf16, #tpu.memory_space<vmem>>, vector<128x128xbf16>
      %cst_80 = arith.constant dense<0.000000e+00> : vector<16x128xf32>
      %171 = tpu.matmul %169, %170, %cst_80 {dimension_numbers = #tpu.dot_dimension_numbers<[1], [0], [0], [1], [0, 0, 1, 1], [], []>} : vector<16x128xbf16>, vector<128x128xbf16>, vector<16x128xf32> -> vector<16x128xf32>
      %c0_81 = arith.constant 0 : index
      %c0_82 = arith.constant 0 : index
      %172 = vector.load %arg20[%c0_81, %c0_82] : memref<1x128xf32, #tpu.memory_space<vmem>>, vector<1x128xf32>
      %173 = vector.broadcast %172 : vector<1x128xf32> to vector<16x128xf32>
      %174 = arith.addf %171, %173 : vector<16x128xf32>
      %cst_83 = arith.constant 0.000000e+00 : f32
      %175 = vector.broadcast %cst_83 : f32 to vector<16x128xf32>
      %176 = arith.maximumf %174, %175 : vector<16x128xf32>
      %177 = arith.truncf %176 : vector<16x128xf32> to vector<16x128xbf16>
      %c0_84 = arith.constant 0 : index
      %c0_85 = arith.constant 0 : index
      %178 = vector.load %arg21[%c0_84, %c0_85] : memref<128x128xbf16, #tpu.memory_space<vmem>>, vector<128x128xbf16>
      %cst_86 = arith.constant dense<0.000000e+00> : vector<16x128xf32>
      %179 = tpu.matmul %177, %178, %cst_86 {dimension_numbers = #tpu.dot_dimension_numbers<[1], [0], [0], [1], [0, 0, 1, 1], [], []>} : vector<16x128xbf16>, vector<128x128xbf16>, vector<16x128xf32> -> vector<16x128xf32>
      %c0_87 = arith.constant 0 : index
      %c0_88 = arith.constant 0 : index
      %180 = vector.load %arg22[%c0_87, %c0_88] : memref<1x128xf32, #tpu.memory_space<vmem>>, vector<1x128xf32>
      %181 = vector.broadcast %180 : vector<1x128xf32> to vector<16x128xf32>
      %182 = arith.addf %179, %181 : vector<16x128xf32>
      %183 = vector.shape_cast %182 : vector<16x128xf32> to vector<2x8x128xf32>
      %184 = vector.extract_strided_slice %183 {offsets = [0, 0, 0], sizes = [2, 8, 1], strides = [1, 1, 1]} : vector<2x8x128xf32> to vector<2x8x1xf32>
      %185 = vector.extract_strided_slice %183 {offsets = [0, 0, 1], sizes = [2, 8, 1], strides = [1, 1, 1]} : vector<2x8x128xf32> to vector<2x8x1xf32>
      %186 = arith.maximumf %184, %185 : vector<2x8x1xf32>
      %187 = arith.cmpf oeq, %184, %186 : vector<2x8x1xf32>
      %188 = arith.extui %187 : vector<2x8x1xi1> to vector<2x8x1xi32>
      %189 = arith.sitofp %188 : vector<2x8x1xi32> to vector<2x8x1xf32>
      %190 = arith.cmpf oeq, %185, %186 : vector<2x8x1xf32>
      %191 = arith.extui %190 : vector<2x8x1xi1> to vector<2x8x1xi32>
      %192 = arith.sitofp %191 : vector<2x8x1xi32> to vector<2x8x1xf32>
      %193 = arith.mulf %189, %168 : vector<2x8x1xf32>
      %194 = arith.mulf %192, %168 : vector<2x8x1xf32>
      %cst_89 = arith.constant 1.000000e+00 : f32
      %195 = vector.broadcast %cst_89 : f32 to vector<2x8x1xf32>
      %196 = arith.subf %195, %168 : vector<2x8x1xf32>
      %197 = arith.addf %194, %196 : vector<2x8x1xf32>
      %cst_90 = arith.constant 0.000000e+00 : f32
      %198 = vector.broadcast %cst_90 : f32 to vector<2x8x126xf32>
      %199 = tpu.concatenate %193, %197, %198 in 2 : vector<2x8x1xf32>, vector<2x8x1xf32>, vector<2x8x126xf32> -> vector<2x8x128xf32>
      %c0_91 = arith.constant 0 : index
      %c0_92 = arith.constant 0 : index
      %c0_93 = arith.constant 0 : index
      %200 = vector.load %arg34[%c0_91, %c0_92, %c0_93] : memref<2x8x128xf32, #tpu.memory_space<vmem>>, vector<2x8x128xf32>
      tpu.vector_store %arg34[%c0_91, %c0_92, %c0_93], %199 {strides = array<i32>} : memref<2x8x128xf32, #tpu.memory_space<vmem>>, vector<2x8x128xf32>,
      %201 = vector.broadcast %193 : vector<2x8x1xf32> to vector<2x8x128xf32>
      %202 = arith.mulf %167, %201 : vector<2x8x128xf32>
      %c0_94 = arith.constant 0 : index
      %c0_95 = arith.constant 0 : index
      %c0_96 = arith.constant 0 : index
      %203 = vector.load %arg4[%c0_94, %c0_95, %c0_96] : memref<2x1x1xf32, #tpu.memory_space<vmem>>, vector<2x1x1xf32>
      %204 = vector.broadcast %203 : vector<2x1x1xf32> to vector<2x8x1xf32>
      %205 = arith.mulf %204, %168 : vector<2x8x1xf32>
      %206 = vector.extract_strided_slice %202 {offsets = [0, 0, 0], sizes = [2, 1, 128], strides = [1, 1, 1]} : vector<2x8x128xf32> to vector<2x1x128xf32>
      %207 = vector.shape_cast %206 : vector<2x1x128xf32> to vector<2x128xf32>
      %208 = vector.extract_strided_slice %205 {offsets = [0, 0, 0], sizes = [2, 1, 1], strides = [1, 1, 1]} : vector<2x8x1xf32> to vector<2x1x1xf32>
      %209 = vector.shape_cast %208 : vector<2x1x1xf32> to vector<2x1xf32>
      %210 = arith.truncf %207 : vector<2x128xf32> to vector<2x128xbf16>
      %c0_97 = arith.constant 0 : index
      %c0_98 = arith.constant 0 : index
      %211 = vector.load %arg23[%c0_97, %c0_98] : memref<128x128xbf16, #tpu.memory_space<vmem>>, vector<128x128xbf16>
      %cst_99 = arith.constant dense<0.000000e+00> : vector<2x128xf32>
      %212 = tpu.matmul %210, %211, %cst_99 {dimension_numbers = #tpu.dot_dimension_numbers<[1], [0], [0], [1], [0, 0, 1, 1], [], []>} : vector<2x128xbf16>, vector<128x128xbf16>, vector<2x128xf32> -> vector<2x128xf32>
      %c0_100 = arith.constant 0 : index
      %c0_101 = arith.constant 0 : index
      %213 = vector.load %arg24[%c0_100, %c0_101] : memref<1x128xf32, #tpu.memory_space<vmem>>, vector<1x128xf32>
      %214 = vector.broadcast %213 : vector<1x128xf32> to vector<2x128xf32>
      %215 = arith.addf %212, %214 : vector<2x128xf32>
      %cst_102 = arith.constant 0.000000e+00 : f32
      %216 = vector.broadcast %cst_102 : f32 to vector<2x128xf32>
      %217 = arith.maximumf %215, %216 : vector<2x128xf32>
      %218 = arith.truncf %217 : vector<2x128xf32> to vector<2x128xbf16>
      %c0_103 = arith.constant 0 : index
      %c0_104 = arith.constant 0 : index
      %219 = vector.load %arg25[%c0_103, %c0_104] : memref<128x128xbf16, #tpu.memory_space<vmem>>, vector<128x128xbf16>
      %cst_105 = arith.constant dense<0.000000e+00> : vector<2x128xf32>
      %220 = tpu.matmul %218, %219, %cst_105 {dimension_numbers = #tpu.dot_dimension_numbers<[1], [0], [0], [1], [0, 0, 1, 1], [], []>} : vector<2x128xbf16>, vector<128x128xbf16>, vector<2x128xf32> -> vector<2x128xf32>
      %c0_106 = arith.constant 0 : index
      %c0_107 = arith.constant 0 : index
      %221 = vector.load %arg26[%c0_106, %c0_107] : memref<1x128xf32, #tpu.memory_space<vmem>>, vector<1x128xf32>
      %222 = vector.broadcast %221 : vector<1x128xf32> to vector<2x128xf32>
      %223 = arith.addf %220, %222 : vector<2x128xf32>
      %c0_108 = arith.constant 0 : index
      %c0_109 = arith.constant 0 : index
      %224 = vector.load %arg32[%c0_108, %c0_109] : memref<2x128xf32, #tpu.memory_space<vmem>>, vector<2x128xf32>
      tpu.vector_store %arg32[%c0_108, %c0_109], %223 {strides = array<i32>} : memref<2x128xf32, #tpu.memory_space<vmem>>, vector<2x128xf32>,
      %225 = arith.truncf %207 : vector<2x128xf32> to vector<2x128xbf16>
      %c0_110 = arith.constant 0 : index
      %c0_111 = arith.constant 0 : index
      %226 = vector.load %arg27[%c0_110, %c0_111] : memref<128x128xbf16, #tpu.memory_space<vmem>>, vector<128x128xbf16>
      %cst_112 = arith.constant dense<0.000000e+00> : vector<2x128xf32>
      %227 = tpu.matmul %225, %226, %cst_112 {dimension_numbers = #tpu.dot_dimension_numbers<[1], [0], [0], [1], [0, 0, 1, 1], [], []>} : vector<2x128xbf16>, vector<128x128xbf16>, vector<2x128xf32> -> vector<2x128xf32>
      %c0_113 = arith.constant 0 : index
      %c0_114 = arith.constant 0 : index
      %228 = vector.load %arg28[%c0_113, %c0_114] : memref<1x128xf32, #tpu.memory_space<vmem>>, vector<1x128xf32>
      %229 = vector.broadcast %209 : vector<2x1xf32> to vector<2x128xf32>
      %230 = vector.broadcast %228 : vector<1x128xf32> to vector<2x128xf32>
      %231 = arith.mulf %229, %230 : vector<2x128xf32>
      %232 = arith.addf %227, %231 : vector<2x128xf32>
      %c0_115 = arith.constant 0 : index
      %c0_116 = arith.constant 0 : index
      %233 = vector.load %arg29[%c0_115, %c0_116] : memref<1x128xf32, #tpu.memory_space<vmem>>, vector<1x128xf32>
      %234 = vector.broadcast %233 : vector<1x128xf32> to vector<2x128xf32>
      %235 = arith.addf %232, %234 : vector<2x128xf32>
      %cst_117 = arith.constant 0.000000e+00 : f32
      %236 = vector.broadcast %cst_117 : f32 to vector<2x128xf32>
      %237 = arith.maximumf %235, %236 : vector<2x128xf32>
      %238 = arith.truncf %237 : vector<2x128xf32> to vector<2x128xbf16>
      %c0_118 = arith.constant 0 : index
      %c0_119 = arith.constant 0 : index
      %239 = vector.load %arg30[%c0_118, %c0_119] : memref<128x128xbf16, #tpu.memory_space<vmem>>, vector<128x128xbf16>
      %cst_120 = arith.constant dense<0.000000e+00> : vector<2x128xf32>
      %240 = tpu.matmul %238, %239, %cst_120 {dimension_numbers = #tpu.dot_dimension_numbers<[1], [0], [0], [1], [0, 0, 1, 1], [], []>} : vector<2x128xbf16>, vector<128x128xbf16>, vector<2x128xf32> -> vector<2x128xf32>
      %c0_121 = arith.constant 0 : index
      %c0_122 = arith.constant 0 : index
      %241 = vector.load %arg31[%c0_121, %c0_122] : memref<1x128xf32, #tpu.memory_space<vmem>>, vector<1x128xf32>
      %242 = vector.broadcast %241 : vector<1x128xf32> to vector<2x128xf32>
      %243 = arith.addf %240, %242 : vector<2x128xf32>
      %c0_123 = arith.constant 0 : index
      %c0_124 = arith.constant 0 : index
      %244 = vector.load %arg33[%c0_123, %c0_124] : memref<2x128xf32, #tpu.memory_space<vmem>>, vector<2x128xf32>
      tpu.vector_store %arg33[%c0_123, %c0_124], %243 {strides = array<i32>} : memref<2x128xf32, #tpu.memory_space<vmem>>, vector<2x128xf32>,
    } else {
    }
    return
  }
  func.func @transform_0(%arg0: i32) -> (i32, i32, i32) {
    %c0_i32 = arith.constant 0 : i32
    %c0_i32_0 = arith.constant 0 : i32
    %c0_i32_1 = arith.constant 0 : i32
    %c0_i32_2 = arith.constant 0 : i32
    return %c0_i32, %c0_i32_0, %c0_i32_1 : i32, i32, i32
  }
  func.func @transform_1(%arg0: i32) -> (i32, i32, i32) {
    %c0_i32 = arith.constant 0 : i32
    %c0_i32_0 = arith.constant 0 : i32
    %c0_i32_1 = arith.constant 0 : i32
    %c0_i32_2 = arith.constant 0 : i32
    return %c0_i32, %c0_i32_0, %c0_i32_1 : i32, i32, i32
  }
  func.func @transform_2(%arg0: i32) -> (i32, i32, i32) {
    %c0_i32 = arith.constant 0 : i32
    %c0_i32_0 = arith.constant 0 : i32
    %c0_i32_1 = arith.constant 0 : i32
    %c0_i32_2 = arith.constant 0 : i32
    return %c0_i32, %c0_i32_0, %c0_i32_1 : i32, i32, i32
  }
  func.func @transform_3(%arg0: i32) -> (i32, i32, i32) {
    %c0_i32 = arith.constant 0 : i32
    %c0_i32_0 = arith.constant 0 : i32
    %c0_i32_1 = arith.constant 0 : i32
    %c0_i32_2 = arith.constant 0 : i32
    return %c0_i32, %c0_i32_0, %c0_i32_1 : i32, i32, i32
  }
  func.func @transform_4(%arg0: i32) -> (i32, i32) {
    %c0_i32 = arith.constant 0 : i32
    %c0_i32_0 = arith.constant 0 : i32
    %c0_i32_1 = arith.constant 0 : i32
    return %c0_i32, %c0_i32_0 : i32, i32
  }
  func.func @transform_5(%arg0: i32) -> (i32, i32) {
    %c0_i32 = arith.constant 0 : i32
    %c0_i32_0 = arith.constant 0 : i32
    %c0_i32_1 = arith.constant 0 : i32
    return %c0_i32, %c0_i32_0 : i32, i32
  }
  func.func @transform_6(%arg0: i32) -> (i32, i32, i32) {
    %c0_i32 = arith.constant 0 : i32
    %c0_i32_0 = arith.constant 0 : i32
    %c0_i32_1 = arith.constant 0 : i32
    return %arg0, %c0_i32, %c0_i32_0 : i32, i32, i32
  }
  func.func @transform_7(%arg0: i32) -> (i32, i32, i32) {
    %c0_i32 = arith.constant 0 : i32
    %c0_i32_0 = arith.constant 0 : i32
    %c0_i32_1 = arith.constant 0 : i32
    return %arg0, %c0_i32, %c0_i32_0 : i32, i32, i32
  }
  func.func @transform_8(%arg0: i32) -> (i32, i32, i32) {
    %c0_i32 = arith.constant 0 : i32
    %c0_i32_0 = arith.constant 0 : i32
    %c0_i32_1 = arith.constant 0 : i32
    return %arg0, %c0_i32, %c0_i32_0 : i32, i32, i32
  }
  func.func @transform_9(%arg0: i32) -> (i32, i32, i32) {
    %c0_i32 = arith.constant 0 : i32
    %c0_i32_0 = arith.constant 0 : i32
    %c0_i32_1 = arith.constant 0 : i32
    return %arg0, %c0_i32, %c0_i32_0 : i32, i32, i32
  }
  func.func @transform_10(%arg0: i32) -> (i32, i32, i32) {
    %c0_i32 = arith.constant 0 : i32
    %c0_i32_0 = arith.constant 0 : i32
    %c0_i32_1 = arith.constant 0 : i32
    return %arg0, %c0_i32, %c0_i32_0 : i32, i32, i32
  }
  func.func @transform_11(%arg0: i32) -> (i32, i32, i32) {
    %c0_i32 = arith.constant 0 : i32
    %c0_i32_0 = arith.constant 0 : i32
    %c0_i32_1 = arith.constant 0 : i32
    return %arg0, %c0_i32, %c0_i32_0 : i32, i32, i32
  }
  func.func @transform_12(%arg0: i32) -> (i32, i32, i32) {
    %c0_i32 = arith.constant 0 : i32
    %c0_i32_0 = arith.constant 0 : i32
    %c0_i32_1 = arith.constant 0 : i32
    return %arg0, %c0_i32, %c0_i32_0 : i32, i32, i32
  }
  func.func @transform_13(%arg0: i32) -> (i32, i32, i32) {
    %c0_i32 = arith.constant 0 : i32
    %c0_i32_0 = arith.constant 0 : i32
    %c0_i32_1 = arith.constant 0 : i32
    return %arg0, %c0_i32, %c0_i32_0 : i32, i32, i32
  }
  func.func @transform_14(%arg0: i32) -> (i32, i32, i32) {
    %c0_i32 = arith.constant 0 : i32
    %c0_i32_0 = arith.constant 0 : i32
    %c0_i32_1 = arith.constant 0 : i32
    return %arg0, %c0_i32, %c0_i32_0 : i32, i32, i32
  }
  func.func @transform_15(%arg0: i32) -> (i32, i32, i32) {
    %c0_i32 = arith.constant 0 : i32
    %c0_i32_0 = arith.constant 0 : i32
    %c0_i32_1 = arith.constant 0 : i32
    return %arg0, %c0_i32, %c0_i32_0 : i32, i32, i32
  }
  func.func @transform_16(%arg0: i32) -> (i32, i32, i32) {
    %c0_i32 = arith.constant 0 : i32
    %c0_i32_0 = arith.constant 0 : i32
    %c0_i32_1 = arith.constant 0 : i32
    return %arg0, %c0_i32, %c0_i32_0 : i32, i32, i32
  }
  func.func @transform_17(%arg0: i32) -> (i32, i32, i32) {
    %c0_i32 = arith.constant 0 : i32
    %c0_i32_0 = arith.constant 0 : i32
    %c0_i32_1 = arith.constant 0 : i32
    return %arg0, %c0_i32, %c0_i32_0 : i32, i32, i32
  }
  func.func @transform_18(%arg0: i32) -> (i32, i32) {
    %c0_i32 = arith.constant 0 : i32
    %c0_i32_0 = arith.constant 0 : i32
    %c0_i32_1 = arith.constant 0 : i32
    return %c0_i32, %c0_i32_0 : i32, i32
  }
  func.func @transform_19(%arg0: i32) -> (i32, i32) {
    %c0_i32 = arith.constant 0 : i32
    %c0_i32_0 = arith.constant 0 : i32
    %c0_i32_1 = arith.constant 0 : i32
    return %c0_i32, %c0_i32_0 : i32, i32
  }
  func.func @transform_20(%arg0: i32) -> (i32, i32) {
    %c0_i32 = arith.constant 0 : i32
    %c0_i32_0 = arith.constant 0 : i32
    %c0_i32_1 = arith.constant 0 : i32
    return %c0_i32, %c0_i32_0 : i32, i32
  }
  func.func @transform_21(%arg0: i32) -> (i32, i32) {
    %c0_i32 = arith.constant 0 : i32
    %c0_i32_0 = arith.constant 0 : i32
    %c0_i32_1 = arith.constant 0 : i32
    return %c0_i32, %c0_i32_0 : i32, i32
  }
  func.func @transform_22(%arg0: i32) -> (i32, i32) {
    %c0_i32 = arith.constant 0 : i32
    %c0_i32_0 = arith.constant 0 : i32
    %c0_i32_1 = arith.constant 0 : i32
    return %c0_i32, %c0_i32_0 : i32, i32
  }
  func.func @transform_23(%arg0: i32) -> (i32, i32) {
    %c0_i32 = arith.constant 0 : i32
    %c0_i32_0 = arith.constant 0 : i32
    %c0_i32_1 = arith.constant 0 : i32
    return %c0_i32, %c0_i32_0 : i32, i32
  }
  func.func @transform_24(%arg0: i32) -> (i32, i32) {
    %c0_i32 = arith.constant 0 : i32
    %c0_i32_0 = arith.constant 0 : i32
    %c0_i32_1 = arith.constant 0 : i32
    return %c0_i32, %c0_i32_0 : i32, i32
  }
  func.func @transform_25(%arg0: i32) -> (i32, i32) {
    %c0_i32 = arith.constant 0 : i32
    %c0_i32_0 = arith.constant 0 : i32
    %c0_i32_1 = arith.constant 0 : i32
    return %c0_i32, %c0_i32_0 : i32, i32
  }
  func.func @transform_26(%arg0: i32) -> (i32, i32) {
    %c0_i32 = arith.constant 0 : i32
    %c0_i32_0 = arith.constant 0 : i32
    %c0_i32_1 = arith.constant 0 : i32
    return %c0_i32, %c0_i32_0 : i32, i32
  }
  func.func @transform_27(%arg0: i32) -> (i32, i32) {
    %c0_i32 = arith.constant 0 : i32
    %c0_i32_0 = arith.constant 0 : i32
    %c0_i32_1 = arith.constant 0 : i32
    return %c0_i32, %c0_i32_0 : i32, i32
  }
  func.func @transform_28(%arg0: i32) -> (i32, i32) {
    %c0_i32 = arith.constant 0 : i32
    %c0_i32_0 = arith.constant 0 : i32
    %c0_i32_1 = arith.constant 0 : i32
    return %c0_i32, %c0_i32_0 : i32, i32
  }
  func.func @transform_29(%arg0: i32) -> (i32, i32) {
    %c0_i32 = arith.constant 0 : i32
    %c0_i32_0 = arith.constant 0 : i32
    %c0_i32_1 = arith.constant 0 : i32
    return %c0_i32, %c0_i32_0 : i32, i32
  }
  func.func @transform_30(%arg0: i32) -> (i32, i32) {
    %c0_i32 = arith.constant 0 : i32
    %c0_i32_0 = arith.constant 0 : i32
    %c0_i32_1 = arith.constant 0 : i32
    return %c0_i32, %c0_i32_0 : i32, i32
  }
  func.func @transform_31(%arg0: i32) -> (i32, i32) {
    %c0_i32 = arith.constant 0 : i32
    %c0_i32_0 = arith.constant 0 : i32
    %c0_i32_1 = arith.constant 0 : i32
    return %c0_i32, %c0_i32_0 : i32, i32
  }
  func.func @transform_32(%arg0: i32) -> (i32, i32) {
    %c0_i32 = arith.constant 0 : i32
    %c0_i32_0 = arith.constant 0 : i32
    %c0_i32_1 = arith.constant 0 : i32
    return %c0_i32, %c0_i32_0 : i32, i32
  }
  func.func @transform_33(%arg0: i32) -> (i32, i32, i32) {
    %c0_i32 = arith.constant 0 : i32
    %c0_i32_0 = arith.constant 0 : i32
    %c0_i32_1 = arith.constant 0 : i32
    %c0_i32_2 = arith.constant 0 : i32
    return %c0_i32, %c0_i32_0, %c0_i32_1 : i32, i32, i32
  }
}

</mosaic_0001>

<llo_original>
// kernel: tpu_custom_call.1
$region0: #{tpu_custom_call.1}
  #allocation0 [shape = 'u32[]', space=smem, size = 0x4, offset = 0x4, fixed_abs, tag = 'smem constant byte address 0x4 - core index']
  #allocation1 [shape = 'u32[144,128]{1,0:T(1,128)}', space=vmem, size = 0x12000, scoped, tag = 'internal scratch']
  #allocation2 [shape = 'f32[16,128]{1,0:T(8,128)}', space=vmem, size = 0x2000, scoped, tag = 'scratch operand']
  %s0 = inlined_call_operand.smem [shape: u32[34], index: -1, kind: input, shape index: {}]
  %s1 = sld [smem:[%s0]]
  %s2 = scalar_lea.smem %s0, 1
  %s3 = sld [smem:[%s2]]
  %s4 = scalar_lea.smem %s0, 2
  %s5 = sld [smem:[%s4]]
  %s6 = scalar_lea.smem %s0, 3
  %s7 = sld [smem:[%s6]]
  %s8 = scalar_lea.smem %s0, 4
  %s9 = sld [smem:[%s8]]
  %s10 = scalar_lea.smem %s0, 5
  %s11 = sld [smem:[%s10]]
  %s12 = scalar_lea.smem %s0, 6
  %s13 = sld [smem:[%s12]]
  %s14 = scalar_lea.smem %s0, 7
  %s15 = sld [smem:[%s14]]
  %s16 = scalar_lea.smem %s0, 8
  %s17 = sld [smem:[%s16]]
  %s18 = scalar_lea.smem %s0, 9
  %s19 = sld [smem:[%s18]]
  %s20 = scalar_lea.smem %s0, 10
  %s21 = sld [smem:[%s20]]
  %s22 = scalar_lea.smem %s0, 11
  %s23 = sld [smem:[%s22]]
  %s24 = scalar_lea.smem %s0, 12
  %s25 = sld [smem:[%s24]]
  %s26 = scalar_lea.smem %s0, 13
  %s27 = sld [smem:[%s26]]
  %s28 = scalar_lea.smem %s0, 14
  %s29 = sld [smem:[%s28]]
  %s30 = scalar_lea.smem %s0, 15
  %s31 = sld [smem:[%s30]]
  %s32 = scalar_lea.smem %s0, 16
  %s33 = sld [smem:[%s32]]
  %s34 = scalar_lea.smem %s0, 17
  %s35 = sld [smem:[%s34]]
  %s36 = scalar_lea.smem %s0, 18
  %s37 = sld [smem:[%s36]]
  %s38 = scalar_lea.smem %s0, 19
  %s39 = sld [smem:[%s38]]
  %s40 = scalar_lea.smem %s0, 20
  %s41 = sld [smem:[%s40]]
  %s42 = scalar_lea.smem %s0, 21
  %s43 = sld [smem:[%s42]]
  %s44 = scalar_lea.smem %s0, 22
  %s45 = sld [smem:[%s44]]
  %s46 = scalar_lea.smem %s0, 23
  %s47 = sld [smem:[%s46]]
  %s48 = scalar_lea.smem %s0, 24
  %s49 = sld [smem:[%s48]]
  %s50 = scalar_lea.smem %s0, 25
  %s51 = sld [smem:[%s50]]
  %s52 = scalar_lea.smem %s0, 26
  %s53 = sld [smem:[%s52]]
  %s54 = scalar_lea.smem %s0, 27
  %s55 = sld [smem:[%s54]]
  %s56 = scalar_lea.smem %s0, 28
  %s57 = sld [smem:[%s56]]
  %s58 = scalar_lea.smem %s0, 29
  %s59 = sld [smem:[%s58]]
  %s60 = scalar_lea.smem %s0, 30
  %s61 = sld [smem:[%s60]]
  %s62 = scalar_lea.smem %s0, 31
  %s63 = sld [smem:[%s62]]
  %s64 = scalar_lea.smem %s0, 32
  %s65 = sld [smem:[%s64]]
  %s66 = scalar_lea.smem %s0, 33
  %s67 = sld [smem:[%s66]]
  %68 = xla_tuple %s63, %s65, %s67
  %s69 = sld [smem:[#allocation0]]
  $region277: #{tpu_custom_call.1} parent=0
    _
  %s71 = ssub.s32 1, %s69
  %s72 = scalar_select 0, %s71, %s69
  $region1: #{tpu_custom_call.1} parent=0
    #allocation3 [shape = 'u8[8192]{0}', space=vmem, size = 0x2000, scoped, tag = 'input window, operand 0, single buffered']
    #allocation4 [shape = 's32[2]{0}', space=sflag, size = 0x8, scoped, tag = 'scoped memory for tpu_custom_call.1']
    #allocation5 [shape = 's32[2]{0}', space=sflag, size = 0x8, scoped, tag = 'scoped memory for tpu_custom_call.1']
    #allocation6 [shape = 'u8[4096]{0}', space=vmem, size = 0x1000, scoped, tag = 'input window, operand 1, single buffered']
    #allocation7 [shape = 's32[1]{0}', space=sflag, size = 0x4, scoped, tag = 'scoped memory for tpu_custom_call.1']
    #allocation8 [shape = 'u8[512]{0}', space=vmem, size = 0x400, scoped, tag = 'input window, operand 5, single buffered']
    #allocation9 [shape = 'u8[393216]{0}', space=vmem, size = 0x60000, scoped, tag = 'input window, operand 6']
    #allocation10 [shape = 's32[2]{0}', space=sflag, size = 0x8, scoped, tag = 'scoped memory for tpu_custom_call.1']
    #allocation11 [shape = 'u8[6144]{0}', space=vmem, size = 0x1800, scoped, tag = 'input window, operand 7']
    #allocation12 [shape = 'u8[131072]{0}', space=vmem, size = 0x20000, scoped, tag = 'input window, operand 8']
    #allocation13 [shape = 's32[2]{0}', space=sflag, size = 0x8, scoped, tag = 'scoped memory for tpu_custom_call.1']
    #allocation14 [shape = 'u8[1024]{0}', space=vmem, size = 0x400, scoped, tag = 'input window, operand 10']
    #allocation15 [shape = 'u8[1024]{0}', space=vmem, size = 0x400, scoped, tag = 'input window, operand 11']
    #allocation16 [shape = 's32[2]{0}', space=sflag, size = 0x8, scoped, tag = 'scoped memory for tpu_custom_call.1']
    #allocation17 [shape = 'u8[262144]{0}', space=vmem, size = 0x40000, scoped, tag = 'input window, operand 12']
    #allocation18 [shape = 'u8[4096]{0}', space=vmem, size = 0x1000, scoped, tag = 'input window, operand 13']
    #allocation19 [shape = 's32[2]{0}', space=sflag, size = 0x8, scoped, tag = 'scoped memory for tpu_custom_call.1']
    #allocation20 [shape = 'u8[262144]{0}', space=vmem, size = 0x40000, scoped, tag = 'input window, operand 14']
    #allocation21 [shape = 'u8[1024]{0}', space=vmem, size = 0x400, scoped, tag = 'input window, operand 15']
    #allocation22 [shape = 's32[2]{0}', space=sflag, size = 0x8, scoped, tag = 'scoped memory for tpu_custom_call.1']
    #allocation23 [shape = 'u8[1024]{0}', space=vmem, size = 0x400, scoped, tag = 'input window, operand 16']
    #allocation24 [shape = 'u8[1024]{0}', space=vmem, size = 0x400, scoped, tag = 'input window, operand 17']
    #allocation25 [shape = 's32[2]{0}', space=sflag, size = 0x8, scoped, tag = 'scoped memory for tpu_custom_call.1']
    #allocation26 [shape = 'u8[512]{0}', space=vmem, size = 0x400, scoped, tag = 'input window, operand 19, single buffered']
    #allocation27 [shape = 'u8[32768]{0}', space=vmem, size = 0x8000, scoped, tag = 'input window, operand 20, single buffered']
    #allocation28 [shape = 's32[1]{0}', space=sflag, size = 0x4, scoped, tag = 'scoped memory for tpu_custom_call.1']
    #allocation29 [shape = 'u8[512]{0}', space=vmem, size = 0x400, scoped, tag = 'input window, operand 21, single buffered']
    #allocation30 [shape = 'u8[32768]{0}', space=vmem, size = 0x8000, scoped, tag = 'input window, operand 22, single buffered']
    #allocation31 [shape = 's32[1]{0}', space=sflag, size = 0x4, scoped, tag = 'scoped memory for tpu_custom_call.1']
    #allocation32 [shape = 'u8[512]{0}', space=vmem, size = 0x400, scoped, tag = 'input window, operand 23, single buffered']
    #allocation33 [shape = 'u8[32768]{0}', space=vmem, size = 0x8000, scoped, tag = 'input window, operand 24, single buffered']
    #allocation34 [shape = 's32[1]{0}', space=sflag, size = 0x4, scoped, tag = 'scoped memory for tpu_custom_call.1']
    #allocation35 [shape = 'u8[512]{0}', space=vmem, size = 0x400, scoped, tag = 'input window, operand 25, single buffered']
    #allocation36 [shape = 'u8[32768]{0}', space=vmem, size = 0x8000, scoped, tag = 'input window, operand 26, single buffered']
    #allocation37 [shape = 's32[1]{0}', space=sflag, size = 0x4, scoped, tag = 'scoped memory for tpu_custom_call.1']
    #allocation38 [shape = 'u8[512]{0}', space=vmem, size = 0x400, scoped, tag = 'input window, operand 27, single buffered']
    #allocation39 [shape = 'u8[512]{0}', space=vmem, size = 0x400, scoped, tag = 'input window, operand 28, single buffered']
    #allocation40 [shape = 's32[1]{0}', space=sflag, size = 0x4, scoped, tag = 'scoped memory for tpu_custom_call.1']
    #allocation41 [shape = 'u8[1024]{0}', space=vmem, size = 0x400, scoped, tag = 'output window, operand 0, single buffered']
    #allocation42 [shape = 'u8[1024]{0}', space=vmem, size = 0x400, scoped, tag = 'output window, operand 1, single buffered']
    #allocation43 [shape = 's32[1]{0}', space=sflag, size = 0x4, scoped, tag = 'scoped memory for tpu_custom_call.1']
    #allocation44 [shape = 'u8[8192]{0}', space=vmem, size = 0x2000, scoped, tag = 'output window, operand 2, single buffered']
    %73 = vsyncpa [#allocation4], 0
    %74 = vsyncpa [#allocation7], 0
    %75 = vsyncpa [#allocation10], 0
    %s76 = scalar_lea.sflag [#allocation10], 1
    %77 = vsyncpa %s76, 0
    %78 = vsyncpa [#allocation13], 0
    %s79 = scalar_lea.sflag [#allocation13], 1
    %80 = vsyncpa %s79, 0
    %81 = vsyncpa [#allocation16], 0
    %s82 = scalar_lea.sflag [#allocation16], 1
    %83 = vsyncpa %s82, 0
    %84 = vsyncpa [#allocation19], 0
    %s85 = scalar_lea.sflag [#allocation19], 1
    %86 = vsyncpa %s85, 0
    %87 = vsyncpa [#allocation22], 0
    %s88 = scalar_lea.sflag [#allocation22], 1
    %89 = vsyncpa %s88, 0
    %90 = vsyncpa [#allocation25], 0
    %s91 = scalar_lea.sflag [#allocation25], 1
    %92 = vsyncpa %s91, 0
    %93 = vsyncpa [#allocation28], 0
    %94 = vsyncpa [#allocation31], 0
    %95 = vsyncpa [#allocation34], 0
    %96 = vsyncpa [#allocation37], 0
    %97 = vsyncpa [#allocation40], 0
    %98 = vsyncpa [#allocation5], 0
    %99 = vsyncpa [#allocation43], 0
    loop: start=0, step=1, limit=4
    $region2: #{tpu_custom_call.1} parent=1 // loop_pre_header
      _
    $region3: #{tpu_custom_call.1} parent=1 // loop_header
      %s101 = sphi 0, %s105
      %p102 = scmp.ge.s32.totalorder %s101, 4
      %s109 = sphi 0, %s109
      %s111 = sphi 0, %s109
      %s112 = sphi 0, %s111
      %s126 = sphi 0, %s112
      %s130 = sphi 0, %s130
      %s132 = sphi 0, %s130
      %s133 = sphi 0, %s132
      %s147 = sphi 0, %s133
      %s151 = sphi 0, %s151
      %s153 = sphi 0, %s151
      %s154 = sphi 0, %s153
      %s168 = sphi 0, %s154
      %s172 = sphi 0, %s172
      %s174 = sphi 0, %s172
      %s175 = sphi 0, %s174
      %s189 = sphi 0, %s175
      %s193 = sphi 0, %s193
      %s195 = sphi 0, %s193
      %s196 = sphi 0, %s195
      %s210 = sphi 0, %s196
      %s214 = sphi 0, %s214
      %s216 = sphi 0, %s214
      %s217 = sphi 0, %s216
      %s231 = sphi 0, %s217
      %s237 = sphi 0, %s239
      %s240 = sphi 0, %s237
      %s241 = sphi 0, %s240
      %s257 = sphi 0, %s241
      %s263 = sphi 0, %s265
      %s266 = sphi 0, %s263
      %s267 = sphi 0, %s266
      %s283 = sphi 0, %s267
      %s289 = sphi 0, %s291
      %s292 = sphi 0, %s289
      %s293 = sphi 0, %s292
      %s309 = sphi 0, %s293
      %s315 = sphi 0, %s317
      %s318 = sphi 0, %s315
      %s319 = sphi 0, %s318
      %s335 = sphi 0, %s319
      %s341 = sphi 0, %s343
      %s344 = sphi 0, %s341
      %s345 = sphi 0, %s344
      %s361 = sphi 0, %s345
      %s367 = sphi 0, %s369
      %s370 = sphi 0, %s367
      %s371 = sphi 0, %s370
      %s387 = sphi 0, %s371
      %s393 = sphi 0, %s395
      %s396 = sphi 0, %s393
      %s397 = sphi 0, %s396
      %s413 = sphi 0, %s397
      %s419 = sphi 0, %s421
      %s422 = sphi 0, %s419
      %s423 = sphi 0, %s422
      %s439 = sphi 0, %s423
      %s445 = sphi 0, %s447
      %s448 = sphi 0, %s445
      %s449 = sphi 0, %s448
      %s465 = sphi 0, %s449
      %s471 = sphi 0, %s473
      %s474 = sphi 0, %s471
      %s475 = sphi 0, %s474
      %s491 = sphi 0, %s475
      %s497 = sphi 0, %s499
      %s500 = sphi 0, %s497
      %s501 = sphi 0, %s500
      %s517 = sphi 0, %s501
      %s523 = sphi 0, %s525
      %s526 = sphi 0, %s523
      %s527 = sphi 0, %s526
      %s543 = sphi 0, %s527
      %s547 = sphi 0, %s547
      %s549 = sphi 0, %s547
      %s550 = sphi 0, %s549
      %s564 = sphi 0, %s550
      %s568 = sphi 0, %s568
      %s570 = sphi 0, %s568
      %s571 = sphi 0, %s570
      %s585 = sphi 0, %s571
      %s589 = sphi 0, %s589
      %s591 = sphi 0, %s589
      %s592 = sphi 0, %s591
      %s606 = sphi 0, %s592
      %s610 = sphi 0, %s610
      %s612 = sphi 0, %s610
      %s613 = sphi 0, %s612
      %s627 = sphi 0, %s613
      %s631 = sphi 0, %s631
      %s633 = sphi 0, %s631
      %s634 = sphi 0, %s633
      %s648 = sphi 0, %s634
      %s652 = sphi 0, %s652
      %s654 = sphi 0, %s652
      %s655 = sphi 0, %s654
      %s669 = sphi 0, %s655
      %s673 = sphi 0, %s673
      %s675 = sphi 0, %s673
      %s676 = sphi 0, %s675
      %s690 = sphi 0, %s676
      %s694 = sphi 0, %s694
      %s696 = sphi 0, %s694
      %s697 = sphi 0, %s696
      %s711 = sphi 0, %s697
      %s715 = sphi 0, %s715
      %s717 = sphi 0, %s715
      %s718 = sphi 0, %s717
      %s732 = sphi 0, %s718
      %s736 = sphi 0, %s736
      %s738 = sphi 0, %s736
      %s739 = sphi 0, %s738
      %s753 = sphi 0, %s739
      %s757 = sphi 0, %s757
      %s759 = sphi 0, %s757
      %s760 = sphi 0, %s759
      %s774 = sphi 0, %s760
      %s778 = sphi 0, %s778
      %s780 = sphi 0, %s778
      %s781 = sphi 0, %s780
      %s795 = sphi 0, %s781
      %s799 = sphi 0, %s799
      %s801 = sphi 0, %s799
      %s802 = sphi 0, %s801
      %s816 = sphi 0, %s802
      %s820 = sphi 0, %s820
      %s822 = sphi 0, %s820
      %s823 = sphi 0, %s822
      %s837 = sphi 0, %s823
      %s841 = sphi 0, %s841
      %s843 = sphi 0, %s841
      %s844 = sphi 0, %s843
      %s858 = sphi 0, %s844
      %s862 = sphi 0, %s862
      %s864 = sphi 0, %s862
      %s865 = sphi 0, %s864
      %s879 = sphi 0, %s865
    $region4: #{tpu_custom_call.1} parent=1 // loop_header_branch
      %104 = sbr.rel (%p102) target = $region8
    $region5: #{tpu_custom_call.1} parent=1 // loop_body
      %s106 = ssub.s32 %s101, 1
      %s107 = ssub.s32 %s101, 2
      %s108 = sadd.s32 %s101, 1
      %s110 = sadd.s32 %s109, 1
      %p113 = scmp.eq.s32.totalorder %s101, 1
      %p114 = scmp.ne.s32.totalorder %s109, %s111
      %p115 = scmp.eq.s32.totalorder %s101, 0
      %p116 = por %p114, %p115
      %p117 = scmp.ne.s32.totalorder %s109, %s111
      %p118 = scmp.eq.s32.totalorder %s106, 1
      %p119 = por %p117, %p118
      %p120 = scmp.ne.s32.totalorder %s111, %s112
      %p121 = scmp.eq.s32.totalorder %s106, 0
      %p122 = por %p120, %p121
      %p123 = scmp.ne.s32.totalorder %s111, %s112
      %p124 = scmp.eq.s32.totalorder %s107, 1
      %p125 = por %p123, %p124
      %p127 = scmp.ne.s32.totalorder %s112, %s126
      %p128 = scmp.eq.s32.totalorder %s107, 0
      %p129 = por %p127, %p128
      %s131 = sadd.s32 %s130, 1
      %p134 = scmp.eq.s32.totalorder %s101, 1
      %p135 = scmp.ne.s32.totalorder %s130, %s132
      %p136 = scmp.eq.s32.totalorder %s101, 0
      %p137 = por %p135, %p136
      %p138 = scmp.ne.s32.totalorder %s130, %s132
      %p139 = scmp.eq.s32.totalorder %s106, 1
      %p140 = por %p138, %p139
      %p141 = scmp.ne.s32.totalorder %s132, %s133
      %p142 = scmp.eq.s32.totalorder %s106, 0
      %p143 = por %p141, %p142
      %p144 = scmp.ne.s32.totalorder %s132, %s133
      %p145 = scmp.eq.s32.totalorder %s107, 1
      %p146 = por %p144, %p145
      %p148 = scmp.ne.s32.totalorder %s133, %s147
      %p149 = scmp.eq.s32.totalorder %s107, 0
      %p150 = por %p148, %p149
      %s152 = sadd.s32 %s151, 1
      %p155 = scmp.eq.s32.totalorder %s101, 1
      %p156 = scmp.ne.s32.totalorder %s151, %s153
      %p157 = scmp.eq.s32.totalorder %s101, 0
      %p158 = por %p156, %p157
      %p159 = scmp.ne.s32.totalorder %s151, %s153
      %p160 = scmp.eq.s32.totalorder %s106, 1
      %p161 = por %p159, %p160
      %p162 = scmp.ne.s32.totalorder %s153, %s154
      %p163 = scmp.eq.s32.totalorder %s106, 0
      %p164 = por %p162, %p163
      %p165 = scmp.ne.s32.totalorder %s153, %s154
      %p166 = scmp.eq.s32.totalorder %s107, 1
      %p167 = por %p165, %p166
      %p169 = scmp.ne.s32.totalorder %s154, %s168
      %p170 = scmp.eq.s32.totalorder %s107, 0
      %p171 = por %p169, %p170
      %s173 = sadd.s32 %s172, 1
      %p176 = scmp.eq.s32.totalorder %s101, 1
      %p177 = scmp.ne.s32.totalorder %s172, %s174
      %p178 = scmp.eq.s32.totalorder %s101, 0
      %p179 = por %p177, %p178
      %p180 = scmp.ne.s32.totalorder %s172, %s174
      %p181 = scmp.eq.s32.totalorder %s106, 1
      %p182 = por %p180, %p181
      %p183 = scmp.ne.s32.totalorder %s174, %s175
      %p184 = scmp.eq.s32.totalorder %s106, 0
      %p185 = por %p183, %p184
      %p186 = scmp.ne.s32.totalorder %s174, %s175
      %p187 = scmp.eq.s32.totalorder %s107, 1
      %p188 = por %p186, %p187
      %p190 = scmp.ne.s32.totalorder %s175, %s189
      %p191 = scmp.eq.s32.totalorder %s107, 0
      %p192 = por %p190, %p191
      %s194 = sadd.s32 %s193, 1
      %p197 = scmp.eq.s32.totalorder %s101, 1
      %p198 = scmp.ne.s32.totalorder %s193, %s195
      %p199 = scmp.eq.s32.totalorder %s101, 0
      %p200 = por %p198, %p199
      %p201 = scmp.ne.s32.totalorder %s193, %s195
      %p202 = scmp.eq.s32.totalorder %s106, 1
      %p203 = por %p201, %p202
      %p204 = scmp.ne.s32.totalorder %s195, %s196
      %p205 = scmp.eq.s32.totalorder %s106, 0
      %p206 = por %p204, %p205
      %p207 = scmp.ne.s32.totalorder %s195, %s196
      %p208 = scmp.eq.s32.totalorder %s107, 1
      %p209 = por %p207, %p208
      %p211 = scmp.ne.s32.totalorder %s196, %s210
      %p212 = scmp.eq.s32.totalorder %s107, 0
      %p213 = por %p211, %p212
      %s215 = sadd.s32 %s214, 1
      %p218 = scmp.eq.s32.totalorder %s101, 1
      %p219 = scmp.ne.s32.totalorder %s214, %s216
      %p220 = scmp.eq.s32.totalorder %s101, 0
      %p221 = por %p219, %p220
      %p222 = scmp.ne.s32.totalorder %s214, %s216
      %p223 = scmp.eq.s32.totalorder %s106, 1
      %p224 = por %p222, %p223
      %p225 = scmp.ne.s32.totalorder %s216, %s217
      %p226 = scmp.eq.s32.totalorder %s106, 0
      %p227 = por %p225, %p226
      %p228 = scmp.ne.s32.totalorder %s216, %s217
      %p229 = scmp.eq.s32.totalorder %s107, 1
      %p230 = por %p228, %p229
      %p232 = scmp.ne.s32.totalorder %s217, %s231
      %p233 = scmp.eq.s32.totalorder %s107, 0
      %p234 = por %p232, %p233
      %s235 = ssub.s32 %s101, %s108
      %p236 = scmp.eq.s32.totalorder %s235, 0
      %s238 = sadd.s32 %s237, 1
      %s239 = scalar_select %p236, %s237, %s238
      %p242 = pneg %p236
      %p243 = scmp.eq.s32.totalorder %s101, 1
      %p244 = por %p242, %p243
      %p245 = scmp.ne.s32.totalorder %s237, %s240
      %p246 = scmp.eq.s32.totalorder %s101, 0
      %p247 = por %p245, %p246
      %p248 = scmp.ne.s32.totalorder %s237, %s240
      %p249 = scmp.eq.s32.totalorder %s106, 1
      %p250 = por %p248, %p249
      %p251 = scmp.ne.s32.totalorder %s240, %s241
      %p252 = scmp.eq.s32.totalorder %s106, 0
      %p253 = por %p251, %p252
      %p254 = scmp.ne.s32.totalorder %s240, %s241
      %p255 = scmp.eq.s32.totalorder %s107, 1
      %p256 = por %p254, %p255
      %p258 = scmp.ne.s32.totalorder %s241, %s257
      %p259 = scmp.eq.s32.totalorder %s107, 0
      %p260 = por %p258, %p259
      %s261 = ssub.s32 %s101, %s108
      %p262 = scmp.eq.s32.totalorder %s261, 0
      %s264 = sadd.s32 %s263, 1
      %s265 = scalar_select %p262, %s263, %s264
      %p268 = pneg %p262
      %p269 = scmp.eq.s32.totalorder %s101, 1
      %p270 = por %p268, %p269
      %p271 = scmp.ne.s32.totalorder %s263, %s266
      %p272 = scmp.eq.s32.totalorder %s101, 0
      %p273 = por %p271, %p272
      %p274 = scmp.ne.s32.totalorder %s263, %s266
      %p275 = scmp.eq.s32.totalorder %s106, 1
      %p276 = por %p274, %p275
      %p277 = scmp.ne.s32.totalorder %s266, %s267
      %p278 = scmp.eq.s32.totalorder %s106, 0
      %p279 = por %p277, %p278
      %p280 = scmp.ne.s32.totalorder %s266, %s267
      %p281 = scmp.eq.s32.totalorder %s107, 1
      %p282 = por %p280, %p281
      %p284 = scmp.ne.s32.totalorder %s267, %s283
      %p285 = scmp.eq.s32.totalorder %s107, 0
      %p286 = por %p284, %p285
      %s287 = ssub.s32 %s101, %s108
      %p288 = scmp.eq.s32.totalorder %s287, 0
      %s290 = sadd.s32 %s289, 1
      %s291 = scalar_select %p288, %s289, %s290
      %p294 = pneg %p288
      %p295 = scmp.eq.s32.totalorder %s101, 1
      %p296 = por %p294, %p295
      %p297 = scmp.ne.s32.totalorder %s289, %s292
      %p298 = scmp.eq.s32.totalorder %s101, 0
      %p299 = por %p297, %p298
      %p300 = scmp.ne.s32.totalorder %s289, %s292
      %p301 = scmp.eq.s32.totalorder %s106, 1
      %p302 = por %p300, %p301
      %p303 = scmp.ne.s32.totalorder %s292, %s293
      %p304 = scmp.eq.s32.totalorder %s106, 0
      %p305 = por %p303, %p304
      %p306 = scmp.ne.s32.totalorder %s292, %s293
      %p307 = scmp.eq.s32.totalorder %s107, 1
      %p308 = por %p306, %p307
      %p310 = scmp.ne.s32.totalorder %s293, %s309
      %p311 = scmp.eq.s32.totalorder %s107, 0
      %p312 = por %p310, %p311
      %s313 = ssub.s32 %s101, %s108
      %p314 = scmp.eq.s32.totalorder %s313, 0
      %s316 = sadd.s32 %s315, 1
      %s317 = scalar_select %p314, %s315, %s316
      %p320 = pneg %p314
      %p321 = scmp.eq.s32.totalorder %s101, 1
      %p322 = por %p320, %p321
      %p323 = scmp.ne.s32.totalorder %s315, %s318
      %p324 = scmp.eq.s32.totalorder %s101, 0
      %p325 = por %p323, %p324
      %p326 = scmp.ne.s32.totalorder %s315, %s318
      %p327 = scmp.eq.s32.totalorder %s106, 1
      %p328 = por %p326, %p327
      %p329 = scmp.ne.s32.totalorder %s318, %s319
      %p330 = scmp.eq.s32.totalorder %s106, 0
      %p331 = por %p329, %p330
      %p332 = scmp.ne.s32.totalorder %s318, %s319
      %p333 = scmp.eq.s32.totalorder %s107, 1
      %p334 = por %p332, %p333
      %p336 = scmp.ne.s32.totalorder %s319, %s335
      %p337 = scmp.eq.s32.totalorder %s107, 0
      %p338 = por %p336, %p337
      %s339 = ssub.s32 %s101, %s108
      %p340 = scmp.eq.s32.totalorder %s339, 0
      %s342 = sadd.s32 %s341, 1
      %s343 = scalar_select %p340, %s341, %s342
      %p346 = pneg %p340
      %p347 = scmp.eq.s32.totalorder %s101, 1
      %p348 = por %p346, %p347
      %p349 = scmp.ne.s32.totalorder %s341, %s344
      %p350 = scmp.eq.s32.totalorder %s101, 0
      %p351 = por %p349, %p350
      %p352 = scmp.ne.s32.totalorder %s341, %s344
      %p353 = scmp.eq.s32.totalorder %s106, 1
      %p354 = por %p352, %p353
      %p355 = scmp.ne.s32.totalorder %s344, %s345
      %p356 = scmp.eq.s32.totalorder %s106, 0
      %p357 = por %p355, %p356
      %p358 = scmp.ne.s32.totalorder %s344, %s345
      %p359 = scmp.eq.s32.totalorder %s107, 1
      %p360 = por %p358, %p359
      %p362 = scmp.ne.s32.totalorder %s345, %s361
      %p363 = scmp.eq.s32.totalorder %s107, 0
      %p364 = por %p362, %p363
      %s365 = ssub.s32 %s101, %s108
      %p366 = scmp.eq.s32.totalorder %s365, 0
      %s368 = sadd.s32 %s367, 1
      %s369 = scalar_select %p366, %s367, %s368
      %p372 = pneg %p366
      %p373 = scmp.eq.s32.totalorder %s101, 1
      %p374 = por %p372, %p373
      %p375 = scmp.ne.s32.totalorder %s367, %s370
      %p376 = scmp.eq.s32.totalorder %s101, 0
      %p377 = por %p375, %p376
      %p378 = scmp.ne.s32.totalorder %s367, %s370
      %p379 = scmp.eq.s32.totalorder %s106, 1
      %p380 = por %p378, %p379
      %p381 = scmp.ne.s32.totalorder %s370, %s371
      %p382 = scmp.eq.s32.totalorder %s106, 0
      %p383 = por %p381, %p382
      %p384 = scmp.ne.s32.totalorder %s370, %s371
      %p385 = scmp.eq.s32.totalorder %s107, 1
      %p386 = por %p384, %p385
      %p388 = scmp.ne.s32.totalorder %s371, %s387
      %p389 = scmp.eq.s32.totalorder %s107, 0
      %p390 = por %p388, %p389
      %s391 = ssub.s32 %s101, %s108
      %p392 = scmp.eq.s32.totalorder %s391, 0
      %s394 = sadd.s32 %s393, 1
      %s395 = scalar_select %p392, %s393, %s394
      %p398 = pneg %p392
      %p399 = scmp.eq.s32.totalorder %s101, 1
      %p400 = por %p398, %p399
      %p401 = scmp.ne.s32.totalorder %s393, %s396
      %p402 = scmp.eq.s32.totalorder %s101, 0
      %p403 = por %p401, %p402
      %p404 = scmp.ne.s32.totalorder %s393, %s396
      %p405 = scmp.eq.s32.totalorder %s106, 1
      %p406 = por %p404, %p405
      %p407 = scmp.ne.s32.totalorder %s396, %s397
      %p408 = scmp.eq.s32.totalorder %s106, 0
      %p409 = por %p407, %p408
      %p410 = scmp.ne.s32.totalorder %s396, %s397
      %p411 = scmp.eq.s32.totalorder %s107, 1
      %p412 = por %p410, %p411
      %p414 = scmp.ne.s32.totalorder %s397, %s413
      %p415 = scmp.eq.s32.totalorder %s107, 0
      %p416 = por %p414, %p415
      %s417 = ssub.s32 %s101, %s108
      %p418 = scmp.eq.s32.totalorder %s417, 0
      %s420 = sadd.s32 %s419, 1
      %s421 = scalar_select %p418, %s419, %s420
      %p424 = pneg %p418
      %p425 = scmp.eq.s32.totalorder %s101, 1
      %p426 = por %p424, %p425
      %p427 = scmp.ne.s32.totalorder %s419, %s422
      %p428 = scmp.eq.s32.totalorder %s101, 0
      %p429 = por %p427, %p428
      %p430 = scmp.ne.s32.totalorder %s419, %s422
      %p431 = scmp.eq.s32.totalorder %s106, 1
      %p432 = por %p430, %p431
      %p433 = scmp.ne.s32.totalorder %s422, %s423
      %p434 = scmp.eq.s32.totalorder %s106, 0
      %p435 = por %p433, %p434
      %p436 = scmp.ne.s32.totalorder %s422, %s423
      %p437 = scmp.eq.s32.totalorder %s107, 1
      %p438 = por %p436, %p437
      %p440 = scmp.ne.s32.totalorder %s423, %s439
      %p441 = scmp.eq.s32.totalorder %s107, 0
      %p442 = por %p440, %p441
      %s443 = ssub.s32 %s101, %s108
      %p444 = scmp.eq.s32.totalorder %s443, 0
      %s446 = sadd.s32 %s445, 1
      %s447 = scalar_select %p444, %s445, %s446
      %p450 = pneg %p444
      %p451 = scmp.eq.s32.totalorder %s101, 1
      %p452 = por %p450, %p451
      %p453 = scmp.ne.s32.totalorder %s445, %s448
      %p454 = scmp.eq.s32.totalorder %s101, 0
      %p455 = por %p453, %p454
      %p456 = scmp.ne.s32.totalorder %s445, %s448
      %p457 = scmp.eq.s32.totalorder %s106, 1
      %p458 = por %p456, %p457
      %p459 = scmp.ne.s32.totalorder %s448, %s449
      %p460 = scmp.eq.s32.totalorder %s106, 0
      %p461 = por %p459, %p460
      %p462 = scmp.ne.s32.totalorder %s448, %s449
      %p463 = scmp.eq.s32.totalorder %s107, 1
      %p464 = por %p462, %p463
      %p466 = scmp.ne.s32.totalorder %s449, %s465
      %p467 = scmp.eq.s32.totalorder %s107, 0
      %p468 = por %p466, %p467
      %s469 = ssub.s32 %s101, %s108
      %p470 = scmp.eq.s32.totalorder %s469, 0
      %s472 = sadd.s32 %s471, 1
      %s473 = scalar_select %p470, %s471, %s472
      %p476 = pneg %p470
      %p477 = scmp.eq.s32.totalorder %s101, 1
      %p478 = por %p476, %p477
      %p479 = scmp.ne.s32.totalorder %s471, %s474
      %p480 = scmp.eq.s32.totalorder %s101, 0
      %p481 = por %p479, %p480
      %p482 = scmp.ne.s32.totalorder %s471, %s474
      %p483 = scmp.eq.s32.totalorder %s106, 1
      %p484 = por %p482, %p483
      %p485 = scmp.ne.s32.totalorder %s474, %s475
      %p486 = scmp.eq.s32.totalorder %s106, 0
      %p487 = por %p485, %p486
      %p488 = scmp.ne.s32.totalorder %s474, %s475
      %p489 = scmp.eq.s32.totalorder %s107, 1
      %p490 = por %p488, %p489
      %p492 = scmp.ne.s32.totalorder %s475, %s491
      %p493 = scmp.eq.s32.totalorder %s107, 0
      %p494 = por %p492, %p493
      %s495 = ssub.s32 %s101, %s108
      %p496 = scmp.eq.s32.totalorder %s495, 0
      %s498 = sadd.s32 %s497, 1
      %s499 = scalar_select %p496, %s497, %s498
      %p502 = pneg %p496
      %p503 = scmp.eq.s32.totalorder %s101, 1
      %p504 = por %p502, %p503
      %p505 = scmp.ne.s32.totalorder %s497, %s500
      %p506 = scmp.eq.s32.totalorder %s101, 0
      %p507 = por %p505, %p506
      %p508 = scmp.ne.s32.totalorder %s497, %s500
      %p509 = scmp.eq.s32.totalorder %s106, 1
      %p510 = por %p508, %p509
      %p511 = scmp.ne.s32.totalorder %s500, %s501
      %p512 = scmp.eq.s32.totalorder %s106, 0
      %p513 = por %p511, %p512
      %p514 = scmp.ne.s32.totalorder %s500, %s501
      %p515 = scmp.eq.s32.totalorder %s107, 1
      %p516 = por %p514, %p515
      %p518 = scmp.ne.s32.totalorder %s501, %s517
      %p519 = scmp.eq.s32.totalorder %s107, 0
      %p520 = por %p518, %p519
      %s521 = ssub.s32 %s101, %s108
      %p522 = scmp.eq.s32.totalorder %s521, 0
      %s524 = sadd.s32 %s523, 1
      %s525 = scalar_select %p522, %s523, %s524
      %p528 = pneg %p522
      %p529 = scmp.eq.s32.totalorder %s101, 1
      %p530 = por %p528, %p529
      %p531 = scmp.ne.s32.totalorder %s523, %s526
      %p532 = scmp.eq.s32.totalorder %s101, 0
      %p533 = por %p531, %p532
      %p534 = scmp.ne.s32.totalorder %s523, %s526
      %p535 = scmp.eq.s32.totalorder %s106, 1
      %p536 = por %p534, %p535
      %p537 = scmp.ne.s32.totalorder %s526, %s527
      %p538 = scmp.eq.s32.totalorder %s106, 0
      %p539 = por %p537, %p538
      %p540 = scmp.ne.s32.totalorder %s526, %s527
      %p541 = scmp.eq.s32.totalorder %s107, 1
      %p542 = por %p540, %p541
      %p544 = scmp.ne.s32.totalorder %s527, %s543
      %p545 = scmp.eq.s32.totalorder %s107, 0
      %p546 = por %p544, %p545
      %s548 = sadd.s32 %s547, 1
      %p551 = scmp.eq.s32.totalorder %s101, 1
      %p552 = scmp.ne.s32.totalorder %s547, %s549
      %p553 = scmp.eq.s32.totalorder %s101, 0
      %p554 = por %p552, %p553
      %p555 = scmp.ne.s32.totalorder %s547, %s549
      %p556 = scmp.eq.s32.totalorder %s106, 1
      %p557 = por %p555, %p556
      %p558 = scmp.ne.s32.totalorder %s549, %s550
      %p559 = scmp.eq.s32.totalorder %s106, 0
      %p560 = por %p558, %p559
      %p561 = scmp.ne.s32.totalorder %s549, %s550
      %p562 = scmp.eq.s32.totalorder %s107, 1
      %p563 = por %p561, %p562
      %p565 = scmp.ne.s32.totalorder %s550, %s564
      %p566 = scmp.eq.s32.totalorder %s107, 0
      %p567 = por %p565, %p566
      %s569 = sadd.s32 %s568, 1
      %p572 = scmp.eq.s32.totalorder %s101, 1
      %p573 = scmp.ne.s32.totalorder %s568, %s570
      %p574 = scmp.eq.s32.totalorder %s101, 0
      %p575 = por %p573, %p574
      %p576 = scmp.ne.s32.totalorder %s568, %s570
      %p577 = scmp.eq.s32.totalorder %s106, 1
      %p578 = por %p576, %p577
      %p579 = scmp.ne.s32.totalorder %s570, %s571
      %p580 = scmp.eq.s32.totalorder %s106, 0
      %p581 = por %p579, %p580
      %p582 = scmp.ne.s32.totalorder %s570, %s571
      %p583 = scmp.eq.s32.totalorder %s107, 1
      %p584 = por %p582, %p583
      %p586 = scmp.ne.s32.totalorder %s571, %s585
      %p587 = scmp.eq.s32.totalorder %s107, 0
      %p588 = por %p586, %p587
      %s590 = sadd.s32 %s589, 1
      %p593 = scmp.eq.s32.totalorder %s101, 1
      %p594 = scmp.ne.s32.totalorder %s589, %s591
      %p595 = scmp.eq.s32.totalorder %s101, 0
      %p596 = por %p594, %p595
      %p597 = scmp.ne.s32.totalorder %s589, %s591
      %p598 = scmp.eq.s32.totalorder %s106, 1
      %p599 = por %p597, %p598
      %p600 = scmp.ne.s32.totalorder %s591, %s592
      %p601 = scmp.eq.s32.totalorder %s106, 0
      %p602 = por %p600, %p601
      %p603 = scmp.ne.s32.totalorder %s591, %s592
      %p604 = scmp.eq.s32.totalorder %s107, 1
      %p605 = por %p603, %p604
      %p607 = scmp.ne.s32.totalorder %s592, %s606
      %p608 = scmp.eq.s32.totalorder %s107, 0
      %p609 = por %p607, %p608
      %s611 = sadd.s32 %s610, 1
      %p614 = scmp.eq.s32.totalorder %s101, 1
      %p615 = scmp.ne.s32.totalorder %s610, %s612
      %p616 = scmp.eq.s32.totalorder %s101, 0
      %p617 = por %p615, %p616
      %p618 = scmp.ne.s32.totalorder %s610, %s612
      %p619 = scmp.eq.s32.totalorder %s106, 1
      %p620 = por %p618, %p619
      %p621 = scmp.ne.s32.totalorder %s612, %s613
      %p622 = scmp.eq.s32.totalorder %s106, 0
      %p623 = por %p621, %p622
      %p624 = scmp.ne.s32.totalorder %s612, %s613
      %p625 = scmp.eq.s32.totalorder %s107, 1
      %p626 = por %p624, %p625
      %p628 = scmp.ne.s32.totalorder %s613, %s627
      %p629 = scmp.eq.s32.totalorder %s107, 0
      %p630 = por %p628, %p629
      %s632 = sadd.s32 %s631, 1
      %p635 = scmp.eq.s32.totalorder %s101, 1
      %p636 = scmp.ne.s32.totalorder %s631, %s633
      %p637 = scmp.eq.s32.totalorder %s101, 0
      %p638 = por %p636, %p637
      %p639 = scmp.ne.s32.totalorder %s631, %s633
      %p640 = scmp.eq.s32.totalorder %s106, 1
      %p641 = por %p639, %p640
      %p642 = scmp.ne.s32.totalorder %s633, %s634
      %p643 = scmp.eq.s32.totalorder %s106, 0
      %p644 = por %p642, %p643
      %p645 = scmp.ne.s32.totalorder %s633, %s634
      %p646 = scmp.eq.s32.totalorder %s107, 1
      %p647 = por %p645, %p646
      %p649 = scmp.ne.s32.totalorder %s634, %s648
      %p650 = scmp.eq.s32.totalorder %s107, 0
      %p651 = por %p649, %p650
      %s653 = sadd.s32 %s652, 1
      %p656 = scmp.eq.s32.totalorder %s101, 1
      %p657 = scmp.ne.s32.totalorder %s652, %s654
      %p658 = scmp.eq.s32.totalorder %s101, 0
      %p659 = por %p657, %p658
      %p660 = scmp.ne.s32.totalorder %s652, %s654
      %p661 = scmp.eq.s32.totalorder %s106, 1
      %p662 = por %p660, %p661
      %p663 = scmp.ne.s32.totalorder %s654, %s655
      %p664 = scmp.eq.s32.totalorder %s106, 0
      %p665 = por %p663, %p664
      %p666 = scmp.ne.s32.totalorder %s654, %s655
      %p667 = scmp.eq.s32.totalorder %s107, 1
      %p668 = por %p666, %p667
      %p670 = scmp.ne.s32.totalorder %s655, %s669
      %p671 = scmp.eq.s32.totalorder %s107, 0
      %p672 = por %p670, %p671
      %s674 = sadd.s32 %s673, 1
      %p677 = scmp.eq.s32.totalorder %s101, 1
      %p678 = scmp.ne.s32.totalorder %s673, %s675
      %p679 = scmp.eq.s32.totalorder %s101, 0
      %p680 = por %p678, %p679
      %p681 = scmp.ne.s32.totalorder %s673, %s675
      %p682 = scmp.eq.s32.totalorder %s106, 1
      %p683 = por %p681, %p682
      %p684 = scmp.ne.s32.totalorder %s675, %s676
      %p685 = scmp.eq.s32.totalorder %s106, 0
      %p686 = por %p684, %p685
      %p687 = scmp.ne.s32.totalorder %s675, %s676
      %p688 = scmp.eq.s32.totalorder %s107, 1
      %p689 = por %p687, %p688
      %p691 = scmp.ne.s32.totalorder %s676, %s690
      %p692 = scmp.eq.s32.totalorder %s107, 0
      %p693 = por %p691, %p692
      %s695 = sadd.s32 %s694, 1
      %p698 = scmp.eq.s32.totalorder %s101, 1
      %p699 = scmp.ne.s32.totalorder %s694, %s696
      %p700 = scmp.eq.s32.totalorder %s101, 0
      %p701 = por %p699, %p700
      %p702 = scmp.ne.s32.totalorder %s694, %s696
      %p703 = scmp.eq.s32.totalorder %s106, 1
      %p704 = por %p702, %p703
      %p705 = scmp.ne.s32.totalorder %s696, %s697
      %p706 = scmp.eq.s32.totalorder %s106, 0
      %p707 = por %p705, %p706
      %p708 = scmp.ne.s32.totalorder %s696, %s697
      %p709 = scmp.eq.s32.totalorder %s107, 1
      %p710 = por %p708, %p709
      %p712 = scmp.ne.s32.totalorder %s697, %s711
      %p713 = scmp.eq.s32.totalorder %s107, 0
      %p714 = por %p712, %p713
      %s716 = sadd.s32 %s715, 1
      %p719 = scmp.eq.s32.totalorder %s101, 1
      %p720 = scmp.ne.s32.totalorder %s715, %s717
      %p721 = scmp.eq.s32.totalorder %s101, 0
      %p722 = por %p720, %p721
      %p723 = scmp.ne.s32.totalorder %s715, %s717
      %p724 = scmp.eq.s32.totalorder %s106, 1
      %p725 = por %p723, %p724
      %p726 = scmp.ne.s32.totalorder %s717, %s718
      %p727 = scmp.eq.s32.totalorder %s106, 0
      %p728 = por %p726, %p727
      %p729 = scmp.ne.s32.totalorder %s717, %s718
      %p730 = scmp.eq.s32.totalorder %s107, 1
      %p731 = por %p729, %p730
      %p733 = scmp.ne.s32.totalorder %s718, %s732
      %p734 = scmp.eq.s32.totalorder %s107, 0
      %p735 = por %p733, %p734
      %s737 = sadd.s32 %s736, 1
      %p740 = scmp.eq.s32.totalorder %s101, 1
      %p741 = scmp.ne.s32.totalorder %s736, %s738
      %p742 = scmp.eq.s32.totalorder %s101, 0
      %p743 = por %p741, %p742
      %p744 = scmp.ne.s32.totalorder %s736, %s738
      %p745 = scmp.eq.s32.totalorder %s106, 1
      %p746 = por %p744, %p745
      %p747 = scmp.ne.s32.totalorder %s738, %s739
      %p748 = scmp.eq.s32.totalorder %s106, 0
      %p749 = por %p747, %p748
      %p750 = scmp.ne.s32.totalorder %s738, %s739
      %p751 = scmp.eq.s32.totalorder %s107, 1
      %p752 = por %p750, %p751
      %p754 = scmp.ne.s32.totalorder %s739, %s753
      %p755 = scmp.eq.s32.totalorder %s107, 0
      %p756 = por %p754, %p755
      %s758 = sadd.s32 %s757, 1
      %p761 = scmp.eq.s32.totalorder %s101, 1
      %p762 = scmp.ne.s32.totalorder %s757, %s759
      %p763 = scmp.eq.s32.totalorder %s101, 0
      %p764 = por %p762, %p763
      %p765 = scmp.ne.s32.totalorder %s757, %s759
      %p766 = scmp.eq.s32.totalorder %s106, 1
      %p767 = por %p765, %p766
      %p768 = scmp.ne.s32.totalorder %s759, %s760
      %p769 = scmp.eq.s32.totalorder %s106, 0
      %p770 = por %p768, %p769
      %p771 = scmp.ne.s32.totalorder %s759, %s760
      %p772 = scmp.eq.s32.totalorder %s107, 1
      %p773 = por %p771, %p772
      %p775 = scmp.ne.s32.totalorder %s760, %s774
      %p776 = scmp.eq.s32.totalorder %s107, 0
      %p777 = por %p775, %p776
      %s779 = sadd.s32 %s778, 1
      %p782 = scmp.eq.s32.totalorder %s101, 1
      %p783 = scmp.ne.s32.totalorder %s778, %s780
      %p784 = scmp.eq.s32.totalorder %s101, 0
      %p785 = por %p783, %p784
      %p786 = scmp.ne.s32.totalorder %s778, %s780
      %p787 = scmp.eq.s32.totalorder %s106, 1
      %p788 = por %p786, %p787
      %p789 = scmp.ne.s32.totalorder %s780, %s781
      %p790 = scmp.eq.s32.totalorder %s106, 0
      %p791 = por %p789, %p790
      %p792 = scmp.ne.s32.totalorder %s780, %s781
      %p793 = scmp.eq.s32.totalorder %s107, 1
      %p794 = por %p792, %p793
      %p796 = scmp.ne.s32.totalorder %s781, %s795
      %p797 = scmp.eq.s32.totalorder %s107, 0
      %p798 = por %p796, %p797
      %s800 = sadd.s32 %s799, 1
      %p803 = scmp.eq.s32.totalorder %s101, 1
      %p804 = scmp.ne.s32.totalorder %s799, %s801
      %p805 = scmp.eq.s32.totalorder %s101, 0
      %p806 = por %p804, %p805
      %p807 = scmp.ne.s32.totalorder %s799, %s801
      %p808 = scmp.eq.s32.totalorder %s106, 1
      %p809 = por %p807, %p808
      %p810 = scmp.ne.s32.totalorder %s801, %s802
      %p811 = scmp.eq.s32.totalorder %s106, 0
      %p812 = por %p810, %p811
      %p813 = scmp.ne.s32.totalorder %s801, %s802
      %p814 = scmp.eq.s32.totalorder %s107, 1
      %p815 = por %p813, %p814
      %p817 = scmp.ne.s32.totalorder %s802, %s816
      %p818 = scmp.eq.s32.totalorder %s107, 0
      %p819 = por %p817, %p818
      %s821 = sadd.s32 %s820, 1
      %p824 = scmp.eq.s32.totalorder %s101, 1
      %p825 = scmp.ne.s32.totalorder %s820, %s822
      %p826 = scmp.eq.s32.totalorder %s101, 0
      %p827 = por %p825, %p826
      %p828 = scmp.ne.s32.totalorder %s820, %s822
      %p829 = scmp.eq.s32.totalorder %s106, 1
      %p830 = por %p828, %p829
      %p831 = scmp.ne.s32.totalorder %s822, %s823
      %p832 = scmp.eq.s32.totalorder %s106, 0
      %p833 = por %p831, %p832
      %p834 = scmp.ne.s32.totalorder %s822, %s823
      %p835 = scmp.eq.s32.totalorder %s107, 1
      %p836 = por %p834, %p835
      %p838 = scmp.ne.s32.totalorder %s823, %s837
      %p839 = scmp.eq.s32.totalorder %s107, 0
      %p840 = por %p838, %p839
      %s842 = sadd.s32 %s841, 1
      %p845 = scmp.eq.s32.totalorder %s101, 1
      %p846 = scmp.ne.s32.totalorder %s841, %s843
      %p847 = scmp.eq.s32.totalorder %s101, 0
      %p848 = por %p846, %p847
      %p849 = scmp.ne.s32.totalorder %s841, %s843
      %p850 = scmp.eq.s32.totalorder %s106, 1
      %p851 = por %p849, %p850
      %p852 = scmp.ne.s32.totalorder %s843, %s844
      %p853 = scmp.eq.s32.totalorder %s106, 0
      %p854 = por %p852, %p853
      %p855 = scmp.ne.s32.totalorder %s843, %s844
      %p856 = scmp.eq.s32.totalorder %s107, 1
      %p857 = por %p855, %p856
      %p859 = scmp.ne.s32.totalorder %s844, %s858
      %p860 = scmp.eq.s32.totalorder %s107, 0
      %p861 = por %p859, %p860
      %s863 = sadd.s32 %s862, 1
      %p866 = scmp.eq.s32.totalorder %s101, 1
      %p867 = scmp.ne.s32.totalorder %s862, %s864
      %p868 = scmp.eq.s32.totalorder %s101, 0
      %p869 = por %p867, %p868
      %p870 = scmp.ne.s32.totalorder %s862, %s864
      %p871 = scmp.eq.s32.totalorder %s106, 1
      %p872 = por %p870, %p871
      %p873 = scmp.ne.s32.totalorder %s864, %s865
      %p874 = scmp.eq.s32.totalorder %s106, 0
      %p875 = por %p873, %p874
      %p876 = scmp.ne.s32.totalorder %s864, %s865
      %p877 = scmp.eq.s32.totalorder %s107, 1
      %p878 = por %p876, %p877
      %p880 = scmp.ne.s32.totalorder %s865, %s879
      %p881 = scmp.eq.s32.totalorder %s107, 0
      %p882 = por %p880, %p881
      %p883 = scmp.le.s32.totalorder 1, %s101
      %p884 = scmp.lt.s32.totalorder %s101, 3
      %p885 = pnand %p883, %p884
      %p886 = pneg %p885
      // Predicated region
      $region9: #{tpu_custom_call.1} parent=5 // pred_check
        _
      $region10: #{tpu_custom_call.1} parent=5 // pred_check_branch
        %888 = sbr.rel (%p885) target = $region12
      $region11: #{tpu_custom_call.1} parent=5 // pred_region
        %s889 = ssub.s32 %s101, 1
        // Predicated region
        $region13: #{tpu_custom_call.1} parent=11 // pred_check
          %p890 = pneg %p122
        $region14: #{tpu_custom_call.1} parent=11 // pred_check_branch
          %892 = sbr.rel (%p890) target = $region16
        $region15: #{tpu_custom_call.1} parent=11 // pred_region
          %s894 = ssub.s32 256, 256
          %895 = vsyncadd [#allocation4], %s894
          %s896 = sshll.u32 [#allocation3], 4
          %s897 = int_to_ptr.vmem [resolvable:$true] %s896
          %902 = dma.hbm_to_vmem [thread:$0]  %s1, 256, %s897, [#allocation4], 128, 128, 8
        $region16: #{tpu_custom_call.1} parent=11 // pred_fallthru
          _
        // Predicated region
        $region17: #{tpu_custom_call.1} parent=11 // pred_check
          %p903 = pneg %p143
        $region18: #{tpu_custom_call.1} parent=11 // pred_check_branch
          %905 = sbr.rel (%p903) target = $region20
        $region19: #{tpu_custom_call.1} parent=11 // pred_region
          %s907 = ssub.s32 128, 128
          %908 = vsyncadd [#allocation7], %s907
          %s909 = sshll.u32 [#allocation6], 4
          %s910 = int_to_ptr.vmem [resolvable:$true] %s909
          %915 = dma.hbm_to_vmem [thread:$0]  %s3, 128, %s910, [#allocation7], 64, 64, 4
        $region20: #{tpu_custom_call.1} parent=11 // pred_fallthru
          _
        // Predicated region
        $region21: #{tpu_custom_call.1} parent=11 // pred_check
          %p916 = pneg %p164
        $region22: #{tpu_custom_call.1} parent=11 // pred_check_branch
          %918 = sbr.rel (%p916) target = $region24
        $region23: #{tpu_custom_call.1} parent=11 // pred_region
          _
        $region24: #{tpu_custom_call.1} parent=11 // pred_fallthru
          _
        // Predicated region
        $region25: #{tpu_custom_call.1} parent=11 // pred_check
          %p919 = pneg %p185
        $region26: #{tpu_custom_call.1} parent=11 // pred_check_branch
          %921 = sbr.rel (%p919) target = $region28
        $region27: #{tpu_custom_call.1} parent=11 // pred_region
          _
        $region28: #{tpu_custom_call.1} parent=11 // pred_fallthru
          _
        // Predicated region
        $region29: #{tpu_custom_call.1} parent=11 // pred_check
          %p922 = pneg %p206
        $region30: #{tpu_custom_call.1} parent=11 // pred_check_branch
          %924 = sbr.rel (%p922) target = $region32
        $region31: #{tpu_custom_call.1} parent=11 // pred_region
          _
        $region32: #{tpu_custom_call.1} parent=11 // pred_fallthru
          _
        // Predicated region
        $region33: #{tpu_custom_call.1} parent=11 // pred_check
          %p925 = pneg %p227
        $region34: #{tpu_custom_call.1} parent=11 // pred_check_branch
          %927 = sbr.rel (%p925) target = $region36
        $region35: #{tpu_custom_call.1} parent=11 // pred_region
          %s929 = ssub.s32 16, 16
          %930 = vsyncadd [#allocation7], %s929
          %s932 = sshll.u32 [#allocation8], 4
          %s933 = int_to_ptr.vmem [resolvable:$true] %s932
          %935 = dma.hbm_to_vmem [thread:$0]  %s11, 16, %s933, [#allocation7]
        $region36: #{tpu_custom_call.1} parent=11 // pred_fallthru
          _
        // Predicated region
        $region37: #{tpu_custom_call.1} parent=11 // pred_check
          %p936 = pneg %p560
        $region38: #{tpu_custom_call.1} parent=11 // pred_check_branch
          %938 = sbr.rel (%p936) target = $region40
        $region39: #{tpu_custom_call.1} parent=11 // pred_region
          _
        $region40: #{tpu_custom_call.1} parent=11 // pred_fallthru
          _
        // Predicated region
        $region41: #{tpu_custom_call.1} parent=11 // pred_check
          %p939 = pneg %p581
        $region42: #{tpu_custom_call.1} parent=11 // pred_check_branch
          %941 = sbr.rel (%p939) target = $region44
        $region43: #{tpu_custom_call.1} parent=11 // pred_region
          %s943 = ssub.s32 16, 16
          %944 = vsyncadd [#allocation25], %s943
          %s946 = sshll.u32 [#allocation26], 4
          %s947 = int_to_ptr.vmem [resolvable:$true] %s946
          %949 = dma.hbm_to_vmem [thread:$0]  %s39, 16, %s947, [#allocation25]
        $region44: #{tpu_custom_call.1} parent=11 // pred_fallthru
          _
        // Predicated region
        $region45: #{tpu_custom_call.1} parent=11 // pred_check
          %p950 = pneg %p602
        $region46: #{tpu_custom_call.1} parent=11 // pred_check_branch
          %952 = sbr.rel (%p950) target = $region48
        $region47: #{tpu_custom_call.1} parent=11 // pred_region
          %s954 = ssub.s32 1024, 1024
          %955 = vsyncadd [#allocation28], %s954
          %s956 = sshll.u32 [#allocation27], 4
          %s957 = int_to_ptr.vmem [resolvable:$true] %s956
          %962 = dma.hbm_to_vmem [thread:$0]  %s41, 1024, %s957, [#allocation28], 64, 64, 4
        $region48: #{tpu_custom_call.1} parent=11 // pred_fallthru
          _
        // Predicated region
        $region49: #{tpu_custom_call.1} parent=11 // pred_check
          %p963 = pneg %p623
        $region50: #{tpu_custom_call.1} parent=11 // pred_check_branch
          %965 = sbr.rel (%p963) target = $region52
        $region51: #{tpu_custom_call.1} parent=11 // pred_region
          %s967 = ssub.s32 16, 16
          %968 = vsyncadd [#allocation28], %s967
          %s970 = sshll.u32 [#allocation29], 4
          %s971 = int_to_ptr.vmem [resolvable:$true] %s970
          %973 = dma.hbm_to_vmem [thread:$0]  %s43, 16, %s971, [#allocation28]
        $region52: #{tpu_custom_call.1} parent=11 // pred_fallthru
          _
        // Predicated region
        $region53: #{tpu_custom_call.1} parent=11 // pred_check
          %p974 = pneg %p644
        $region54: #{tpu_custom_call.1} parent=11 // pred_check_branch
          %976 = sbr.rel (%p974) target = $region56
        $region55: #{tpu_custom_call.1} parent=11 // pred_region
          %s978 = ssub.s32 1024, 1024
          %979 = vsyncadd [#allocation31], %s978
          %s980 = sshll.u32 [#allocation30], 4
          %s981 = int_to_ptr.vmem [resolvable:$true] %s980
          %986 = dma.hbm_to_vmem [thread:$0]  %s45, 1024, %s981, [#allocation31], 64, 64, 4
        $region56: #{tpu_custom_call.1} parent=11 // pred_fallthru
          _
        // Predicated region
        $region57: #{tpu_custom_call.1} parent=11 // pred_check
          %p987 = pneg %p665
        $region58: #{tpu_custom_call.1} parent=11 // pred_check_branch
          %989 = sbr.rel (%p987) target = $region60
        $region59: #{tpu_custom_call.1} parent=11 // pred_region
          %s991 = ssub.s32 16, 16
          %992 = vsyncadd [#allocation31], %s991
          %s994 = sshll.u32 [#allocation32], 4
          %s995 = int_to_ptr.vmem [resolvable:$true] %s994
          %997 = dma.hbm_to_vmem [thread:$0]  %s47, 16, %s995, [#allocation31]
        $region60: #{tpu_custom_call.1} parent=11 // pred_fallthru
          _
        // Predicated region
        $region61: #{tpu_custom_call.1} parent=11 // pred_check
          %p998 = pneg %p686
        $region62: #{tpu_custom_call.1} parent=11 // pred_check_branch
          %1000 = sbr.rel (%p998) target = $region64
        $region63: #{tpu_custom_call.1} parent=11 // pred_region
          %s1002 = ssub.s32 1024, 1024
          %1003 = vsyncadd [#allocation34], %s1002
          %s1004 = sshll.u32 [#allocation33], 4
          %s1005 = int_to_ptr.vmem [resolvable:$true] %s1004
          %1010 = dma.hbm_to_vmem [thread:$0]  %s49, 1024, %s1005, [#allocation34], 64, 64, 4
        $region64: #{tpu_custom_call.1} parent=11 // pred_fallthru
          _
        // Predicated region
        $region65: #{tpu_custom_call.1} parent=11 // pred_check
          %p1011 = pneg %p707
        $region66: #{tpu_custom_call.1} parent=11 // pred_check_branch
          %1013 = sbr.rel (%p1011) target = $region68
        $region67: #{tpu_custom_call.1} parent=11 // pred_region
          %s1015 = ssub.s32 16, 16
          %1016 = vsyncadd [#allocation34], %s1015
          %s1018 = sshll.u32 [#allocation35], 4
          %s1019 = int_to_ptr.vmem [resolvable:$true] %s1018
          %1021 = dma.hbm_to_vmem [thread:$0]  %s51, 16, %s1019, [#allocation34]
        $region68: #{tpu_custom_call.1} parent=11 // pred_fallthru
          _
        // Predicated region
        $region69: #{tpu_custom_call.1} parent=11 // pred_check
          %p1022 = pneg %p728
        $region70: #{tpu_custom_call.1} parent=11 // pred_check_branch
          %1024 = sbr.rel (%p1022) target = $region72
        $region71: #{tpu_custom_call.1} parent=11 // pred_region
          %s1026 = ssub.s32 1024, 1024
          %1027 = vsyncadd [#allocation37], %s1026
          %s1028 = sshll.u32 [#allocation36], 4
          %s1029 = int_to_ptr.vmem [resolvable:$true] %s1028
          %1034 = dma.hbm_to_vmem [thread:$0]  %s53, 1024, %s1029, [#allocation37], 64, 64, 4
        $region72: #{tpu_custom_call.1} parent=11 // pred_fallthru
          _
        // Predicated region
        $region73: #{tpu_custom_call.1} parent=11 // pred_check
          %p1035 = pneg %p749
        $region74: #{tpu_custom_call.1} parent=11 // pred_check_branch
          %1037 = sbr.rel (%p1035) target = $region76
        $region75: #{tpu_custom_call.1} parent=11 // pred_region
          %s1039 = ssub.s32 16, 16
          %1040 = vsyncadd [#allocation37], %s1039
          %s1042 = sshll.u32 [#allocation38], 4
          %s1043 = int_to_ptr.vmem [resolvable:$true] %s1042
          %1045 = dma.hbm_to_vmem [thread:$0]  %s55, 16, %s1043, [#allocation37]
        $region76: #{tpu_custom_call.1} parent=11 // pred_fallthru
          _
        // Predicated region
        $region77: #{tpu_custom_call.1} parent=11 // pred_check
          %p1046 = pneg %p770
        $region78: #{tpu_custom_call.1} parent=11 // pred_check_branch
          %1048 = sbr.rel (%p1046) target = $region80
        $region79: #{tpu_custom_call.1} parent=11 // pred_region
          %s1050 = ssub.s32 16, 16
          %1051 = vsyncadd [#allocation40], %s1050
          %s1053 = sshll.u32 [#allocation39], 4
          %s1054 = int_to_ptr.vmem [resolvable:$true] %s1053
          %1056 = dma.hbm_to_vmem [thread:$0]  %s57, 16, %s1054, [#allocation40]
        $region80: #{tpu_custom_call.1} parent=11 // pred_fallthru
          _
        // Predicated region
        $region81: #{tpu_custom_call.1} parent=11 // pred_check
          %p1057 = pneg %p791
        $region82: #{tpu_custom_call.1} parent=11 // pred_check_branch
          %1059 = sbr.rel (%p1057) target = $region84
        $region83: #{tpu_custom_call.1} parent=11 // pred_region
          _
        $region84: #{tpu_custom_call.1} parent=11 // pred_fallthru
          _
        // Predicated region
        $region85: #{tpu_custom_call.1} parent=11 // pred_check
          %p1060 = pneg %p812
        $region86: #{tpu_custom_call.1} parent=11 // pred_check_branch
          %1062 = sbr.rel (%p1060) target = $region88
        $region87: #{tpu_custom_call.1} parent=11 // pred_region
          _
        $region88: #{tpu_custom_call.1} parent=11 // pred_fallthru
          _
      $region12: #{tpu_custom_call.1} parent=5 // pred_fallthru
        _
      %p1063 = scmp.lt.s32.totalorder %s101, 2
      // Predicated region
      $region89: #{tpu_custom_call.1} parent=5 // pred_check
        %p1064 = pneg %p1063
      $region90: #{tpu_custom_call.1} parent=5 // pred_check_branch
        %1066 = sbr.rel (%p1064) target = $region92
      $region91: #{tpu_custom_call.1} parent=5 // pred_region
        // Predicated region
        $region93: #{tpu_custom_call.1} parent=91 // pred_check
          %p1067 = pneg %p247
        $region94: #{tpu_custom_call.1} parent=91 // pred_check_branch
          %1069 = sbr.rel (%p1067) target = $region96
        $region95: #{tpu_custom_call.1} parent=91 // pred_region
          %s1070 = sand.u32 %s101, 1
          %s1071 = scalar_lea.sflag [#allocation10], %s1070
          %s1072 = sand.u32 %s237, 1
          %s1073 = smul.addr %s1072, 384
          %s1074 = scalar_lea.vmem [#allocation9], %s1073
          %s1076 = ssub.s32 6144, 6144
          %1077 = vsyncadd %s1071, %s1076
          %s1078 = smul.addr %s101, 96
          %s1079 = smul.addr %s1078, 64
          %s1080 = scalar_lea.hbm %s13, %s1079
          %s1081 = sshll.u32 %s1074, 4
          %s1082 = int_to_ptr.vmem [resolvable:$true] %s1081
          %1087 = dma.hbm_to_vmem [thread:$0]  %s1080, 6144, %s1082, %s1071, 384, 384, 24
        $region96: #{tpu_custom_call.1} parent=91 // pred_fallthru
          _
        // Predicated region
        $region97: #{tpu_custom_call.1} parent=91 // pred_check
          %p1088 = pneg %p273
        $region98: #{tpu_custom_call.1} parent=91 // pred_check_branch
          %1090 = sbr.rel (%p1088) target = $region100
        $region99: #{tpu_custom_call.1} parent=91 // pred_region
          %s1091 = sand.u32 %s101, 1
          %s1092 = scalar_lea.sflag [#allocation10], %s1091
          %s1093 = sand.u32 %s263, 1
          %s1094 = smul.addr %s1093, 6
          %s1095 = scalar_lea.vmem [#allocation11], %s1094
          %s1097 = ssub.s32 96, 96
          %1098 = vsyncadd %s1092, %s1097
          %s1099 = smul.addr %s101, 6
          %s1100 = smul.addr %s1099, 16
          %s1101 = scalar_lea.hbm %s15, %s1100
          %s1103 = sshll.u32 %s1095, 4
          %s1104 = int_to_ptr.vmem [resolvable:$true] %s1103
          %1106 = dma.hbm_to_vmem [thread:$0]  %s1101, 96, %s1104, %s1092
        $region100: #{tpu_custom_call.1} parent=91 // pred_fallthru
          _
        // Predicated region
        $region101: #{tpu_custom_call.1} parent=91 // pred_check
          %p1107 = pneg %p299
        $region102: #{tpu_custom_call.1} parent=91 // pred_check_branch
          %1109 = sbr.rel (%p1107) target = $region104
        $region103: #{tpu_custom_call.1} parent=91 // pred_region
          %s1110 = sand.u32 %s101, 1
          %s1111 = scalar_lea.sflag [#allocation13], %s1110
          %s1112 = sand.u32 %s289, 1
          %s1113 = smul.addr %s1112, 128
          %s1114 = scalar_lea.vmem [#allocation12], %s1113
          %s1116 = ssub.s32 2048, 2048
          %1117 = vsyncadd %s1111, %s1116
          %s1118 = smul.addr %s101, 32
          %s1119 = smul.addr %s1118, 64
          %s1120 = scalar_lea.hbm %s17, %s1119
          %s1121 = sshll.u32 %s1114, 4
          %s1122 = int_to_ptr.vmem [resolvable:$true] %s1121
          %1127 = dma.hbm_to_vmem [thread:$0]  %s1120, 2048, %s1122, %s1111, 64, 64, 4
        $region104: #{tpu_custom_call.1} parent=91 // pred_fallthru
          _
        // Predicated region
        $region105: #{tpu_custom_call.1} parent=91 // pred_check
          %p1128 = pneg %p325
        $region106: #{tpu_custom_call.1} parent=91 // pred_check_branch
          %1130 = sbr.rel (%p1128) target = $region108
        $region107: #{tpu_custom_call.1} parent=91 // pred_region
          %p1131 = scmp.lt.s32.totalorder %s101, 1
          %s1132 = scalar_select %p1131, %s101, 1
          %s1133 = scalar_lea.vmem %s19, %s1132
        $region108: #{tpu_custom_call.1} parent=91 // pred_fallthru
          _
        // Predicated region
        $region109: #{tpu_custom_call.1} parent=91 // pred_check
          %p1134 = pneg %p351
        $region110: #{tpu_custom_call.1} parent=91 // pred_check_branch
          %1136 = sbr.rel (%p1134) target = $region112
        $region111: #{tpu_custom_call.1} parent=91 // pred_region
          %s1137 = sand.u32 %s101, 1
          %s1138 = scalar_lea.sflag [#allocation13], %s1137
          %s1139 = sand.u32 %s341, 1
          %s1140 = scalar_lea.vmem [#allocation14], %s1139
          %s1142 = ssub.s32 16, 16
          %1143 = vsyncadd %s1138, %s1142
          %s1144 = smul.addr %s101, 16
          %s1145 = scalar_lea.hbm %s21, %s1144
          %s1147 = sshll.u32 %s1140, 4
          %s1148 = int_to_ptr.vmem [resolvable:$true] %s1147
          %1150 = dma.hbm_to_vmem [thread:$0]  %s1145, 16, %s1148, %s1138
        $region112: #{tpu_custom_call.1} parent=91 // pred_fallthru
          _
        // Predicated region
        $region113: #{tpu_custom_call.1} parent=91 // pred_check
          %p1151 = pneg %p377
        $region114: #{tpu_custom_call.1} parent=91 // pred_check_branch
          %1153 = sbr.rel (%p1151) target = $region116
        $region115: #{tpu_custom_call.1} parent=91 // pred_region
          %s1154 = sand.u32 %s101, 1
          %s1155 = scalar_lea.sflag [#allocation16], %s1154
          %s1156 = sand.u32 %s367, 1
          %s1157 = scalar_lea.vmem [#allocation15], %s1156
          %s1159 = ssub.s32 16, 16
          %1160 = vsyncadd %s1155, %s1159
          %s1161 = smul.addr %s101, 16
          %s1162 = scalar_lea.hbm %s23, %s1161
          %s1164 = sshll.u32 %s1157, 4
          %s1165 = int_to_ptr.vmem [resolvable:$true] %s1164
          %1167 = dma.hbm_to_vmem [thread:$0]  %s1162, 16, %s1165, %s1155
        $region116: #{tpu_custom_call.1} parent=91 // pred_fallthru
          _
        // Predicated region
        $region117: #{tpu_custom_call.1} parent=91 // pred_check
          %p1168 = pneg %p403
        $region118: #{tpu_custom_call.1} parent=91 // pred_check_branch
          %1170 = sbr.rel (%p1168) target = $region120
        $region119: #{tpu_custom_call.1} parent=91 // pred_region
          %s1171 = sand.u32 %s101, 1
          %s1172 = scalar_lea.sflag [#allocation16], %s1171
          %s1173 = sand.u32 %s393, 1
          %s1174 = smul.addr %s1173, 256
          %s1175 = scalar_lea.vmem [#allocation17], %s1174
          %s1177 = ssub.s32 4096, 4096
          %1178 = vsyncadd %s1172, %s1177
          %s1179 = smul.addr %s101, 64
          %s1180 = smul.addr %s1179, 64
          %s1181 = scalar_lea.hbm %s25, %s1180
          %s1182 = sshll.u32 %s1175, 4
          %s1183 = int_to_ptr.vmem [resolvable:$true] %s1182
          %1188 = dma.hbm_to_vmem [thread:$0]  %s1181, 4096, %s1183, %s1172, 256, 256, 16
        $region120: #{tpu_custom_call.1} parent=91 // pred_fallthru
          _
        // Predicated region
        $region121: #{tpu_custom_call.1} parent=91 // pred_check
          %p1189 = pneg %p429
        $region122: #{tpu_custom_call.1} parent=91 // pred_check_branch
          %1191 = sbr.rel (%p1189) target = $region124
        $region123: #{tpu_custom_call.1} parent=91 // pred_region
          %s1192 = sand.u32 %s101, 1
          %s1193 = scalar_lea.sflag [#allocation19], %s1192
          %s1194 = sand.u32 %s419, 1
          %s1195 = smul.addr %s1194, 4
          %s1196 = scalar_lea.vmem [#allocation18], %s1195
          %s1198 = ssub.s32 64, 64
          %1199 = vsyncadd %s1193, %s1198
          %s1200 = smul.addr %s101, 4
          %s1201 = smul.addr %s1200, 16
          %s1202 = scalar_lea.hbm %s27, %s1201
          %s1204 = sshll.u32 %s1196, 4
          %s1205 = int_to_ptr.vmem [resolvable:$true] %s1204
          %1207 = dma.hbm_to_vmem [thread:$0]  %s1202, 64, %s1205, %s1193
        $region124: #{tpu_custom_call.1} parent=91 // pred_fallthru
          _
        // Predicated region
        $region125: #{tpu_custom_call.1} parent=91 // pred_check
          %p1208 = pneg %p455
        $region126: #{tpu_custom_call.1} parent=91 // pred_check_branch
          %1210 = sbr.rel (%p1208) target = $region128
        $region127: #{tpu_custom_call.1} parent=91 // pred_region
          %s1211 = sand.u32 %s101, 1
          %s1212 = scalar_lea.sflag [#allocation19], %s1211
          %s1213 = sand.u32 %s445, 1
          %s1214 = smul.addr %s1213, 256
          %s1215 = scalar_lea.vmem [#allocation20], %s1214
          %s1217 = ssub.s32 4096, 4096
          %1218 = vsyncadd %s1212, %s1217
          %s1219 = smul.addr %s101, 64
          %s1220 = smul.addr %s1219, 64
          %s1221 = scalar_lea.hbm %s29, %s1220
          %s1222 = sshll.u32 %s1215, 4
          %s1223 = int_to_ptr.vmem [resolvable:$true] %s1222
          %1228 = dma.hbm_to_vmem [thread:$0]  %s1221, 4096, %s1223, %s1212, 64, 64, 4
        $region128: #{tpu_custom_call.1} parent=91 // pred_fallthru
          _
        // Predicated region
        $region129: #{tpu_custom_call.1} parent=91 // pred_check
          %p1229 = pneg %p481
        $region130: #{tpu_custom_call.1} parent=91 // pred_check_branch
          %1231 = sbr.rel (%p1229) target = $region132
        $region131: #{tpu_custom_call.1} parent=91 // pred_region
          %s1232 = sand.u32 %s101, 1
          %s1233 = scalar_lea.sflag [#allocation22], %s1232
          %s1234 = sand.u32 %s471, 1
          %s1235 = scalar_lea.vmem [#allocation21], %s1234
          %s1237 = ssub.s32 16, 16
          %1238 = vsyncadd %s1233, %s1237
          %s1239 = smul.addr %s101, 16
          %s1240 = scalar_lea.hbm %s31, %s1239
          %s1242 = sshll.u32 %s1235, 4
          %s1243 = int_to_ptr.vmem [resolvable:$true] %s1242
          %1245 = dma.hbm_to_vmem [thread:$0]  %s1240, 16, %s1243, %s1233
        $region132: #{tpu_custom_call.1} parent=91 // pred_fallthru
          _
        // Predicated region
        $region133: #{tpu_custom_call.1} parent=91 // pred_check
          %p1246 = pneg %p507
        $region134: #{tpu_custom_call.1} parent=91 // pred_check_branch
          %1248 = sbr.rel (%p1246) target = $region136
        $region135: #{tpu_custom_call.1} parent=91 // pred_region
          %s1249 = sand.u32 %s101, 1
          %s1250 = scalar_lea.sflag [#allocation22], %s1249
          %s1251 = sand.u32 %s497, 1
          %s1252 = scalar_lea.vmem [#allocation23], %s1251
          %s1254 = ssub.s32 16, 16
          %1255 = vsyncadd %s1250, %s1254
          %s1256 = smul.addr %s101, 16
          %s1257 = scalar_lea.hbm %s33, %s1256
          %s1259 = sshll.u32 %s1252, 4
          %s1260 = int_to_ptr.vmem [resolvable:$true] %s1259
          %1262 = dma.hbm_to_vmem [thread:$0]  %s1257, 16, %s1260, %s1250
        $region136: #{tpu_custom_call.1} parent=91 // pred_fallthru
          _
        // Predicated region
        $region137: #{tpu_custom_call.1} parent=91 // pred_check
          %p1263 = pneg %p533
        $region138: #{tpu_custom_call.1} parent=91 // pred_check_branch
          %1265 = sbr.rel (%p1263) target = $region140
        $region139: #{tpu_custom_call.1} parent=91 // pred_region
          %s1266 = sand.u32 %s101, 1
          %s1267 = scalar_lea.sflag [#allocation25], %s1266
          %s1268 = sand.u32 %s523, 1
          %s1269 = scalar_lea.vmem [#allocation24], %s1268
          %s1271 = ssub.s32 16, 16
          %1272 = vsyncadd %s1267, %s1271
          %s1273 = smul.addr %s101, 16
          %s1274 = scalar_lea.hbm %s35, %s1273
          %s1276 = sshll.u32 %s1269, 4
          %s1277 = int_to_ptr.vmem [resolvable:$true] %s1276
          %1279 = dma.hbm_to_vmem [thread:$0]  %s1274, 16, %s1277, %s1267
        $region140: #{tpu_custom_call.1} parent=91 // pred_fallthru
          _
      $region92: #{tpu_custom_call.1} parent=5 // pred_fallthru
        _
      %p1280 = scmp.le.s32.totalorder 1, %s101
      %p1281 = scmp.lt.s32.totalorder %s101, 3
      %p1282 = pnand %p1280, %p1281
      %p1283 = pneg %p1282
      // Predicated region
      $region141: #{tpu_custom_call.1} parent=5 // pred_check
        _
      $region142: #{tpu_custom_call.1} parent=5 // pred_check_branch
        %1285 = sbr.rel (%p1282) target = $region144
      $region143: #{tpu_custom_call.1} parent=5 // pred_region
        %s1286 = ssub.s32 %s101, 1
        // Predicated region
        $region145: #{tpu_custom_call.1} parent=143 // pred_check
          %p1287 = pneg %p122
        $region146: #{tpu_custom_call.1} parent=143 // pred_check_branch
          %1289 = sbr.rel (%p1287) target = $region148
        $region147: #{tpu_custom_call.1} parent=143 // pred_region
          %1290 = dma.done [#allocation4], 256
        $region148: #{tpu_custom_call.1} parent=143 // pred_fallthru
          _
        // Predicated region
        $region149: #{tpu_custom_call.1} parent=143 // pred_check
          %p1291 = pneg %p143
        $region150: #{tpu_custom_call.1} parent=143 // pred_check_branch
          %1293 = sbr.rel (%p1291) target = $region152
        $region151: #{tpu_custom_call.1} parent=143 // pred_region
          %1294 = dma.done [#allocation7], 128
        $region152: #{tpu_custom_call.1} parent=143 // pred_fallthru
          _
        // Predicated region
        $region153: #{tpu_custom_call.1} parent=143 // pred_check
          %p1295 = pneg %p227
        $region154: #{tpu_custom_call.1} parent=143 // pred_check_branch
          %1297 = sbr.rel (%p1295) target = $region156
        $region155: #{tpu_custom_call.1} parent=143 // pred_region
          %1298 = dma.done [#allocation7], 16
        $region156: #{tpu_custom_call.1} parent=143 // pred_fallthru
          _
        %s1299 = sand.u32 %s106, 1
        %s1300 = scalar_lea.sflag [#allocation10], %s1299
        %s1301 = sand.u32 %s240, 1
        %s1302 = smul.addr %s1301, 384
        %s1303 = scalar_lea.vmem [#allocation9], %s1302
        // Predicated region
        $region157: #{tpu_custom_call.1} parent=143 // pred_check
          %p1304 = pneg %p253
        $region158: #{tpu_custom_call.1} parent=143 // pred_check_branch
          %1306 = sbr.rel (%p1304) target = $region160
        $region159: #{tpu_custom_call.1} parent=143 // pred_region
          %1307 = dma.done %s1300, 6144
        $region160: #{tpu_custom_call.1} parent=143 // pred_fallthru
          _
        %s1308 = sand.u32 %s106, 1
        %s1309 = scalar_lea.sflag [#allocation10], %s1308
        %s1310 = sand.u32 %s266, 1
        %s1311 = smul.addr %s1310, 6
        %s1312 = scalar_lea.vmem [#allocation11], %s1311
        // Predicated region
        $region161: #{tpu_custom_call.1} parent=143 // pred_check
          %p1313 = pneg %p279
        $region162: #{tpu_custom_call.1} parent=143 // pred_check_branch
          %1315 = sbr.rel (%p1313) target = $region164
        $region163: #{tpu_custom_call.1} parent=143 // pred_region
          %1316 = dma.done %s1309, 96
        $region164: #{tpu_custom_call.1} parent=143 // pred_fallthru
          _
        %s1317 = sand.u32 %s106, 1
        %s1318 = scalar_lea.sflag [#allocation13], %s1317
        %s1319 = sand.u32 %s292, 1
        %s1320 = smul.addr %s1319, 128
        %s1321 = scalar_lea.vmem [#allocation12], %s1320
        // Predicated region
        $region165: #{tpu_custom_call.1} parent=143 // pred_check
          %p1322 = pneg %p305
        $region166: #{tpu_custom_call.1} parent=143 // pred_check_branch
          %1324 = sbr.rel (%p1322) target = $region168
        $region167: #{tpu_custom_call.1} parent=143 // pred_region
          %1325 = dma.done %s1318, 2048
        $region168: #{tpu_custom_call.1} parent=143 // pred_fallthru
          _
        %s1326 = sand.u32 %s106, 1
        %s1327 = scalar_lea.sflag [#allocation13], %s1326
        %s1328 = sand.u32 %s344, 1
        %s1329 = scalar_lea.vmem [#allocation14], %s1328
        // Predicated region
        $region169: #{tpu_custom_call.1} parent=143 // pred_check
          %p1330 = pneg %p357
        $region170: #{tpu_custom_call.1} parent=143 // pred_check_branch
          %1332 = sbr.rel (%p1330) target = $region172
        $region171: #{tpu_custom_call.1} parent=143 // pred_region
          %1333 = dma.done %s1327, 16
        $region172: #{tpu_custom_call.1} parent=143 // pred_fallthru
          _
        %s1334 = sand.u32 %s106, 1
        %s1335 = scalar_lea.sflag [#allocation16], %s1334
        %s1336 = sand.u32 %s370, 1
        %s1337 = scalar_lea.vmem [#allocation15], %s1336
        // Predicated region
        $region173: #{tpu_custom_call.1} parent=143 // pred_check
          %p1338 = pneg %p383
        $region174: #{tpu_custom_call.1} parent=143 // pred_check_branch
          %1340 = sbr.rel (%p1338) target = $region176
        $region175: #{tpu_custom_call.1} parent=143 // pred_region
          %1341 = dma.done %s1335, 16
        $region176: #{tpu_custom_call.1} parent=143 // pred_fallthru
          _
        %s1342 = sand.u32 %s106, 1
        %s1343 = scalar_lea.sflag [#allocation16], %s1342
        %s1344 = sand.u32 %s396, 1
        %s1345 = smul.addr %s1344, 256
        %s1346 = scalar_lea.vmem [#allocation17], %s1345
        // Predicated region
        $region177: #{tpu_custom_call.1} parent=143 // pred_check
          %p1347 = pneg %p409
        $region178: #{tpu_custom_call.1} parent=143 // pred_check_branch
          %1349 = sbr.rel (%p1347) target = $region180
        $region179: #{tpu_custom_call.1} parent=143 // pred_region
          %1350 = dma.done %s1343, 4096
        $region180: #{tpu_custom_call.1} parent=143 // pred_fallthru
          _
        %s1351 = sand.u32 %s106, 1
        %s1352 = scalar_lea.sflag [#allocation19], %s1351
        %s1353 = sand.u32 %s422, 1
        %s1354 = smul.addr %s1353, 4
        %s1355 = scalar_lea.vmem [#allocation18], %s1354
        // Predicated region
        $region181: #{tpu_custom_call.1} parent=143 // pred_check
          %p1356 = pneg %p435
        $region182: #{tpu_custom_call.1} parent=143 // pred_check_branch
          %1358 = sbr.rel (%p1356) target = $region184
        $region183: #{tpu_custom_call.1} parent=143 // pred_region
          %1359 = dma.done %s1352, 64
        $region184: #{tpu_custom_call.1} parent=143 // pred_fallthru
          _
        %s1360 = sand.u32 %s106, 1
        %s1361 = scalar_lea.sflag [#allocation19], %s1360
        %s1362 = sand.u32 %s448, 1
        %s1363 = smul.addr %s1362, 256
        %s1364 = scalar_lea.vmem [#allocation20], %s1363
        // Predicated region
        $region185: #{tpu_custom_call.1} parent=143 // pred_check
          %p1365 = pneg %p461
        $region186: #{tpu_custom_call.1} parent=143 // pred_check_branch
          %1367 = sbr.rel (%p1365) target = $region188
        $region187: #{tpu_custom_call.1} parent=143 // pred_region
          %1368 = dma.done %s1361, 4096
        $region188: #{tpu_custom_call.1} parent=143 // pred_fallthru
          _
        %s1369 = sand.u32 %s106, 1
        %s1370 = scalar_lea.sflag [#allocation22], %s1369
        %s1371 = sand.u32 %s474, 1
        %s1372 = scalar_lea.vmem [#allocation21], %s1371
        // Predicated region
        $region189: #{tpu_custom_call.1} parent=143 // pred_check
          %p1373 = pneg %p487
        $region190: #{tpu_custom_call.1} parent=143 // pred_check_branch
          %1375 = sbr.rel (%p1373) target = $region192
        $region191: #{tpu_custom_call.1} parent=143 // pred_region
          %1376 = dma.done %s1370, 16
        $region192: #{tpu_custom_call.1} parent=143 // pred_fallthru
          _
        %s1377 = sand.u32 %s106, 1
        %s1378 = scalar_lea.sflag [#allocation22], %s1377
        %s1379 = sand.u32 %s500, 1
        %s1380 = scalar_lea.vmem [#allocation23], %s1379
        // Predicated region
        $region193: #{tpu_custom_call.1} parent=143 // pred_check
          %p1381 = pneg %p513
        $region194: #{tpu_custom_call.1} parent=143 // pred_check_branch
          %1383 = sbr.rel (%p1381) target = $region196
        $region195: #{tpu_custom_call.1} parent=143 // pred_region
          %1384 = dma.done %s1378, 16
        $region196: #{tpu_custom_call.1} parent=143 // pred_fallthru
          _
        %s1385 = sand.u32 %s106, 1
        %s1386 = scalar_lea.sflag [#allocation25], %s1385
        %s1387 = sand.u32 %s526, 1
        %s1388 = scalar_lea.vmem [#allocation24], %s1387
        // Predicated region
        $region197: #{tpu_custom_call.1} parent=143 // pred_check
          %p1389 = pneg %p539
        $region198: #{tpu_custom_call.1} parent=143 // pred_check_branch
          %1391 = sbr.rel (%p1389) target = $region200
        $region199: #{tpu_custom_call.1} parent=143 // pred_region
          %1392 = dma.done %s1386, 16
        $region200: #{tpu_custom_call.1} parent=143 // pred_fallthru
          _
        // Predicated region
        $region201: #{tpu_custom_call.1} parent=143 // pred_check
          %p1393 = pneg %p581
        $region202: #{tpu_custom_call.1} parent=143 // pred_check_branch
          %1395 = sbr.rel (%p1393) target = $region204
        $region203: #{tpu_custom_call.1} parent=143 // pred_region
          %1396 = dma.done [#allocation25], 16
        $region204: #{tpu_custom_call.1} parent=143 // pred_fallthru
          _
        // Predicated region
        $region205: #{tpu_custom_call.1} parent=143 // pred_check
          %p1397 = pneg %p602
        $region206: #{tpu_custom_call.1} parent=143 // pred_check_branch
          %1399 = sbr.rel (%p1397) target = $region208
        $region207: #{tpu_custom_call.1} parent=143 // pred_region
          %1400 = dma.done [#allocation28], 1024
        $region208: #{tpu_custom_call.1} parent=143 // pred_fallthru
          _
        // Predicated region
        $region209: #{tpu_custom_call.1} parent=143 // pred_check
          %p1401 = pneg %p623
        $region210: #{tpu_custom_call.1} parent=143 // pred_check_branch
          %1403 = sbr.rel (%p1401) target = $region212
        $region211: #{tpu_custom_call.1} parent=143 // pred_region
          %1404 = dma.done [#allocation28], 16
        $region212: #{tpu_custom_call.1} parent=143 // pred_fallthru
          _
        // Predicated region
        $region213: #{tpu_custom_call.1} parent=143 // pred_check
          %p1405 = pneg %p644
        $region214: #{tpu_custom_call.1} parent=143 // pred_check_branch
          %1407 = sbr.rel (%p1405) target = $region216
        $region215: #{tpu_custom_call.1} parent=143 // pred_region
          %1408 = dma.done [#allocation31], 1024
        $region216: #{tpu_custom_call.1} parent=143 // pred_fallthru
          _
        // Predicated region
        $region217: #{tpu_custom_call.1} parent=143 // pred_check
          %p1409 = pneg %p665
        $region218: #{tpu_custom_call.1} parent=143 // pred_check_branch
          %1411 = sbr.rel (%p1409) target = $region220
        $region219: #{tpu_custom_call.1} parent=143 // pred_region
          %1412 = dma.done [#allocation31], 16
        $region220: #{tpu_custom_call.1} parent=143 // pred_fallthru
          _
        // Predicated region
        $region221: #{tpu_custom_call.1} parent=143 // pred_check
          %p1413 = pneg %p686
        $region222: #{tpu_custom_call.1} parent=143 // pred_check_branch
          %1415 = sbr.rel (%p1413) target = $region224
        $region223: #{tpu_custom_call.1} parent=143 // pred_region
          %1416 = dma.done [#allocation34], 1024
        $region224: #{tpu_custom_call.1} parent=143 // pred_fallthru
          _
        // Predicated region
        $region225: #{tpu_custom_call.1} parent=143 // pred_check
          %p1417 = pneg %p707
        $region226: #{tpu_custom_call.1} parent=143 // pred_check_branch
          %1419 = sbr.rel (%p1417) target = $region228
        $region227: #{tpu_custom_call.1} parent=143 // pred_region
          %1420 = dma.done [#allocation34], 16
        $region228: #{tpu_custom_call.1} parent=143 // pred_fallthru
          _
        // Predicated region
        $region229: #{tpu_custom_call.1} parent=143 // pred_check
          %p1421 = pneg %p728
        $region230: #{tpu_custom_call.1} parent=143 // pred_check_branch
          %1423 = sbr.rel (%p1421) target = $region232
        $region231: #{tpu_custom_call.1} parent=143 // pred_region
          %1424 = dma.done [#allocation37], 1024
        $region232: #{tpu_custom_call.1} parent=143 // pred_fallthru
          _
        // Predicated region
        $region233: #{tpu_custom_call.1} parent=143 // pred_check
          %p1425 = pneg %p749
        $region234: #{tpu_custom_call.1} parent=143 // pred_check_branch
          %1427 = sbr.rel (%p1425) target = $region236
        $region235: #{tpu_custom_call.1} parent=143 // pred_region
          %1428 = dma.done [#allocation37], 16
        $region236: #{tpu_custom_call.1} parent=143 // pred_fallthru
          _
        // Predicated region
        $region237: #{tpu_custom_call.1} parent=143 // pred_check
          %p1429 = pneg %p770
        $region238: #{tpu_custom_call.1} parent=143 // pred_check_branch
          %1431 = sbr.rel (%p1429) target = $region240
        $region239: #{tpu_custom_call.1} parent=143 // pred_region
          %1432 = dma.done [#allocation40], 16
        $region240: #{tpu_custom_call.1} parent=143 // pred_fallthru
          _
        %p1433 = pneg %p122
        %p1434 = pneg %p119
        %p1435 = pneg %p143
        %p1436 = pneg %p140
        %p1437 = pneg %p164
        %p1438 = pneg %p161
        %p1439 = pneg %p185
        %p1440 = pneg %p182
        %p1441 = pneg %p206
        %p1442 = pneg %p203
        %p1443 = pneg %p227
        %p1444 = pneg %p224
        %s1445 = sand.u32 %s106, 1
        %s1446 = scalar_lea.sflag [#allocation10], %s1445
        %s1447 = sand.u32 %s240, 1
        %s1448 = smul.addr %s1447, 384
        %s1449 = scalar_lea.vmem [#allocation9], %s1448
        %p1450 = pneg %p253
        %p1451 = pneg %p250
        %s1452 = sand.u32 %s106, 1
        %s1453 = scalar_lea.sflag [#allocation10], %s1452
        %s1454 = sand.u32 %s266, 1
        %s1455 = smul.addr %s1454, 6
        %s1456 = scalar_lea.vmem [#allocation11], %s1455
        %p1457 = pneg %p279
        %p1458 = pneg %p276
        %s1459 = sand.u32 %s106, 1
        %s1460 = scalar_lea.sflag [#allocation13], %s1459
        %s1461 = sand.u32 %s292, 1
        %s1462 = smul.addr %s1461, 128
        %s1463 = scalar_lea.vmem [#allocation12], %s1462
        %p1464 = pneg %p305
        %p1465 = pneg %p302
        %p1466 = scmp.lt.s32.totalorder %s106, 1
        %s1467 = scalar_select %p1466, %s106, 1
        %s1468 = scalar_lea.vmem %s19, %s1467
        %p1469 = pneg %p331
        %p1470 = pneg %p328
        %s1471 = sand.u32 %s106, 1
        %s1472 = scalar_lea.sflag [#allocation13], %s1471
        %s1473 = sand.u32 %s344, 1
        %s1474 = scalar_lea.vmem [#allocation14], %s1473
        %p1475 = pneg %p357
        %p1476 = pneg %p354
        %s1477 = sand.u32 %s106, 1
        %s1478 = scalar_lea.sflag [#allocation16], %s1477
        %s1479 = sand.u32 %s370, 1
        %s1480 = scalar_lea.vmem [#allocation15], %s1479
        %p1481 = pneg %p383
        %p1482 = pneg %p380
        %s1483 = sand.u32 %s106, 1
        %s1484 = scalar_lea.sflag [#allocation16], %s1483
        %s1485 = sand.u32 %s396, 1
        %s1486 = smul.addr %s1485, 256
        %s1487 = scalar_lea.vmem [#allocation17], %s1486
        %p1488 = pneg %p409
        %p1489 = pneg %p406
        %s1490 = sand.u32 %s106, 1
        %s1491 = scalar_lea.sflag [#allocation19], %s1490
        %s1492 = sand.u32 %s422, 1
        %s1493 = smul.addr %s1492, 4
        %s1494 = scalar_lea.vmem [#allocation18], %s1493
        %p1495 = pneg %p435
        %p1496 = pneg %p432
        %s1497 = sand.u32 %s106, 1
        %s1498 = scalar_lea.sflag [#allocation19], %s1497
        %s1499 = sand.u32 %s448, 1
        %s1500 = smul.addr %s1499, 256
        %s1501 = scalar_lea.vmem [#allocation20], %s1500
        %p1502 = pneg %p461
        %p1503 = pneg %p458
        %s1504 = sand.u32 %s106, 1
        %s1505 = scalar_lea.sflag [#allocation22], %s1504
        %s1506 = sand.u32 %s474, 1
        %s1507 = scalar_lea.vmem [#allocation21], %s1506
        %p1508 = pneg %p487
        %p1509 = pneg %p484
        %s1510 = sand.u32 %s106, 1
        %s1511 = scalar_lea.sflag [#allocation22], %s1510
        %s1512 = sand.u32 %s500, 1
        %s1513 = scalar_lea.vmem [#allocation23], %s1512
        %p1514 = pneg %p513
        %p1515 = pneg %p510
        %s1516 = sand.u32 %s106, 1
        %s1517 = scalar_lea.sflag [#allocation25], %s1516
        %s1518 = sand.u32 %s526, 1
        %s1519 = scalar_lea.vmem [#allocation24], %s1518
        %p1520 = pneg %p539
        %p1521 = pneg %p536
        %p1522 = pneg %p560
        %p1523 = pneg %p557
        %p1524 = pneg %p581
        %p1525 = pneg %p578
        %p1526 = pneg %p602
        %p1527 = pneg %p599
        %p1528 = pneg %p623
        %p1529 = pneg %p620
        %p1530 = pneg %p644
        %p1531 = pneg %p641
        %p1532 = pneg %p665
        %p1533 = pneg %p662
        %p1534 = pneg %p686
        %p1535 = pneg %p683
        %p1536 = pneg %p707
        %p1537 = pneg %p704
        %p1538 = pneg %p728
        %p1539 = pneg %p725
        %p1540 = pneg %p749
        %p1541 = pneg %p746
        %p1542 = pneg %p770
        %p1543 = pneg %p767
        %p1544 = pneg %p791
        %p1545 = pneg %p788
        %p1546 = pneg %p812
        %p1547 = pneg %p809
        %p1548 = pneg %p833
        %p1549 = pneg %p830
        %p1550 = pneg %p854
        %p1551 = pneg %p851
        %p1552 = pneg %p875
        %p1553 = pneg %p872
        %p1554 = scmp.lt.s32.totalorder %s106, 1
        %s1555 = scalar_select %p1554, %s106, 1
        %s1556 = scalar_lea.vmem %s19, %s1555
        %p1558 = scmp.eq.s32.totalorder %s106, 0
        // Predicated region
        $region241: #{tpu_custom_call.1} parent=143 // pred_check
          %p1559 = pneg %p1558
        $region242: #{tpu_custom_call.1} parent=143 // pred_check_branch
          %1561 = sbr.rel (%p1559) target = $region244
        $region243: #{tpu_custom_call.1} parent=143 // pred_region
          %v1562 = vld [vmem:[#allocation3] sm:$0xff]
          %v1563 = vld [vmem:[#allocation3 + $0x8] sm:$0xff]
          %1564 = vadd.xlane.f32.xlu0 %v1562
          %v1565 = vpop.xlane.xlu0 %1564
          %1566 = vadd.xlane.f32.xlu0 %v1563
          %v1567 = vpop.xlane.xlu0 %1566
          %v1568 = vrcp.pop 128.0
          %v1569 = vmul.f32 %v1565, %v1568
          %v1570 = vmul.f32 %v1567, %v1568
          %v1571 = vsub.f32 %v1562, %v1569
          %v1572 = vsub.f32 %v1563, %v1570
          %v1573 = vmul.f32 %v1571, %v1571
          %v1574 = vmul.f32 %v1572, %v1572
          %1575 = vadd.xlane.f32.xlu0 %v1573
          %v1576 = vpop.xlane.xlu0 %1575
          %1577 = vadd.xlane.f32.xlu0 %v1574
          %v1578 = vpop.xlane.xlu0 %1577
          %v1579 = vmul.f32 %v1576, %v1568
          %v1580 = vmul.f32 %v1578, %v1568
          %v1581 = vadd.f32 %v1579, 1e-12
          %v1582 = vadd.f32 %v1580, 1e-12
          %v1583 = vrsqrt.pop %v1581
          %v1584 = vrsqrt.pop %v1582
          %v1585 = vmul.f32 %v1571, %v1583
          %v1586 = vmul.f32 %v1572, %v1584
          %v1587 = vld [vmem:[%s9] sm:$0x1]
          %v1589 = vlaneseq
          %v1590 = vshrl.u32 %v1589, 7
          %v1591 = vsub.s32 0, %v1590
          %v1592 = vrot.slane %v1587, %v1591
          %v1594 = vmul.f32 %v1585, %v1592
          %v1595 = vmul.f32 %v1586, %v1592
          %v1596 = vld [vmem:[#allocation8] sm:$0x1]
          %v1598 = vlaneseq
          %v1599 = vshrl.u32 %v1598, 7
          %v1600 = vsub.s32 0, %v1599
          %v1601 = vrot.slane %v1596, %v1600
          %v1603 = vadd.f32 %v1594, %v1601
          %v1604 = vadd.f32 %v1595, %v1601
          %1605 = vst [vmem:[#allocation2] sm:$0xff] %v1603
          %1606 = vst [vmem:[#allocation2 + $0x8] sm:$0xff] %v1604
        $region244: #{tpu_custom_call.1} parent=143 // pred_fallthru
          _
        %v1607 = vld [vmem:[#allocation2] sm:$0xff]
        %v1608 = vld [vmem:[#allocation2 + $0x8] sm:$0xff]
        %v1609 = vld [vmem:[#allocation6] sm:$0xf]
        %v1610 = vld [vmem:[#allocation6 + $0x4] sm:$0xf]
        %v1611 = vunpack.c.l.bf16 %v1609
        %v1612 = vunpack.c.l.bf16 %v1610
        %v1613 = vsub.f32 %v1611, 1.0
        %v1614 = vsub.f32 %v1612, 1.0
        %v1615 = vmul.f32 %v1613, 10000.0
        %v1616 = vmul.f32 %v1614, 10000.0
        %v1617 = vpack.c.bf16 %v1608, %v1607
        %v1618 = vld [vmem:[%s1303] sm:$0xff]
        %v1619 = vld [vmem:[%s1303 + $0x8] sm:$0xff]
        %v1620 = vld [vmem:[%s1303 + $0x10] sm:$0xff]
        %v1621 = vld [vmem:[%s1303 + $0x18] sm:$0xff]
        %v1622 = vld [vmem:[%s1303 + $0x20] sm:$0xff]
        %v1623 = vld [vmem:[%s1303 + $0x28] sm:$0xff]
        %v1624 = vld [vmem:[%s1303 + $0x30] sm:$0xff]
        %v1625 = vld [vmem:[%s1303 + $0x38] sm:$0xff]
        %v1626 = vld [vmem:[%s1303 + $0x40] sm:$0xff]
        %v1627 = vld [vmem:[%s1303 + $0x48] sm:$0xff]
        %v1628 = vld [vmem:[%s1303 + $0x50] sm:$0xff]
        %v1629 = vld [vmem:[%s1303 + $0x58] sm:$0xff]
        %v1630 = vld [vmem:[%s1303 + $0x60] sm:$0xff]
        %v1631 = vld [vmem:[%s1303 + $0x68] sm:$0xff]
        %v1632 = vld [vmem:[%s1303 + $0x70] sm:$0xff]
        %v1633 = vld [vmem:[%s1303 + $0x78] sm:$0xff]
        %v1634 = vld [vmem:[%s1303 + $0x80] sm:$0xff]
        %v1635 = vld [vmem:[%s1303 + $0x88] sm:$0xff]
        %v1636 = vld [vmem:[%s1303 + $0x90] sm:$0xff]
        %v1637 = vld [vmem:[%s1303 + $0x98] sm:$0xff]
        %v1638 = vld [vmem:[%s1303 + $0xa0] sm:$0xff]
        %v1639 = vld [vmem:[%s1303 + $0xa8] sm:$0xff]
        %v1640 = vld [vmem:[%s1303 + $0xb0] sm:$0xff]
        %v1641 = vld [vmem:[%s1303 + $0xb8] sm:$0xff]
        %v1642 = vld [vmem:[%s1303 + $0xc0] sm:$0xff]
        %v1643 = vld [vmem:[%s1303 + $0xc8] sm:$0xff]
        %v1644 = vld [vmem:[%s1303 + $0xd0] sm:$0xff]
        %v1645 = vld [vmem:[%s1303 + $0xd8] sm:$0xff]
        %v1646 = vld [vmem:[%s1303 + $0xe0] sm:$0xff]
        %v1647 = vld [vmem:[%s1303 + $0xe8] sm:$0xff]
        %v1648 = vld [vmem:[%s1303 + $0xf0] sm:$0xff]
        %v1649 = vld [vmem:[%s1303 + $0xf8] sm:$0xff]
        %v1650 = vld [vmem:[%s1303 + $0x100] sm:$0xff]
        %v1651 = vld [vmem:[%s1303 + $0x108] sm:$0xff]
        %v1652 = vld [vmem:[%s1303 + $0x110] sm:$0xff]
        %v1653 = vld [vmem:[%s1303 + $0x118] sm:$0xff]
        %v1654 = vld [vmem:[%s1303 + $0x120] sm:$0xff]
        %v1655 = vld [vmem:[%s1303 + $0x128] sm:$0xff]
        %v1656 = vld [vmem:[%s1303 + $0x130] sm:$0xff]
        %v1657 = vld [vmem:[%s1303 + $0x138] sm:$0xff]
        %v1658 = vld [vmem:[%s1303 + $0x140] sm:$0xff]
        %v1659 = vld [vmem:[%s1303 + $0x148] sm:$0xff]
        %v1660 = vld [vmem:[%s1303 + $0x150] sm:$0xff]
        %v1661 = vld [vmem:[%s1303 + $0x158] sm:$0xff]
        %v1662 = vld [vmem:[%s1303 + $0x160] sm:$0xff]
        %v1663 = vld [vmem:[%s1303 + $0x168] sm:$0xff]
        %v1664 = vld [vmem:[%s1303 + $0x170] sm:$0xff]
        %v1665 = vld [vmem:[%s1303 + $0x178] sm:$0xff]
        %v1666 = vld [vmem:[%s1312] sm:$0x3f]
        %v1668 = vlaneseq
        %v1669 = vshrl.u32 %v1668, 7
        %v1670 = vsub.s32 0, %v1669
        %v1671 = vrot.slane %v1666, %v1670
        %v1672 = vlaneseq
        %v1673 = vshrl.u32 %v1672, 7
        %v1674 = vsub.s32 1, %v1673
        %v1675 = vrot.slane %v1666, %v1674
        %v1676 = vlaneseq
        %v1677 = vshrl.u32 %v1676, 7
        %v1678 = vsub.s32 2, %v1677
        %v1679 = vrot.slane %v1666, %v1678
        %v1680 = vlaneseq
        %v1681 = vshrl.u32 %v1680, 7
        %v1682 = vsub.s32 3, %v1681
        %v1683 = vrot.slane %v1666, %v1682
        %v1684 = vlaneseq
        %v1685 = vshrl.u32 %v1684, 7
        %v1686 = vsub.s32 4, %v1685
        %v1687 = vrot.slane %v1666, %v1686
        %v1688 = vlaneseq
        %v1689 = vshrl.u32 %v1688, 7
        %v1690 = vsub.s32 5, %v1689
        %v1691 = vrot.slane %v1666, %v1690
        %v1746 = vunpack.c.l.b16 %v1618
        %v1747 = vunpack.c.h.b16 %v1618
        %v1748 = vunpack.c.l.b16 %v1619
        %v1749 = vunpack.c.h.b16 %v1619
        %v1750 = vunpack.c.l.b16 %v1620
        %v1751 = vunpack.c.h.b16 %v1620
        %v1752 = vunpack.c.l.b16 %v1621
        %v1753 = vunpack.c.h.b16 %v1621
        %v1754 = vunpack.c.l.b16 %v1622
        %v1755 = vunpack.c.h.b16 %v1622
        %v1756 = vunpack.c.l.b16 %v1623
        %v1757 = vunpack.c.h.b16 %v1623
        %v1758 = vunpack.c.l.b16 %v1624
        %v1759 = vunpack.c.h.b16 %v1624
        %v1760 = vunpack.c.l.b16 %v1625
        %v1761 = vunpack.c.h.b16 %v1625
        %v1762 = vunpack.c.l.b16 %v1626
        %v1763 = vunpack.c.h.b16 %v1626
        %v1764 = vunpack.c.l.b16 %v1627
        %v1765 = vunpack.c.h.b16 %v1627
        %v1766 = vunpack.c.l.b16 %v1628
        %v1767 = vunpack.c.h.b16 %v1628
        %v1768 = vunpack.c.l.b16 %v1629
        %v1769 = vunpack.c.h.b16 %v1629
        %v1770 = vunpack.c.l.b16 %v1630
        %v1771 = vunpack.c.h.b16 %v1630
        %v1772 = vunpack.c.l.b16 %v1631
        %v1773 = vunpack.c.h.b16 %v1631
        %v1774 = vunpack.c.l.b16 %v1632
        %v1775 = vunpack.c.h.b16 %v1632
        %v1776 = vunpack.c.l.b16 %v1633
        %v1777 = vunpack.c.h.b16 %v1633
        %v1778 = vunpack.c.l.b16 %v1634
        %v1779 = vunpack.c.h.b16 %v1634
        %v1780 = vunpack.c.l.b16 %v1635
        %v1781 = vunpack.c.h.b16 %v1635
        %v1782 = vunpack.c.l.b16 %v1636
        %v1783 = vunpack.c.h.b16 %v1636
        %v1784 = vunpack.c.l.b16 %v1637
        %v1785 = vunpack.c.h.b16 %v1637
        %v1786 = vunpack.c.l.b16 %v1638
        %v1787 = vunpack.c.h.b16 %v1638
        %v1788 = vunpack.c.l.b16 %v1639
        %v1789 = vunpack.c.h.b16 %v1639
        %v1790 = vunpack.c.l.b16 %v1640
        %v1791 = vunpack.c.h.b16 %v1640
        %v1792 = vunpack.c.l.b16 %v1641
        %v1793 = vunpack.c.h.b16 %v1641
        %v1794 = vunpack.c.l.b16 %v1642
        %v1795 = vunpack.c.h.b16 %v1642
        %v1796 = vunpack.c.l.b16 %v1643
        %v1797 = vunpack.c.h.b16 %v1643
        %v1798 = vunpack.c.l.b16 %v1644
        %v1799 = vunpack.c.h.b16 %v1644
        %v1800 = vunpack.c.l.b16 %v1645
        %v1801 = vunpack.c.h.b16 %v1645
        %v1802 = vunpack.c.l.b16 %v1646
        %v1803 = vunpack.c.h.b16 %v1646
        %v1804 = vunpack.c.l.b16 %v1647
        %v1805 = vunpack.c.h.b16 %v1647
        %v1806 = vunpack.c.l.b16 %v1648
        %v1807 = vunpack.c.h.b16 %v1648
        %v1808 = vunpack.c.l.b16 %v1649
        %v1809 = vunpack.c.h.b16 %v1649
        %v1810 = vunpack.c.l.b16 %v1650
        %v1811 = vunpack.c.h.b16 %v1650
        %v1812 = vunpack.c.l.b16 %v1651
        %v1813 = vunpack.c.h.b16 %v1651
        %v1814 = vunpack.c.l.b16 %v1652
        %v1815 = vunpack.c.h.b16 %v1652
        %v1816 = vunpack.c.l.b16 %v1653
        %v1817 = vunpack.c.h.b16 %v1653
        %v1818 = vunpack.c.l.b16 %v1654
        %v1819 = vunpack.c.h.b16 %v1654
        %v1820 = vunpack.c.l.b16 %v1655
        %v1821 = vunpack.c.h.b16 %v1655
        %v1822 = vunpack.c.l.b16 %v1656
        %v1823 = vunpack.c.h.b16 %v1656
        %v1824 = vunpack.c.l.b16 %v1657
        %v1825 = vunpack.c.h.b16 %v1657
        %v1826 = vunpack.c.l.b16 %v1658
        %v1827 = vunpack.c.h.b16 %v1658
        %v1828 = vunpack.c.l.b16 %v1659
        %v1829 = vunpack.c.h.b16 %v1659
        %v1830 = vunpack.c.l.b16 %v1660
        %v1831 = vunpack.c.h.b16 %v1660
        %v1832 = vunpack.c.l.b16 %v1661
        %v1833 = vunpack.c.h.b16 %v1661
        %v1834 = vunpack.c.l.b16 %v1662
        %v1835 = vunpack.c.h.b16 %v1662
        %v1836 = vunpack.c.l.b16 %v1663
        %v1837 = vunpack.c.h.b16 %v1663
        %v1838 = vunpack.c.l.b16 %v1664
        %v1839 = vunpack.c.h.b16 %v1664
        %v1840 = vunpack.c.l.b16 %v1665
        %v1841 = vunpack.c.h.b16 %v1665
        %v1842 = vpack.c.b16 %v1752, %v1746
        %v1843 = vpack.c.b16 %v1753, %v1747
        %v1844 = vpack.c.b16 %v1754, %v1748
        %v1845 = vpack.c.b16 %v1755, %v1749
        %v1846 = vpack.c.b16 %v1756, %v1750
        %v1847 = vpack.c.b16 %v1757, %v1751
        %v1848 = vpack.c.b16 %v1764, %v1758
        %v1849 = vpack.c.b16 %v1765, %v1759
        %v1850 = vpack.c.b16 %v1766, %v1760
        %v1851 = vpack.c.b16 %v1767, %v1761
        %v1852 = vpack.c.b16 %v1768, %v1762
        %v1853 = vpack.c.b16 %v1769, %v1763
        %v1854 = vpack.c.b16 %v1776, %v1770
        %v1855 = vpack.c.b16 %v1777, %v1771
        %v1856 = vpack.c.b16 %v1778, %v1772
        %v1857 = vpack.c.b16 %v1779, %v1773
        %v1858 = vpack.c.b16 %v1780, %v1774
        %v1859 = vpack.c.b16 %v1781, %v1775
        %v1860 = vpack.c.b16 %v1788, %v1782
        %v1861 = vpack.c.b16 %v1789, %v1783
        %v1862 = vpack.c.b16 %v1790, %v1784
        %v1863 = vpack.c.b16 %v1791, %v1785
        %v1864 = vpack.c.b16 %v1792, %v1786
        %v1865 = vpack.c.b16 %v1793, %v1787
        %v1866 = vpack.c.b16 %v1800, %v1794
        %v1867 = vpack.c.b16 %v1801, %v1795
        %v1868 = vpack.c.b16 %v1802, %v1796
        %v1869 = vpack.c.b16 %v1803, %v1797
        %v1870 = vpack.c.b16 %v1804, %v1798
        %v1871 = vpack.c.b16 %v1805, %v1799
        %v1872 = vpack.c.b16 %v1812, %v1806
        %v1873 = vpack.c.b16 %v1813, %v1807
        %v1874 = vpack.c.b16 %v1814, %v1808
        %v1875 = vpack.c.b16 %v1815, %v1809
        %v1876 = vpack.c.b16 %v1816, %v1810
        %v1877 = vpack.c.b16 %v1817, %v1811
        %v1878 = vpack.c.b16 %v1824, %v1818
        %v1879 = vpack.c.b16 %v1825, %v1819
        %v1880 = vpack.c.b16 %v1826, %v1820
        %v1881 = vpack.c.b16 %v1827, %v1821
        %v1882 = vpack.c.b16 %v1828, %v1822
        %v1883 = vpack.c.b16 %v1829, %v1823
        %v1884 = vpack.c.b16 %v1836, %v1830
        %v1885 = vpack.c.b16 %v1837, %v1831
        %v1886 = vpack.c.b16 %v1838, %v1832
        %v1887 = vpack.c.b16 %v1839, %v1833
        %v1888 = vpack.c.b16 %v1840, %v1834
        %v1889 = vpack.c.b16 %v1841, %v1835
        %1938 = vmatprep.subr.bf16.mxu0 %v1843
        %1939 = vmatpush1.bf16.msra.mxu0 %v1842
        %1940 = vmatprep.subr.bf16.mxu0 %v1849
        %1941 = vmatpush1.bf16.msra.mxu0 %v1848
        %1942 = vmatprep.subr.bf16.mxu0 %v1855
        %1943 = vmatpush1.bf16.msra.mxu0 %v1854
        %1944 = vmatprep.subr.bf16.mxu0 %v1861
        %1945 = vmatpush1.bf16.msra.mxu0 %v1860
        %1946 = vmatprep.subr.bf16.mxu0 %v1867
        %1947 = vmatpush1.bf16.msra.mxu0 %v1866
        %1948 = vmatprep.subr.bf16.mxu0 %v1873
        %1949 = vmatpush1.bf16.msra.mxu0 %v1872
        %1950 = vmatprep.subr.bf16.mxu0 %v1879
        %1951 = vmatpush1.bf16.msra.mxu0 %v1878
        %1952 = vmatprep.subr.bf16.mxu0 %v1885
        %1953 = vmatpush1.bf16.msra.mxu0 %v1884
        %1954 = vmatprep.subr.bf16.mxu0 0
        %1955 = vmatpush1.bf16.msra.mxu0 0
        %1956 = vmatprep.subr.bf16.mxu0 0
        %1957 = vmatpush1.bf16.msra.mxu0 0
        %1958 = vmatprep.subr.bf16.mxu0 0
        %1959 = vmatpush1.bf16.msra.mxu0 0
        %1960 = vmatprep.subr.bf16.mxu0 0
        %1961 = vmatpush1.bf16.msra.mxu0 0
        %1962 = vmatprep.subr.bf16.mxu0 0
        %1963 = vmatpush1.bf16.msra.mxu0 0
        %1964 = vmatprep.subr.bf16.mxu0 0
        %1965 = vmatpush1.bf16.msra.mxu0 0
        %1966 = vmatprep.subr.bf16.mxu0 0
        %1967 = vmatpush1.bf16.msra.mxu0 0
        %1968 = vmatprep.subr.bf16.mxu0 0
        %1969 = vmatpush1.bf16.msra.mxu0 0
        %1970 = vmatprep.mubr.bf16.mxu0 0
        %1971 = vmatmul.mubr.bf16.gmra.mrb[0].mxu0 %v1617
        %v1972 = vpop.f32.mrb[0].mxu0
        %v1973 = vadd.f32 %v1671, %v1972
        %v1974 = vpop.f32.mrb[0].mxu0
        %v1975 = vadd.f32 %v1675, %v1974
        %v1976 = vpop.f32.mrb[0].mxu0
        %v1977 = vadd.f32 %v1671, %v1976
        %v1978 = vpop.f32.mrb[0].mxu0
        %v1979 = vadd.f32 %v1675, %v1978
        %1980 = vdwg.mxu0
        %1981 = vmatprep.subr.bf16.mxu0 %v1845
        %1982 = vmatpush1.bf16.msra.mxu0 %v1844
        %1983 = vmatprep.subr.bf16.mxu0 %v1851
        %1984 = vmatpush1.bf16.msra.mxu0 %v1850
        %1985 = vmatprep.subr.bf16.mxu0 %v1857
        %1986 = vmatpush1.bf16.msra.mxu0 %v1856
        %1987 = vmatprep.subr.bf16.mxu0 %v1863
        %1988 = vmatpush1.bf16.msra.mxu0 %v1862
        %1989 = vmatprep.subr.bf16.mxu0 %v1869
        %1990 = vmatpush1.bf16.msra.mxu0 %v1868
        %1991 = vmatprep.subr.bf16.mxu0 %v1875
        %1992 = vmatpush1.bf16.msra.mxu0 %v1874
        %1993 = vmatprep.subr.bf16.mxu0 %v1881
        %1994 = vmatpush1.bf16.msra.mxu0 %v1880
        %1995 = vmatprep.subr.bf16.mxu0 %v1887
        %1996 = vmatpush1.bf16.msra.mxu0 %v1886
        %1997 = vmatprep.subr.bf16.mxu0 0
        %1998 = vmatpush1.bf16.msra.mxu0 0
        %1999 = vmatprep.subr.bf16.mxu0 0
        %2000 = vmatpush1.bf16.msra.mxu0 0
        %2001 = vmatprep.subr.bf16.mxu0 0
        %2002 = vmatpush1.bf16.msra.mxu0 0
        %2003 = vmatprep.subr.bf16.mxu0 0
        %2004 = vmatpush1.bf16.msra.mxu0 0
        %2005 = vmatprep.subr.bf16.mxu0 0
        %2006 = vmatpush1.bf16.msra.mxu0 0
        %2007 = vmatprep.subr.bf16.mxu0 0
        %2008 = vmatpush1.bf16.msra.mxu0 0
        %2009 = vmatprep.subr.bf16.mxu0 0
        %2010 = vmatpush1.bf16.msra.mxu0 0
        %2011 = vmatprep.subr.bf16.mxu0 0
        %2012 = vmatpush1.bf16.msra.mxu0 0
        %2013 = vmatprep.mubr.bf16.mxu0 0
        %2014 = vmatmul.mubr.bf16.gmra.mrb[0].mxu0 %v1617
        %v2015 = vpop.f32.mrb[0].mxu0
        %v2016 = vadd.f32 %v1679, %v2015
        %v2017 = vpop.f32.mrb[0].mxu0
        %v2018 = vadd.f32 %v1683, %v2017
        %v2019 = vpop.f32.mrb[0].mxu0
        %v2020 = vadd.f32 %v1679, %v2019
        %v2021 = vpop.f32.mrb[0].mxu0
        %v2022 = vadd.f32 %v1683, %v2021
        %2023 = vdwg.mxu0
        %2024 = vmatprep.subr.bf16.mxu0 %v1847
        %2025 = vmatpush1.bf16.msra.mxu0 %v1846
        %2026 = vmatprep.subr.bf16.mxu0 %v1853
        %2027 = vmatpush1.bf16.msra.mxu0 %v1852
        %2028 = vmatprep.subr.bf16.mxu0 %v1859
        %2029 = vmatpush1.bf16.msra.mxu0 %v1858
        %2030 = vmatprep.subr.bf16.mxu0 %v1865
        %2031 = vmatpush1.bf16.msra.mxu0 %v1864
        %2032 = vmatprep.subr.bf16.mxu0 %v1871
        %2033 = vmatpush1.bf16.msra.mxu0 %v1870
        %2034 = vmatprep.subr.bf16.mxu0 %v1877
        %2035 = vmatpush1.bf16.msra.mxu0 %v1876
        %2036 = vmatprep.subr.bf16.mxu0 %v1883
        %2037 = vmatpush1.bf16.msra.mxu0 %v1882
        %2038 = vmatprep.subr.bf16.mxu0 %v1889
        %2039 = vmatpush1.bf16.msra.mxu0 %v1888
        %2040 = vmatprep.subr.bf16.mxu0 0
        %2041 = vmatpush1.bf16.msra.mxu0 0
        %2042 = vmatprep.subr.bf16.mxu0 0
        %2043 = vmatpush1.bf16.msra.mxu0 0
        %2044 = vmatprep.subr.bf16.mxu0 0
        %2045 = vmatpush1.bf16.msra.mxu0 0
        %2046 = vmatprep.subr.bf16.mxu0 0
        %2047 = vmatpush1.bf16.msra.mxu0 0
        %2048 = vmatprep.subr.bf16.mxu0 0
        %2049 = vmatpush1.bf16.msra.mxu0 0
        %2050 = vmatprep.subr.bf16.mxu0 0
        %2051 = vmatpush1.bf16.msra.mxu0 0
        %2052 = vmatprep.subr.bf16.mxu0 0
        %2053 = vmatpush1.bf16.msra.mxu0 0
        %2054 = vmatprep.subr.bf16.mxu0 0
        %2055 = vmatpush1.bf16.msra.mxu0 0
        %2056 = vmatprep.mubr.bf16.mxu0 0
        %2057 = vmatmul.mubr.bf16.gmra.mrb[0].mxu0 %v1617
        %v2058 = vpop.f32.mrb[0].mxu0
        %v2059 = vadd.f32 %v1687, %v2058
        %v2060 = vpop.f32.mrb[0].mxu0
        %v2061 = vadd.f32 %v1691, %v2060
        %v2062 = vpop.f32.mrb[0].mxu0
        %v2063 = vadd.f32 %v1687, %v2062
        %v2064 = vpop.f32.mrb[0].mxu0
        %v2065 = vadd.f32 %v1691, %v2064
        %2066 = vdwg.mxu0
        %v2067 = vpack.c.bf16 %v1973, %v1973
        %v2068 = vpack.c.bf16 %v1977, %v1977
        %v2069 = vpack.c.bf16 %v1975, %v1975
        %v2070 = vpack.c.bf16 %v1979, %v1979
        %v2071 = vpack.c.bf16 %v2016, %v2016
        %v2072 = vpack.c.bf16 %v2020, %v2020
        %2073 = vmatprep.subr.bf16.mxu0 0
        %2074 = vmatpush1.bf16.xpose.msra.mxu0 %v2069
        %2075 = vmatprep.subr.bf16.mxu0 0
        %2076 = vmatpush1.bf16.xpose.msra.mxu0 0
        %2077 = vmatprep.subr.bf16.mxu0 0
        %2078 = vmatpush1.bf16.xpose.msra.mxu0 0
        %2079 = vmatprep.subr.bf16.mxu0 0
        %2080 = vmatpush1.bf16.xpose.msra.mxu0 0
        %2081 = vmatprep.subr.bf16.mxu0 0
        %2082 = vmatpush1.bf16.xpose.msra.mxu0 0
        %2083 = vmatprep.subr.bf16.mxu0 0
        %2084 = vmatpush1.bf16.xpose.msra.mxu0 0
        %2085 = vmatprep.subr.bf16.mxu0 0
        %2086 = vmatpush1.bf16.xpose.msra.mxu0 0
        %2087 = vmatprep.subr.bf16.mxu0 0
        %2088 = vmatpush1.bf16.xpose.msra.mxu0 0
        %2089 = vmatprep.subr.bf16.mxu0 0
        %2090 = vmatpush1.bf16.xpose.msra.mxu0 0
        %2091 = vmatprep.subr.bf16.mxu0 0
        %2092 = vmatpush1.bf16.xpose.msra.mxu0 0
        %2093 = vmatprep.subr.bf16.mxu0 0
        %2094 = vmatpush1.bf16.xpose.msra.mxu0 0
        %2095 = vmatprep.subr.bf16.mxu0 0
        %2096 = vmatpush1.bf16.xpose.msra.mxu0 0
        %2097 = vmatprep.subr.bf16.mxu0 0
        %2098 = vmatpush1.bf16.xpose.msra.mxu0 0
        %2099 = vmatprep.subr.bf16.mxu0 0
        %2100 = vmatpush1.bf16.xpose.msra.mxu0 0
        %2101 = vmatprep.subr.bf16.mxu0 0
        %2102 = vmatpush1.bf16.xpose.msra.mxu0 0
        %2103 = vmatprep.subr.bf16.mxu0 0
        %2104 = vmatpush1.bf16.xpose.msra.mxu0 0
        %2105 = vmatprep.mubr.bf16.mxu0 0
        %2106 = vmatmul.mubr.bf16.gmra.mrb[0].mxu0 %v2067
        %v2107 = vpop.f32.mrb[0].mxu0
        %v2108 = vadd.f32 0.0, %v2107
        %v2109 = vpop.f32.mrb[0].mxu0
        %v2110 = vpop.f32.mrb[0].mxu0
        %v2111 = vpop.f32.mrb[0].mxu0
        %2112 = vdwg.mxu0
        %2113 = vmatprep.subr.bf16.mxu0 0
        %2114 = vmatpush1.bf16.xpose.msra.mxu0 %v2070
        %2115 = vmatprep.subr.bf16.mxu0 0
        %2116 = vmatpush1.bf16.xpose.msra.mxu0 0
        %2117 = vmatprep.subr.bf16.mxu0 0
        %2118 = vmatpush1.bf16.xpose.msra.mxu0 0
        %2119 = vmatprep.subr.bf16.mxu0 0
        %2120 = vmatpush1.bf16.xpose.msra.mxu0 0
        %2121 = vmatprep.subr.bf16.mxu0 0
        %2122 = vmatpush1.bf16.xpose.msra.mxu0 0
        %2123 = vmatprep.subr.bf16.mxu0 0
        %2124 = vmatpush1.bf16.xpose.msra.mxu0 0
        %2125 = vmatprep.subr.bf16.mxu0 0
        %2126 = vmatpush1.bf16.xpose.msra.mxu0 0
        %2127 = vmatprep.subr.bf16.mxu0 0
        %2128 = vmatpush1.bf16.xpose.msra.mxu0 0
        %2129 = vmatprep.subr.bf16.mxu0 0
        %2130 = vmatpush1.bf16.xpose.msra.mxu0 0
        %2131 = vmatprep.subr.bf16.mxu0 0
        %2132 = vmatpush1.bf16.xpose.msra.mxu0 0
        %2133 = vmatprep.subr.bf16.mxu0 0
        %2134 = vmatpush1.bf16.xpose.msra.mxu0 0
        %2135 = vmatprep.subr.bf16.mxu0 0
        %2136 = vmatpush1.bf16.xpose.msra.mxu0 0
        %2137 = vmatprep.subr.bf16.mxu0 0
        %2138 = vmatpush1.bf16.xpose.msra.mxu0 0
        %2139 = vmatprep.subr.bf16.mxu0 0
        %2140 = vmatpush1.bf16.xpose.msra.mxu0 0
        %2141 = vmatprep.subr.bf16.mxu0 0
        %2142 = vmatpush1.bf16.xpose.msra.mxu0 0
        %2143 = vmatprep.subr.bf16.mxu0 0
        %2144 = vmatpush1.bf16.xpose.msra.mxu0 0
        %2145 = vmatprep.mubr.bf16.mxu0 0
        %2146 = vmatmul.mubr.bf16.gmra.mrb[0].mxu0 %v2068
        %v2147 = vpop.f32.mrb[0].mxu0
        %v2148 = vadd.f32 0.0, %v2147
        %v2149 = vpop.f32.mrb[0].mxu0
        %v2150 = vpop.f32.mrb[0].mxu0
        %v2151 = vpop.f32.mrb[0].mxu0
        %2152 = vdwg.mxu0
        %v2153 = vmul.f32 %v2108, 0.125
        %v2154 = vmul.f32 %v2148, 0.125
        %v2155 = vadd.f32 %v2153, %v1615
        %v2156 = vadd.f32 %v2154, %v1616
        %vm2157 = vcmask 64512
        %v2158 = vsel %vm2157, %v2155, -inf
        %2159 = vmax.xlane.f32.xlu0 %v2158
        %v2160 = vpop.xlane.xlu0 %2159
        %v2161 = vsel %vm2157, %v2156, -inf
        %2162 = vmax.xlane.f32.xlu0 %v2161
        %v2163 = vpop.xlane.xlu0 %2162
        %v2164 = vsub.f32 %v2155, %v2160
        %v2165 = vsub.f32 %v2156, %v2163
        %v2166 = vmul.f32 %v2164, 1.442695
        %v2167 = vpow.pop %v2166
        %v2168 = vmul.f32 %v2165, 1.442695
        %v2169 = vpow.pop %v2168
        %v2170 = vsel %vm2157, %v2167, 0.0
        %2171 = vadd.xlane.f32.xlu0 %v2170
        %v2172 = vpop.xlane.xlu0 %2171
        %v2173 = vsel %vm2157, %v2169, 0.0
        %2174 = vadd.xlane.f32.xlu0 %v2173
        %v2175 = vpop.xlane.xlu0 %2174
        %v2176 = vrcp.pop %v2172
        %v2177 = vrcp.pop %v2175
        %v2178 = vmul.f32 %v2167, %v2176
        %v2179 = vmul.f32 %v2169, %v2177
        %v2180 = vpack.c.bf16 %v2178, %v2178
        %v2181 = vpack.c.bf16 %v2179, %v2179
        %v2183 = vsel %vm2157, %v2180, 0
        %vm2185 = vcmask 1043456
        %v2187 = vsel %vm2185, %v2071, 0
        %2189 = vmatprep.subr.bf16.mxu0 0
        %2190 = vmatpush1.bf16.msra.mxu0 %v2187
        %2191 = vmatprep.subr.bf16.mxu0 0
        %2192 = vmatpush1.bf16.msra.mxu0 0
        %2193 = vmatprep.subr.bf16.mxu0 0
        %2194 = vmatpush1.bf16.msra.mxu0 0
        %2195 = vmatprep.subr.bf16.mxu0 0
        %2196 = vmatpush1.bf16.msra.mxu0 0
        %2197 = vmatprep.subr.bf16.mxu0 0
        %2198 = vmatpush1.bf16.msra.mxu0 0
        %2199 = vmatprep.subr.bf16.mxu0 0
        %2200 = vmatpush1.bf16.msra.mxu0 0
        %2201 = vmatprep.subr.bf16.mxu0 0
        %2202 = vmatpush1.bf16.msra.mxu0 0
        %2203 = vmatprep.subr.bf16.mxu0 0
        %2204 = vmatpush1.bf16.msra.mxu0 0
        %2205 = vmatprep.subr.bf16.mxu0 0
        %2206 = vmatpush1.bf16.msra.mxu0 0
        %2207 = vmatprep.subr.bf16.mxu0 0
        %2208 = vmatpush1.bf16.msra.mxu0 0
        %2209 = vmatprep.subr.bf16.mxu0 0
        %2210 = vmatpush1.bf16.msra.mxu0 0
        %2211 = vmatprep.subr.bf16.mxu0 0
        %2212 = vmatpush1.bf16.msra.mxu0 0
        %2213 = vmatprep.subr.bf16.mxu0 0
        %2214 = vmatpush1.bf16.msra.mxu0 0
        %2215 = vmatprep.subr.bf16.mxu0 0
        %2216 = vmatpush1.bf16.msra.mxu0 0
        %2217 = vmatprep.subr.bf16.mxu0 0
        %2218 = vmatpush1.bf16.msra.mxu0 0
        %2219 = vmatprep.subr.bf16.mxu0 0
        %2220 = vmatpush1.bf16.msra.mxu0 0
        %2221 = vmatprep.mubr.bf16.mxu0 0
        %2222 = vmatmul.mubr.bf16.gmra.mrb[0].mxu0 %v2183
        %v2223 = vpop.f32.mrb[0].mxu0
        %v2224 = vadd.f32 0.0, %v2223
        %v2225 = vpop.f32.mrb[0].mxu0
        %v2226 = vpop.f32.mrb[0].mxu0
        %v2227 = vpop.f32.mrb[0].mxu0
        %2228 = vdwg.mxu0
        %v2230 = vsel %vm2157, %v2181, 0
        %v2233 = vsel %vm2185, %v2072, 0
        %2235 = vmatprep.subr.bf16.mxu0 0
        %2236 = vmatpush1.bf16.msra.mxu0 %v2233
        %2237 = vmatprep.subr.bf16.mxu0 0
        %2238 = vmatpush1.bf16.msra.mxu0 0
        %2239 = vmatprep.subr.bf16.mxu0 0
        %2240 = vmatpush1.bf16.msra.mxu0 0
        %2241 = vmatprep.subr.bf16.mxu0 0
        %2242 = vmatpush1.bf16.msra.mxu0 0
        %2243 = vmatprep.subr.bf16.mxu0 0
        %2244 = vmatpush1.bf16.msra.mxu0 0
        %2245 = vmatprep.subr.bf16.mxu0 0
        %2246 = vmatpush1.bf16.msra.mxu0 0
        %2247 = vmatprep.subr.bf16.mxu0 0
        %2248 = vmatpush1.bf16.msra.mxu0 0
        %2249 = vmatprep.subr.bf16.mxu0 0
        %2250 = vmatpush1.bf16.msra.mxu0 0
        %2251 = vmatprep.subr.bf16.mxu0 0
        %2252 = vmatpush1.bf16.msra.mxu0 0
        %2253 = vmatprep.subr.bf16.mxu0 0
        %2254 = vmatpush1.bf16.msra.mxu0 0
        %2255 = vmatprep.subr.bf16.mxu0 0
        %2256 = vmatpush1.bf16.msra.mxu0 0
        %2257 = vmatprep.subr.bf16.mxu0 0
        %2258 = vmatpush1.bf16.msra.mxu0 0
        %2259 = vmatprep.subr.bf16.mxu0 0
        %2260 = vmatpush1.bf16.msra.mxu0 0
        %2261 = vmatprep.subr.bf16.mxu0 0
        %2262 = vmatpush1.bf16.msra.mxu0 0
        %2263 = vmatprep.subr.bf16.mxu0 0
        %2264 = vmatpush1.bf16.msra.mxu0 0
        %2265 = vmatprep.subr.bf16.mxu0 0
        %2266 = vmatpush1.bf16.msra.mxu0 0
        %2267 = vmatprep.mubr.bf16.mxu0 0
        %2268 = vmatmul.mubr.bf16.gmra.mrb[0].mxu0 %v2230
        %v2269 = vpop.f32.mrb[0].mxu0
        %v2270 = vadd.f32 0.0, %v2269
        %v2271 = vpop.f32.mrb[0].mxu0
        %v2272 = vpop.f32.mrb[0].mxu0
        %v2273 = vpop.f32.mrb[0].mxu0
        %2274 = vdwg.mxu0
        %v2275 = vpack.c.bf16 %v2018, %v2018
        %v2276 = vpack.c.bf16 %v2022, %v2022
        %v2277 = vpack.c.bf16 %v2059, %v2059
        %v2278 = vpack.c.bf16 %v2063, %v2063
        %v2279 = vpack.c.bf16 %v2061, %v2061
        %v2280 = vpack.c.bf16 %v2065, %v2065
        %2281 = vmatprep.subr.bf16.mxu0 0
        %2282 = vmatpush1.bf16.xpose.msra.mxu0 %v2277
        %2283 = vmatprep.subr.bf16.mxu0 0
        %2284 = vmatpush1.bf16.xpose.msra.mxu0 0
        %2285 = vmatprep.subr.bf16.mxu0 0
        %2286 = vmatpush1.bf16.xpose.msra.mxu0 0
        %2287 = vmatprep.subr.bf16.mxu0 0
        %2288 = vmatpush1.bf16.xpose.msra.mxu0 0
        %2289 = vmatprep.subr.bf16.mxu0 0
        %2290 = vmatpush1.bf16.xpose.msra.mxu0 0
        %2291 = vmatprep.subr.bf16.mxu0 0
        %2292 = vmatpush1.bf16.xpose.msra.mxu0 0
        %2293 = vmatprep.subr.bf16.mxu0 0
        %2294 = vmatpush1.bf16.xpose.msra.mxu0 0
        %2295 = vmatprep.subr.bf16.mxu0 0
        %2296 = vmatpush1.bf16.xpose.msra.mxu0 0
        %2297 = vmatprep.subr.bf16.mxu0 0
        %2298 = vmatpush1.bf16.xpose.msra.mxu0 0
        %2299 = vmatprep.subr.bf16.mxu0 0
        %2300 = vmatpush1.bf16.xpose.msra.mxu0 0
        %2301 = vmatprep.subr.bf16.mxu0 0
        %2302 = vmatpush1.bf16.xpose.msra.mxu0 0
        %2303 = vmatprep.subr.bf16.mxu0 0
        %2304 = vmatpush1.bf16.xpose.msra.mxu0 0
        %2305 = vmatprep.subr.bf16.mxu0 0
        %2306 = vmatpush1.bf16.xpose.msra.mxu0 0
        %2307 = vmatprep.subr.bf16.mxu0 0
        %2308 = vmatpush1.bf16.xpose.msra.mxu0 0
        %2309 = vmatprep.subr.bf16.mxu0 0
        %2310 = vmatpush1.bf16.xpose.msra.mxu0 0
        %2311 = vmatprep.subr.bf16.mxu0 0
        %2312 = vmatpush1.bf16.xpose.msra.mxu0 0
        %2313 = vmatprep.mubr.bf16.mxu0 0
        %2314 = vmatmul.mubr.bf16.gmra.mrb[0].mxu0 %v2275
        %v2315 = vpop.f32.mrb[0].mxu0
        %v2316 = vadd.f32 0.0, %v2315
        %v2317 = vpop.f32.mrb[0].mxu0
        %v2318 = vpop.f32.mrb[0].mxu0
        %v2319 = vpop.f32.mrb[0].mxu0
        %2320 = vdwg.mxu0
        %2321 = vmatprep.subr.bf16.mxu0 0
        %2322 = vmatpush1.bf16.xpose.msra.mxu0 %v2278
        %2323 = vmatprep.subr.bf16.mxu0 0
        %2324 = vmatpush1.bf16.xpose.msra.mxu0 0
        %2325 = vmatprep.subr.bf16.mxu0 0
        %2326 = vmatpush1.bf16.xpose.msra.mxu0 0
        %2327 = vmatprep.subr.bf16.mxu0 0
        %2328 = vmatpush1.bf16.xpose.msra.mxu0 0
        %2329 = vmatprep.subr.bf16.mxu0 0
        %2330 = vmatpush1.bf16.xpose.msra.mxu0 0
        %2331 = vmatprep.subr.bf16.mxu0 0
        %2332 = vmatpush1.bf16.xpose.msra.mxu0 0
        %2333 = vmatprep.subr.bf16.mxu0 0
        %2334 = vmatpush1.bf16.xpose.msra.mxu0 0
        %2335 = vmatprep.subr.bf16.mxu0 0
        %2336 = vmatpush1.bf16.xpose.msra.mxu0 0
        %2337 = vmatprep.subr.bf16.mxu0 0
        %2338 = vmatpush1.bf16.xpose.msra.mxu0 0
        %2339 = vmatprep.subr.bf16.mxu0 0
        %2340 = vmatpush1.bf16.xpose.msra.mxu0 0
        %2341 = vmatprep.subr.bf16.mxu0 0
        %2342 = vmatpush1.bf16.xpose.msra.mxu0 0
        %2343 = vmatprep.subr.bf16.mxu0 0
        %2344 = vmatpush1.bf16.xpose.msra.mxu0 0
        %2345 = vmatprep.subr.bf16.mxu0 0
        %2346 = vmatpush1.bf16.xpose.msra.mxu0 0
        %2347 = vmatprep.subr.bf16.mxu0 0
        %2348 = vmatpush1.bf16.xpose.msra.mxu0 0
        %2349 = vmatprep.subr.bf16.mxu0 0
        %2350 = vmatpush1.bf16.xpose.msra.mxu0 0
        %2351 = vmatprep.subr.bf16.mxu0 0
        %2352 = vmatpush1.bf16.xpose.msra.mxu0 0
        %2353 = vmatprep.mubr.bf16.mxu0 0
        %2354 = vmatmul.mubr.bf16.gmra.mrb[0].mxu0 %v2276
        %v2355 = vpop.f32.mrb[0].mxu0
        %v2356 = vadd.f32 0.0, %v2355
        %v2357 = vpop.f32.mrb[0].mxu0
        %v2358 = vpop.f32.mrb[0].mxu0
        %v2359 = vpop.f32.mrb[0].mxu0
        %2360 = vdwg.mxu0
        %v2361 = vmul.f32 %v2316, 0.125
        %v2362 = vmul.f32 %v2356, 0.125
        %v2363 = vadd.f32 %v2361, %v1615
        %v2364 = vadd.f32 %v2362, %v1616
        %v2365 = vsel %vm2157, %v2363, -inf
        %2366 = vmax.xlane.f32.xlu0 %v2365
        %v2367 = vpop.xlane.xlu0 %2366
        %v2368 = vsel %vm2157, %v2364, -inf
        %2369 = vmax.xlane.f32.xlu0 %v2368
        %v2370 = vpop.xlane.xlu0 %2369
        %v2371 = vsub.f32 %v2363, %v2367
        %v2372 = vsub.f32 %v2364, %v2370
        %v2373 = vmul.f32 %v2371, 1.442695
        %v2374 = vpow.pop %v2373
        %v2375 = vmul.f32 %v2372, 1.442695
        %v2376 = vpow.pop %v2375
        %v2377 = vsel %vm2157, %v2374, 0.0
        %2378 = vadd.xlane.f32.xlu0 %v2377
        %v2379 = vpop.xlane.xlu0 %2378
        %v2380 = vsel %vm2157, %v2376, 0.0
        %2381 = vadd.xlane.f32.xlu0 %v2380
        %v2382 = vpop.xlane.xlu0 %2381
        %v2383 = vrcp.pop %v2379
        %v2384 = vrcp.pop %v2382
        %v2385 = vmul.f32 %v2374, %v2383
        %v2386 = vmul.f32 %v2376, %v2384
        %v2387 = vpack.c.bf16 %v2385, %v2385
        %v2388 = vpack.c.bf16 %v2386, %v2386
        %v2390 = vsel %vm2157, %v2387, 0
        %v2393 = vsel %vm2185, %v2279, 0
        %2395 = vmatprep.subr.bf16.mxu0 0
        %2396 = vmatpush1.bf16.msra.mxu0 %v2393
        %2397 = vmatprep.subr.bf16.mxu0 0
        %2398 = vmatpush1.bf16.msra.mxu0 0
        %2399 = vmatprep.subr.bf16.mxu0 0
        %2400 = vmatpush1.bf16.msra.mxu0 0
        %2401 = vmatprep.subr.bf16.mxu0 0
        %2402 = vmatpush1.bf16.msra.mxu0 0
        %2403 = vmatprep.subr.bf16.mxu0 0
        %2404 = vmatpush1.bf16.msra.mxu0 0
        %2405 = vmatprep.subr.bf16.mxu0 0
        %2406 = vmatpush1.bf16.msra.mxu0 0
        %2407 = vmatprep.subr.bf16.mxu0 0
        %2408 = vmatpush1.bf16.msra.mxu0 0
        %2409 = vmatprep.subr.bf16.mxu0 0
        %2410 = vmatpush1.bf16.msra.mxu0 0
        %2411 = vmatprep.subr.bf16.mxu0 0
        %2412 = vmatpush1.bf16.msra.mxu0 0
        %2413 = vmatprep.subr.bf16.mxu0 0
        %2414 = vmatpush1.bf16.msra.mxu0 0
        %2415 = vmatprep.subr.bf16.mxu0 0
        %2416 = vmatpush1.bf16.msra.mxu0 0
        %2417 = vmatprep.subr.bf16.mxu0 0
        %2418 = vmatpush1.bf16.msra.mxu0 0
        %2419 = vmatprep.subr.bf16.mxu0 0
        %2420 = vmatpush1.bf16.msra.mxu0 0
        %2421 = vmatprep.subr.bf16.mxu0 0
        %2422 = vmatpush1.bf16.msra.mxu0 0
        %2423 = vmatprep.subr.bf16.mxu0 0
        %2424 = vmatpush1.bf16.msra.mxu0 0
        %2425 = vmatprep.subr.bf16.mxu0 0
        %2426 = vmatpush1.bf16.msra.mxu0 0
        %2427 = vmatprep.mubr.bf16.mxu0 0
        %2428 = vmatmul.mubr.bf16.gmra.mrb[0].mxu0 %v2390
        %v2429 = vpop.f32.mrb[0].mxu0
        %v2430 = vadd.f32 0.0, %v2429
        %v2431 = vpop.f32.mrb[0].mxu0
        %v2432 = vpop.f32.mrb[0].mxu0
        %v2433 = vpop.f32.mrb[0].mxu0
        %2434 = vdwg.mxu0
        %v2436 = vsel %vm2157, %v2388, 0
        %v2439 = vsel %vm2185, %v2280, 0
        %2441 = vmatprep.subr.bf16.mxu0 0
        %2442 = vmatpush1.bf16.msra.mxu0 %v2439
        %2443 = vmatprep.subr.bf16.mxu0 0
        %2444 = vmatpush1.bf16.msra.mxu0 0
        %2445 = vmatprep.subr.bf16.mxu0 0
        %2446 = vmatpush1.bf16.msra.mxu0 0
        %2447 = vmatprep.subr.bf16.mxu0 0
        %2448 = vmatpush1.bf16.msra.mxu0 0
        %2449 = vmatprep.subr.bf16.mxu0 0
        %2450 = vmatpush1.bf16.msra.mxu0 0
        %2451 = vmatprep.subr.bf16.mxu0 0
        %2452 = vmatpush1.bf16.msra.mxu0 0
        %2453 = vmatprep.subr.bf16.mxu0 0
        %2454 = vmatpush1.bf16.msra.mxu0 0
        %2455 = vmatprep.subr.bf16.mxu0 0
        %2456 = vmatpush1.bf16.msra.mxu0 0
        %2457 = vmatprep.subr.bf16.mxu0 0
        %2458 = vmatpush1.bf16.msra.mxu0 0
        %2459 = vmatprep.subr.bf16.mxu0 0
        %2460 = vmatpush1.bf16.msra.mxu0 0
        %2461 = vmatprep.subr.bf16.mxu0 0
        %2462 = vmatpush1.bf16.msra.mxu0 0
        %2463 = vmatprep.subr.bf16.mxu0 0
        %2464 = vmatpush1.bf16.msra.mxu0 0
        %2465 = vmatprep.subr.bf16.mxu0 0
        %2466 = vmatpush1.bf16.msra.mxu0 0
        %2467 = vmatprep.subr.bf16.mxu0 0
        %2468 = vmatpush1.bf16.msra.mxu0 0
        %2469 = vmatprep.subr.bf16.mxu0 0
        %2470 = vmatpush1.bf16.msra.mxu0 0
        %2471 = vmatprep.subr.bf16.mxu0 0
        %2472 = vmatpush1.bf16.msra.mxu0 0
        %2473 = vmatprep.mubr.bf16.mxu0 0
        %2474 = vmatmul.mubr.bf16.gmra.mrb[0].mxu0 %v2436
        %v2475 = vpop.f32.mrb[0].mxu0
        %v2476 = vadd.f32 0.0, %v2475
        %v2477 = vpop.f32.mrb[0].mxu0
        %v2478 = vpop.f32.mrb[0].mxu0
        %v2479 = vpop.f32.mrb[0].mxu0
        %2480 = vdwg.mxu0
        %v2481 = vpack.c.bf16 %v2270, %v2224
        %v2482 = vpack.c.bf16 %v2476, %v2430
        %v2483 = vld [vmem:[%s1321] sm:$0xf]
        %v2484 = vld [vmem:[%s1321 + $0x4] sm:$0xf]
        %v2485 = vld [vmem:[%s1321 + $0x8] sm:$0xf]
        %v2486 = vld [vmem:[%s1321 + $0xc] sm:$0xf]
        %v2487 = vld [vmem:[%s1321 + $0x10] sm:$0xf]
        %v2488 = vld [vmem:[%s1321 + $0x14] sm:$0xf]
        %v2489 = vld [vmem:[%s1321 + $0x18] sm:$0xf]
        %v2490 = vld [vmem:[%s1321 + $0x1c] sm:$0xf]
        %v2491 = vld [vmem:[%s1321 + $0x20] sm:$0xf]
        %v2492 = vld [vmem:[%s1321 + $0x24] sm:$0xf]
        %v2493 = vld [vmem:[%s1321 + $0x28] sm:$0xf]
        %v2494 = vld [vmem:[%s1321 + $0x2c] sm:$0xf]
        %v2495 = vld [vmem:[%s1321 + $0x30] sm:$0xf]
        %v2496 = vld [vmem:[%s1321 + $0x34] sm:$0xf]
        %v2497 = vld [vmem:[%s1321 + $0x38] sm:$0xf]
        %v2498 = vld [vmem:[%s1321 + $0x3c] sm:$0xf]
        %v2499 = vld [vmem:[%s1321 + $0x40] sm:$0xf]
        %v2500 = vld [vmem:[%s1321 + $0x44] sm:$0xf]
        %v2501 = vld [vmem:[%s1321 + $0x48] sm:$0xf]
        %v2502 = vld [vmem:[%s1321 + $0x4c] sm:$0xf]
        %v2503 = vld [vmem:[%s1321 + $0x50] sm:$0xf]
        %v2504 = vld [vmem:[%s1321 + $0x54] sm:$0xf]
        %v2505 = vld [vmem:[%s1321 + $0x58] sm:$0xf]
        %v2506 = vld [vmem:[%s1321 + $0x5c] sm:$0xf]
        %v2507 = vld [vmem:[%s1321 + $0x60] sm:$0xf]
        %v2508 = vld [vmem:[%s1321 + $0x64] sm:$0xf]
        %v2509 = vld [vmem:[%s1321 + $0x68] sm:$0xf]
        %v2510 = vld [vmem:[%s1321 + $0x6c] sm:$0xf]
        %v2511 = vld [vmem:[%s1321 + $0x70] sm:$0xf]
        %v2512 = vld [vmem:[%s1321 + $0x74] sm:$0xf]
        %v2513 = vld [vmem:[%s1321 + $0x78] sm:$0xf]
        %v2514 = vld [vmem:[%s1321 + $0x7c] sm:$0xf]
        %v2515 = vld [vmem:[%s1556] sm:$0x1]
        %v2517 = vlaneseq
        %v2518 = vshrl.u32 %v2517, 7
        %v2519 = vsub.s32 0, %v2518
        %v2520 = vrot.slane %v2515, %v2519
        %v2554 = vunpack.c.l.b16 %v2483
        %v2555 = vunpack.c.l.b16 %v2484
        %v2556 = vunpack.c.l.b16 %v2485
        %v2557 = vunpack.c.l.b16 %v2486
        %v2558 = vunpack.c.l.b16 %v2487
        %v2559 = vunpack.c.l.b16 %v2488
        %v2560 = vunpack.c.l.b16 %v2489
        %v2561 = vunpack.c.l.b16 %v2490
        %v2562 = vunpack.c.l.b16 %v2491
        %v2563 = vunpack.c.l.b16 %v2492
        %v2564 = vunpack.c.l.b16 %v2493
        %v2565 = vunpack.c.l.b16 %v2494
        %v2566 = vunpack.c.l.b16 %v2495
        %v2567 = vunpack.c.l.b16 %v2496
        %v2568 = vunpack.c.l.b16 %v2497
        %v2569 = vunpack.c.l.b16 %v2498
        %v2570 = vunpack.c.l.b16 %v2499
        %v2571 = vunpack.c.l.b16 %v2500
        %v2572 = vunpack.c.l.b16 %v2501
        %v2573 = vunpack.c.l.b16 %v2502
        %v2574 = vunpack.c.l.b16 %v2503
        %v2575 = vunpack.c.l.b16 %v2504
        %v2576 = vunpack.c.l.b16 %v2505
        %v2577 = vunpack.c.l.b16 %v2506
        %v2578 = vunpack.c.l.b16 %v2507
        %v2579 = vunpack.c.l.b16 %v2508
        %v2580 = vunpack.c.l.b16 %v2509
        %v2581 = vunpack.c.l.b16 %v2510
        %v2582 = vunpack.c.l.b16 %v2511
        %v2583 = vunpack.c.l.b16 %v2512
        %v2584 = vunpack.c.l.b16 %v2513
        %v2585 = vunpack.c.l.b16 %v2514
        %v2586 = vpack.c.b16 %v2555, %v2554
        %v2587 = vpack.c.b16 %v2557, %v2556
        %v2588 = vpack.c.b16 %v2559, %v2558
        %v2589 = vpack.c.b16 %v2561, %v2560
        %v2590 = vpack.c.b16 %v2563, %v2562
        %v2591 = vpack.c.b16 %v2565, %v2564
        %v2592 = vpack.c.b16 %v2567, %v2566
        %v2593 = vpack.c.b16 %v2569, %v2568
        %v2594 = vpack.c.b16 %v2571, %v2570
        %v2595 = vpack.c.b16 %v2573, %v2572
        %v2596 = vpack.c.b16 %v2575, %v2574
        %v2597 = vpack.c.b16 %v2577, %v2576
        %v2598 = vpack.c.b16 %v2579, %v2578
        %v2599 = vpack.c.b16 %v2581, %v2580
        %v2600 = vpack.c.b16 %v2583, %v2582
        %v2601 = vpack.c.b16 %v2585, %v2584
        %2618 = vmatprep.subr.bf16.mxu0 0
        %2619 = vmatpush1.bf16.msra.mxu0 %v2586
        %2620 = vmatprep.subr.bf16.mxu0 0
        %2621 = vmatpush1.bf16.msra.mxu0 %v2587
        %2622 = vmatprep.subr.bf16.mxu0 0
        %2623 = vmatpush1.bf16.msra.mxu0 %v2588
        %2624 = vmatprep.subr.bf16.mxu0 0
        %2625 = vmatpush1.bf16.msra.mxu0 %v2589
        %2626 = vmatprep.subr.bf16.mxu0 0
        %2627 = vmatpush1.bf16.msra.mxu0 %v2590
        %2628 = vmatprep.subr.bf16.mxu0 0
        %2629 = vmatpush1.bf16.msra.mxu0 %v2591
        %2630 = vmatprep.subr.bf16.mxu0 0
        %2631 = vmatpush1.bf16.msra.mxu0 %v2592
        %2632 = vmatprep.subr.bf16.mxu0 0
        %2633 = vmatpush1.bf16.msra.mxu0 %v2593
        %2634 = vmatprep.subr.bf16.mxu0 0
        %2635 = vmatpush1.bf16.msra.mxu0 %v2594
        %2636 = vmatprep.subr.bf16.mxu0 0
        %2637 = vmatpush1.bf16.msra.mxu0 %v2595
        %2638 = vmatprep.subr.bf16.mxu0 0
        %2639 = vmatpush1.bf16.msra.mxu0 %v2596
        %2640 = vmatprep.subr.bf16.mxu0 0
        %2641 = vmatpush1.bf16.msra.mxu0 %v2597
        %2642 = vmatprep.subr.bf16.mxu0 0
        %2643 = vmatpush1.bf16.msra.mxu0 %v2598
        %2644 = vmatprep.subr.bf16.mxu0 0
        %2645 = vmatpush1.bf16.msra.mxu0 %v2599
        %2646 = vmatprep.subr.bf16.mxu0 0
        %2647 = vmatpush1.bf16.msra.mxu0 %v2600
        %2648 = vmatprep.subr.bf16.mxu0 0
        %2649 = vmatpush1.bf16.msra.mxu0 %v2601
        %2650 = vmatprep.mubr.bf16.mxu0 %v2482
        %2651 = vmatmul.mubr.bf16.gmra.mrb[0].mxu0 %v2481
        %v2652 = vpop.f32.mrb[0].mxu0
        %v2653 = vadd.f32 %v2520, %v2652
        %v2654 = vpop.f32.mrb[0].mxu0
        %v2655 = vpop.f32.mrb[0].mxu0
        %v2656 = vadd.f32 %v2520, %v2655
        %v2657 = vpop.f32.mrb[0].mxu0
        %2658 = vdwg.mxu0
        %v2659 = vadd.f32 %v1607, %v2653
        %v2660 = vadd.f32 %v1608, %v2656
        %2661 = vadd.xlane.f32.xlu0 %v2659
        %v2662 = vpop.xlane.xlu0 %2661
        %2663 = vadd.xlane.f32.xlu0 %v2660
        %v2664 = vpop.xlane.xlu0 %2663
        %v2665 = vrcp.pop 128.0
        %v2666 = vmul.f32 %v2662, %v2665
        %v2667 = vmul.f32 %v2664, %v2665
        %v2668 = vsub.f32 %v2659, %v2666
        %v2669 = vsub.f32 %v2660, %v2667
        %v2670 = vmul.f32 %v2668, %v2668
        %v2671 = vmul.f32 %v2669, %v2669
        %2672 = vadd.xlane.f32.xlu0 %v2670
        %v2673 = vpop.xlane.xlu0 %2672
        %2674 = vadd.xlane.f32.xlu0 %v2671
        %v2675 = vpop.xlane.xlu0 %2674
        %v2676 = vmul.f32 %v2673, %v2665
        %v2677 = vmul.f32 %v2675, %v2665
        %v2678 = vadd.f32 %v2676, 1e-12
        %v2679 = vadd.f32 %v2677, 1e-12
        %v2680 = vrsqrt.pop %v2678
        %v2681 = vrsqrt.pop %v2679
        %v2682 = vmul.f32 %v2668, %v2680
        %v2683 = vmul.f32 %v2669, %v2681
        %v2684 = vld [vmem:[%s1329] sm:$0x1]
        %v2686 = vlaneseq
        %v2687 = vshrl.u32 %v2686, 7
        %v2688 = vsub.s32 0, %v2687
        %v2689 = vrot.slane %v2684, %v2688
        %v2691 = vmul.f32 %v2682, %v2689
        %v2692 = vmul.f32 %v2683, %v2689
        %v2693 = vld [vmem:[%s1337] sm:$0x1]
        %v2695 = vlaneseq
        %v2696 = vshrl.u32 %v2695, 7
        %v2697 = vsub.s32 0, %v2696
        %v2698 = vrot.slane %v2693, %v2697
        %v2700 = vadd.f32 %v2691, %v2698
        %v2701 = vadd.f32 %v2692, %v2698
        %v2702 = vpack.c.bf16 %v2701, %v2700
        %v2703 = vld [vmem:[%s1346] sm:$0xff]
        %v2704 = vld [vmem:[%s1346 + $0x8] sm:$0xff]
        %v2705 = vld [vmem:[%s1346 + $0x10] sm:$0xff]
        %v2706 = vld [vmem:[%s1346 + $0x18] sm:$0xff]
        %v2707 = vld [vmem:[%s1346 + $0x20] sm:$0xff]
        %v2708 = vld [vmem:[%s1346 + $0x28] sm:$0xff]
        %v2709 = vld [vmem:[%s1346 + $0x30] sm:$0xff]
        %v2710 = vld [vmem:[%s1346 + $0x38] sm:$0xff]
        %v2711 = vld [vmem:[%s1346 + $0x40] sm:$0xff]
        %v2712 = vld [vmem:[%s1346 + $0x48] sm:$0xff]
        %v2713 = vld [vmem:[%s1346 + $0x50] sm:$0xff]
        %v2714 = vld [vmem:[%s1346 + $0x58] sm:$0xff]
        %v2715 = vld [vmem:[%s1346 + $0x60] sm:$0xff]
        %v2716 = vld [vmem:[%s1346 + $0x68] sm:$0xff]
        %v2717 = vld [vmem:[%s1346 + $0x70] sm:$0xff]
        %v2718 = vld [vmem:[%s1346 + $0x78] sm:$0xff]
        %v2719 = vld [vmem:[%s1346 + $0x80] sm:$0xff]
        %v2720 = vld [vmem:[%s1346 + $0x88] sm:$0xff]
        %v2721 = vld [vmem:[%s1346 + $0x90] sm:$0xff]
        %v2722 = vld [vmem:[%s1346 + $0x98] sm:$0xff]
        %v2723 = vld [vmem:[%s1346 + $0xa0] sm:$0xff]
        %v2724 = vld [vmem:[%s1346 + $0xa8] sm:$0xff]
        %v2725 = vld [vmem:[%s1346 + $0xb0] sm:$0xff]
        %v2726 = vld [vmem:[%s1346 + $0xb8] sm:$0xff]
        %v2727 = vld [vmem:[%s1346 + $0xc0] sm:$0xff]
        %v2728 = vld [vmem:[%s1346 + $0xc8] sm:$0xff]
        %v2729 = vld [vmem:[%s1346 + $0xd0] sm:$0xff]
        %v2730 = vld [vmem:[%s1346 + $0xd8] sm:$0xff]
        %v2731 = vld [vmem:[%s1346 + $0xe0] sm:$0xff]
        %v2732 = vld [vmem:[%s1346 + $0xe8] sm:$0xff]
        %v2733 = vld [vmem:[%s1346 + $0xf0] sm:$0xff]
        %v2734 = vld [vmem:[%s1346 + $0xf8] sm:$0xff]
        %v2735 = vld [vmem:[%s1355] sm:$0xf]
        %v2737 = vlaneseq
        %v2738 = vshrl.u32 %v2737, 7
        %v2739 = vsub.s32 0, %v2738
        %v2740 = vrot.slane %v2735, %v2739
        %v2741 = vlaneseq
        %v2742 = vshrl.u32 %v2741, 7
        %v2743 = vsub.s32 1, %v2742
        %v2744 = vrot.slane %v2735, %v2743
        %v2745 = vlaneseq
        %v2746 = vshrl.u32 %v2745, 7
        %v2747 = vsub.s32 2, %v2746
        %v2748 = vrot.slane %v2735, %v2747
        %v2749 = vlaneseq
        %v2750 = vshrl.u32 %v2749, 7
        %v2751 = vsub.s32 3, %v2750
        %v2752 = vrot.slane %v2735, %v2751
        %v2789 = vunpack.c.l.b16 %v2703
        %v2790 = vunpack.c.h.b16 %v2703
        %v2791 = vunpack.c.l.b16 %v2704
        %v2792 = vunpack.c.h.b16 %v2704
        %v2793 = vunpack.c.l.b16 %v2705
        %v2794 = vunpack.c.h.b16 %v2705
        %v2795 = vunpack.c.l.b16 %v2706
        %v2796 = vunpack.c.h.b16 %v2706
        %v2797 = vunpack.c.l.b16 %v2707
        %v2798 = vunpack.c.h.b16 %v2707
        %v2799 = vunpack.c.l.b16 %v2708
        %v2800 = vunpack.c.h.b16 %v2708
        %v2801 = vunpack.c.l.b16 %v2709
        %v2802 = vunpack.c.h.b16 %v2709
        %v2803 = vunpack.c.l.b16 %v2710
        %v2804 = vunpack.c.h.b16 %v2710
        %v2805 = vunpack.c.l.b16 %v2711
        %v2806 = vunpack.c.h.b16 %v2711
        %v2807 = vunpack.c.l.b16 %v2712
        %v2808 = vunpack.c.h.b16 %v2712
        %v2809 = vunpack.c.l.b16 %v2713
        %v2810 = vunpack.c.h.b16 %v2713
        %v2811 = vunpack.c.l.b16 %v2714
        %v2812 = vunpack.c.h.b16 %v2714
        %v2813 = vunpack.c.l.b16 %v2715
        %v2814 = vunpack.c.h.b16 %v2715
        %v2815 = vunpack.c.l.b16 %v2716
        %v2816 = vunpack.c.h.b16 %v2716
        %v2817 = vunpack.c.l.b16 %v2717
        %v2818 = vunpack.c.h.b16 %v2717
        %v2819 = vunpack.c.l.b16 %v2718
        %v2820 = vunpack.c.h.b16 %v2718
        %v2821 = vunpack.c.l.b16 %v2719
        %v2822 = vunpack.c.h.b16 %v2719
        %v2823 = vunpack.c.l.b16 %v2720
        %v2824 = vunpack.c.h.b16 %v2720
        %v2825 = vunpack.c.l.b16 %v2721
        %v2826 = vunpack.c.h.b16 %v2721
        %v2827 = vunpack.c.l.b16 %v2722
        %v2828 = vunpack.c.h.b16 %v2722
        %v2829 = vunpack.c.l.b16 %v2723
        %v2830 = vunpack.c.h.b16 %v2723
        %v2831 = vunpack.c.l.b16 %v2724
        %v2832 = vunpack.c.h.b16 %v2724
        %v2833 = vunpack.c.l.b16 %v2725
        %v2834 = vunpack.c.h.b16 %v2725
        %v2835 = vunpack.c.l.b16 %v2726
        %v2836 = vunpack.c.h.b16 %v2726
        %v2837 = vunpack.c.l.b16 %v2727
        %v2838 = vunpack.c.h.b16 %v2727
        %v2839 = vunpack.c.l.b16 %v2728
        %v2840 = vunpack.c.h.b16 %v2728
        %v2841 = vunpack.c.l.b16 %v2729
        %v2842 = vunpack.c.h.b16 %v2729
        %v2843 = vunpack.c.l.b16 %v2730
        %v2844 = vunpack.c.h.b16 %v2730
        %v2845 = vunpack.c.l.b16 %v2731
        %v2846 = vunpack.c.h.b16 %v2731
        %v2847 = vunpack.c.l.b16 %v2732
        %v2848 = vunpack.c.h.b16 %v2732
        %v2849 = vunpack.c.l.b16 %v2733
        %v2850 = vunpack.c.h.b16 %v2733
        %v2851 = vunpack.c.l.b16 %v2734
        %v2852 = vunpack.c.h.b16 %v2734
        %v2853 = vpack.c.b16 %v2793, %v2789
        %v2854 = vpack.c.b16 %v2794, %v2790
        %v2855 = vpack.c.b16 %v2795, %v2791
        %v2856 = vpack.c.b16 %v2796, %v2792
        %v2857 = vpack.c.b16 %v2801, %v2797
        %v2858 = vpack.c.b16 %v2802, %v2798
        %v2859 = vpack.c.b16 %v2803, %v2799
        %v2860 = vpack.c.b16 %v2804, %v2800
        %v2861 = vpack.c.b16 %v2809, %v2805
        %v2862 = vpack.c.b16 %v2810, %v2806
        %v2863 = vpack.c.b16 %v2811, %v2807
        %v2864 = vpack.c.b16 %v2812, %v2808
        %v2865 = vpack.c.b16 %v2817, %v2813
        %v2866 = vpack.c.b16 %v2818, %v2814
        %v2867 = vpack.c.b16 %v2819, %v2815
        %v2868 = vpack.c.b16 %v2820, %v2816
        %v2869 = vpack.c.b16 %v2825, %v2821
        %v2870 = vpack.c.b16 %v2826, %v2822
        %v2871 = vpack.c.b16 %v2827, %v2823
        %v2872 = vpack.c.b16 %v2828, %v2824
        %v2873 = vpack.c.b16 %v2833, %v2829
        %v2874 = vpack.c.b16 %v2834, %v2830
        %v2875 = vpack.c.b16 %v2835, %v2831
        %v2876 = vpack.c.b16 %v2836, %v2832
        %v2877 = vpack.c.b16 %v2841, %v2837
        %v2878 = vpack.c.b16 %v2842, %v2838
        %v2879 = vpack.c.b16 %v2843, %v2839
        %v2880 = vpack.c.b16 %v2844, %v2840
        %v2881 = vpack.c.b16 %v2849, %v2845
        %v2882 = vpack.c.b16 %v2850, %v2846
        %v2883 = vpack.c.b16 %v2851, %v2847
        %v2884 = vpack.c.b16 %v2852, %v2848
        %2917 = vmatprep.subr.bf16.mxu0 %v2854
        %2918 = vmatpush1.bf16.msra.mxu0 %v2853
        %2919 = vmatprep.subr.bf16.mxu0 %v2858
        %2920 = vmatpush1.bf16.msra.mxu0 %v2857
        %2921 = vmatprep.subr.bf16.mxu0 %v2862
        %2922 = vmatpush1.bf16.msra.mxu0 %v2861
        %2923 = vmatprep.subr.bf16.mxu0 %v2866
        %2924 = vmatpush1.bf16.msra.mxu0 %v2865
        %2925 = vmatprep.subr.bf16.mxu0 %v2870
        %2926 = vmatpush1.bf16.msra.mxu0 %v2869
        %2927 = vmatprep.subr.bf16.mxu0 %v2874
        %2928 = vmatpush1.bf16.msra.mxu0 %v2873
        %2929 = vmatprep.subr.bf16.mxu0 %v2878
        %2930 = vmatpush1.bf16.msra.mxu0 %v2877
        %2931 = vmatprep.subr.bf16.mxu0 %v2882
        %2932 = vmatpush1.bf16.msra.mxu0 %v2881
        %2933 = vmatprep.subr.bf16.mxu0 0
        %2934 = vmatpush1.bf16.msra.mxu0 0
        %2935 = vmatprep.subr.bf16.mxu0 0
        %2936 = vmatpush1.bf16.msra.mxu0 0
        %2937 = vmatprep.subr.bf16.mxu0 0
        %2938 = vmatpush1.bf16.msra.mxu0 0
        %2939 = vmatprep.subr.bf16.mxu0 0
        %2940 = vmatpush1.bf16.msra.mxu0 0
        %2941 = vmatprep.subr.bf16.mxu0 0
        %2942 = vmatpush1.bf16.msra.mxu0 0
        %2943 = vmatprep.subr.bf16.mxu0 0
        %2944 = vmatpush1.bf16.msra.mxu0 0
        %2945 = vmatprep.subr.bf16.mxu0 0
        %2946 = vmatpush1.bf16.msra.mxu0 0
        %2947 = vmatprep.subr.bf16.mxu0 0
        %2948 = vmatpush1.bf16.msra.mxu0 0
        %2949 = vmatprep.mubr.bf16.mxu0 0
        %2950 = vmatmul.mubr.bf16.gmra.mrb[0].mxu0 %v2702
        %v2951 = vpop.f32.mrb[0].mxu0
        %v2952 = vadd.f32 %v2740, %v2951
        %v2953 = vpop.f32.mrb[0].mxu0
        %v2954 = vadd.f32 %v2744, %v2953
        %v2955 = vpop.f32.mrb[0].mxu0
        %v2956 = vadd.f32 %v2740, %v2955
        %v2957 = vpop.f32.mrb[0].mxu0
        %v2958 = vadd.f32 %v2744, %v2957
        %2959 = vdwg.mxu0
        %2960 = vmatprep.subr.bf16.mxu0 %v2856
        %2961 = vmatpush1.bf16.msra.mxu0 %v2855
        %2962 = vmatprep.subr.bf16.mxu0 %v2860
        %2963 = vmatpush1.bf16.msra.mxu0 %v2859
        %2964 = vmatprep.subr.bf16.mxu0 %v2864
        %2965 = vmatpush1.bf16.msra.mxu0 %v2863
        %2966 = vmatprep.subr.bf16.mxu0 %v2868
        %2967 = vmatpush1.bf16.msra.mxu0 %v2867
        %2968 = vmatprep.subr.bf16.mxu0 %v2872
        %2969 = vmatpush1.bf16.msra.mxu0 %v2871
        %2970 = vmatprep.subr.bf16.mxu0 %v2876
        %2971 = vmatpush1.bf16.msra.mxu0 %v2875
        %2972 = vmatprep.subr.bf16.mxu0 %v2880
        %2973 = vmatpush1.bf16.msra.mxu0 %v2879
        %2974 = vmatprep.subr.bf16.mxu0 %v2884
        %2975 = vmatpush1.bf16.msra.mxu0 %v2883
        %2976 = vmatprep.subr.bf16.mxu0 0
        %2977 = vmatpush1.bf16.msra.mxu0 0
        %2978 = vmatprep.subr.bf16.mxu0 0
        %2979 = vmatpush1.bf16.msra.mxu0 0
        %2980 = vmatprep.subr.bf16.mxu0 0
        %2981 = vmatpush1.bf16.msra.mxu0 0
        %2982 = vmatprep.subr.bf16.mxu0 0
        %2983 = vmatpush1.bf16.msra.mxu0 0
        %2984 = vmatprep.subr.bf16.mxu0 0
        %2985 = vmatpush1.bf16.msra.mxu0 0
        %2986 = vmatprep.subr.bf16.mxu0 0
        %2987 = vmatpush1.bf16.msra.mxu0 0
        %2988 = vmatprep.subr.bf16.mxu0 0
        %2989 = vmatpush1.bf16.msra.mxu0 0
        %2990 = vmatprep.subr.bf16.mxu0 0
        %2991 = vmatpush1.bf16.msra.mxu0 0
        %2992 = vmatprep.mubr.bf16.mxu0 0
        %2993 = vmatmul.mubr.bf16.gmra.mrb[0].mxu0 %v2702
        %v2994 = vpop.f32.mrb[0].mxu0
        %v2995 = vadd.f32 %v2748, %v2994
        %v2996 = vpop.f32.mrb[0].mxu0
        %v2997 = vadd.f32 %v2752, %v2996
        %v2998 = vpop.f32.mrb[0].mxu0
        %v2999 = vadd.f32 %v2748, %v2998
        %v3000 = vpop.f32.mrb[0].mxu0
        %v3001 = vadd.f32 %v2752, %v3000
        %3002 = vdwg.mxu0
        %v3003 = vmul.f32 %v2952, 0.5
        %v3004 = vmul.f32 %v2954, 0.5
        %v3005 = vmul.f32 %v2995, 0.5
        %v3006 = vmul.f32 %v2997, 0.5
        %v3007 = vmul.f32 %v2956, 0.5
        %v3008 = vmul.f32 %v2958, 0.5
        %v3009 = vmul.f32 %v2999, 0.5
        %v3010 = vmul.f32 %v3001, 0.5
        %v3011 = vmul.f32 %v2952, %v2952
        %v3012 = vmul.f32 %v2954, %v2954
        %v3013 = vmul.f32 %v2995, %v2995
        %v3014 = vmul.f32 %v2997, %v2997
        %v3015 = vmul.f32 %v2956, %v2956
        %v3016 = vmul.f32 %v2958, %v2958
        %v3017 = vmul.f32 %v2999, %v2999
        %v3018 = vmul.f32 %v3001, %v3001
        %v3019 = vmul.f32 %v2952, %v3011
        %v3020 = vmul.f32 %v2954, %v3012
        %v3021 = vmul.f32 %v2995, %v3013
        %v3022 = vmul.f32 %v2997, %v3014
        %v3023 = vmul.f32 %v2956, %v3015
        %v3024 = vmul.f32 %v2958, %v3016
        %v3025 = vmul.f32 %v2999, %v3017
        %v3026 = vmul.f32 %v3001, %v3018
        %v3027 = vmul.f32 %v3019, 0.044715
        %v3028 = vmul.f32 %v3020, 0.044715
        %v3029 = vmul.f32 %v3021, 0.044715
        %v3030 = vmul.f32 %v3022, 0.044715
        %v3031 = vmul.f32 %v3023, 0.044715
        %v3032 = vmul.f32 %v3024, 0.044715
        %v3033 = vmul.f32 %v3025, 0.044715
        %v3034 = vmul.f32 %v3026, 0.044715
        %v3035 = vadd.f32 %v2952, %v3027
        %v3036 = vadd.f32 %v2954, %v3028
        %v3037 = vadd.f32 %v2995, %v3029
        %v3038 = vadd.f32 %v2997, %v3030
        %v3039 = vadd.f32 %v2956, %v3031
        %v3040 = vadd.f32 %v2958, %v3032
        %v3041 = vadd.f32 %v2999, %v3033
        %v3042 = vadd.f32 %v3001, %v3034
        %v3043 = vmul.f32 %v3035, 0.7978846
        %v3044 = vmul.f32 %v3036, 0.7978846
        %v3045 = vmul.f32 %v3037, 0.7978846
        %v3046 = vmul.f32 %v3038, 0.7978846
        %v3047 = vmul.f32 %v3039, 0.7978846
        %v3048 = vmul.f32 %v3040, 0.7978846
        %v3049 = vmul.f32 %v3041, 0.7978846
        %v3050 = vmul.f32 %v3042, 0.7978846
        %v3051 = vtanh.pop %v3043
        %v3052 = vtanh.pop %v3044
        %v3053 = vtanh.pop %v3045
        %v3054 = vtanh.pop %v3046
        %v3055 = vtanh.pop %v3047
        %v3056 = vtanh.pop %v3048
        %v3057 = vtanh.pop %v3049
        %v3058 = vtanh.pop %v3050
        %v3059 = vadd.f32 %v3051, 1.0
        %v3060 = vadd.f32 %v3052, 1.0
        %v3061 = vadd.f32 %v3053, 1.0
        %v3062 = vadd.f32 %v3054, 1.0
        %v3063 = vadd.f32 %v3055, 1.0
        %v3064 = vadd.f32 %v3056, 1.0
        %v3065 = vadd.f32 %v3057, 1.0
        %v3066 = vadd.f32 %v3058, 1.0
        %v3067 = vmul.f32 %v3003, %v3059
        %v3068 = vmul.f32 %v3004, %v3060
        %v3069 = vmul.f32 %v3005, %v3061
        %v3070 = vmul.f32 %v3006, %v3062
        %v3071 = vmul.f32 %v3007, %v3063
        %v3072 = vmul.f32 %v3008, %v3064
        %v3073 = vmul.f32 %v3009, %v3065
        %v3074 = vmul.f32 %v3010, %v3066
        %v3075 = vpack.c.bf16 %v3071, %v3067
        %v3076 = vpack.c.bf16 %v3072, %v3068
        %v3077 = vpack.c.bf16 %v3073, %v3069
        %v3078 = vpack.c.bf16 %v3074, %v3070
        %v3079 = vld [vmem:[%s1364] sm:$0xf]
        %v3080 = vld [vmem:[%s1364 + $0x4] sm:$0xf]
        %v3081 = vld [vmem:[%s1364 + $0x8] sm:$0xf]
        %v3082 = vld [vmem:[%s1364 + $0xc] sm:$0xf]
        %v3083 = vld [vmem:[%s1364 + $0x10] sm:$0xf]
        %v3084 = vld [vmem:[%s1364 + $0x14] sm:$0xf]
        %v3085 = vld [vmem:[%s1364 + $0x18] sm:$0xf]
        %v3086 = vld [vmem:[%s1364 + $0x1c] sm:$0xf]
        %v3087 = vld [vmem:[%s1364 + $0x20] sm:$0xf]
        %v3088 = vld [vmem:[%s1364 + $0x24] sm:$0xf]
        %v3089 = vld [vmem:[%s1364 + $0x28] sm:$0xf]
        %v3090 = vld [vmem:[%s1364 + $0x2c] sm:$0xf]
        %v3091 = vld [vmem:[%s1364 + $0x30] sm:$0xf]
        %v3092 = vld [vmem:[%s1364 + $0x34] sm:$0xf]
        %v3093 = vld [vmem:[%s1364 + $0x38] sm:$0xf]
        %v3094 = vld [vmem:[%s1364 + $0x3c] sm:$0xf]
        %v3095 = vld [vmem:[%s1364 + $0x40] sm:$0xf]
        %v3096 = vld [vmem:[%s1364 + $0x44] sm:$0xf]
        %v3097 = vld [vmem:[%s1364 + $0x48] sm:$0xf]
        %v3098 = vld [vmem:[%s1364 + $0x4c] sm:$0xf]
        %v3099 = vld [vmem:[%s1364 + $0x50] sm:$0xf]
        %v3100 = vld [vmem:[%s1364 + $0x54] sm:$0xf]
        %v3101 = vld [vmem:[%s1364 + $0x58] sm:$0xf]
        %v3102 = vld [vmem:[%s1364 + $0x5c] sm:$0xf]
        %v3103 = vld [vmem:[%s1364 + $0x60] sm:$0xf]
        %v3104 = vld [vmem:[%s1364 + $0x64] sm:$0xf]
        %v3105 = vld [vmem:[%s1364 + $0x68] sm:$0xf]
        %v3106 = vld [vmem:[%s1364 + $0x6c] sm:$0xf]
        %v3107 = vld [vmem:[%s1364 + $0x70] sm:$0xf]
        %v3108 = vld [vmem:[%s1364 + $0x74] sm:$0xf]
        %v3109 = vld [vmem:[%s1364 + $0x78] sm:$0xf]
        %v3110 = vld [vmem:[%s1364 + $0x7c] sm:$0xf]
        %v3111 = vld [vmem:[%s1364 + $0x80] sm:$0xf]
        %v3112 = vld [vmem:[%s1364 + $0x84] sm:$0xf]
        %v3113 = vld [vmem:[%s1364 + $0x88] sm:$0xf]
        %v3114 = vld [vmem:[%s1364 + $0x8c] sm:$0xf]
        %v3115 = vld [vmem:[%s1364 + $0x90] sm:$0xf]
        %v3116 = vld [vmem:[%s1364 + $0x94] sm:$0xf]
        %v3117 = vld [vmem:[%s1364 + $0x98] sm:$0xf]
        %v3118 = vld [vmem:[%s1364 + $0x9c] sm:$0xf]
        %v3119 = vld [vmem:[%s1364 + $0xa0] sm:$0xf]
        %v3120 = vld [vmem:[%s1364 + $0xa4] sm:$0xf]
        %v3121 = vld [vmem:[%s1364 + $0xa8] sm:$0xf]
        %v3122 = vld [vmem:[%s1364 + $0xac] sm:$0xf]
        %v3123 = vld [vmem:[%s1364 + $0xb0] sm:$0xf]
        %v3124 = vld [vmem:[%s1364 + $0xb4] sm:$0xf]
        %v3125 = vld [vmem:[%s1364 + $0xb8] sm:$0xf]
        %v3126 = vld [vmem:[%s1364 + $0xbc] sm:$0xf]
        %v3127 = vld [vmem:[%s1364 + $0xc0] sm:$0xf]
        %v3128 = vld [vmem:[%s1364 + $0xc4] sm:$0xf]
        %v3129 = vld [vmem:[%s1364 + $0xc8] sm:$0xf]
        %v3130 = vld [vmem:[%s1364 + $0xcc] sm:$0xf]
        %v3131 = vld [vmem:[%s1364 + $0xd0] sm:$0xf]
        %v3132 = vld [vmem:[%s1364 + $0xd4] sm:$0xf]
        %v3133 = vld [vmem:[%s1364 + $0xd8] sm:$0xf]
        %v3134 = vld [vmem:[%s1364 + $0xdc] sm:$0xf]
        %v3135 = vld [vmem:[%s1364 + $0xe0] sm:$0xf]
        %v3136 = vld [vmem:[%s1364 + $0xe4] sm:$0xf]
        %v3137 = vld [vmem:[%s1364 + $0xe8] sm:$0xf]
        %v3138 = vld [vmem:[%s1364 + $0xec] sm:$0xf]
        %v3139 = vld [vmem:[%s1364 + $0xf0] sm:$0xf]
        %v3140 = vld [vmem:[%s1364 + $0xf4] sm:$0xf]
        %v3141 = vld [vmem:[%s1364 + $0xf8] sm:$0xf]
        %v3142 = vld [vmem:[%s1364 + $0xfc] sm:$0xf]
        %v3143 = vld [vmem:[%s1372] sm:$0x1]
        %v3145 = vlaneseq
        %v3146 = vshrl.u32 %v3145, 7
        %v3147 = vsub.s32 0, %v3146
        %v3148 = vrot.slane %v3143, %v3147
        %v3214 = vunpack.c.l.b16 %v3079
        %v3215 = vunpack.c.l.b16 %v3080
        %v3216 = vunpack.c.l.b16 %v3081
        %v3217 = vunpack.c.l.b16 %v3082
        %v3218 = vunpack.c.l.b16 %v3083
        %v3219 = vunpack.c.l.b16 %v3084
        %v3220 = vunpack.c.l.b16 %v3085
        %v3221 = vunpack.c.l.b16 %v3086
        %v3222 = vunpack.c.l.b16 %v3087
        %v3223 = vunpack.c.l.b16 %v3088
        %v3224 = vunpack.c.l.b16 %v3089
        %v3225 = vunpack.c.l.b16 %v3090
        %v3226 = vunpack.c.l.b16 %v3091
        %v3227 = vunpack.c.l.b16 %v3092
        %v3228 = vunpack.c.l.b16 %v3093
        %v3229 = vunpack.c.l.b16 %v3094
        %v3230 = vunpack.c.l.b16 %v3095
        %v3231 = vunpack.c.l.b16 %v3096
        %v3232 = vunpack.c.l.b16 %v3097
        %v3233 = vunpack.c.l.b16 %v3098
        %v3234 = vunpack.c.l.b16 %v3099
        %v3235 = vunpack.c.l.b16 %v3100
        %v3236 = vunpack.c.l.b16 %v3101
        %v3237 = vunpack.c.l.b16 %v3102
        %v3238 = vunpack.c.l.b16 %v3103
        %v3239 = vunpack.c.l.b16 %v3104
        %v3240 = vunpack.c.l.b16 %v3105
        %v3241 = vunpack.c.l.b16 %v3106
        %v3242 = vunpack.c.l.b16 %v3107
        %v3243 = vunpack.c.l.b16 %v3108
        %v3244 = vunpack.c.l.b16 %v3109
        %v3245 = vunpack.c.l.b16 %v3110
        %v3246 = vunpack.c.l.b16 %v3111
        %v3247 = vunpack.c.l.b16 %v3112
        %v3248 = vunpack.c.l.b16 %v3113
        %v3249 = vunpack.c.l.b16 %v3114
        %v3250 = vunpack.c.l.b16 %v3115
        %v3251 = vunpack.c.l.b16 %v3116
        %v3252 = vunpack.c.l.b16 %v3117
        %v3253 = vunpack.c.l.b16 %v3118
        %v3254 = vunpack.c.l.b16 %v3119
        %v3255 = vunpack.c.l.b16 %v3120
        %v3256 = vunpack.c.l.b16 %v3121
        %v3257 = vunpack.c.l.b16 %v3122
        %v3258 = vunpack.c.l.b16 %v3123
        %v3259 = vunpack.c.l.b16 %v3124
        %v3260 = vunpack.c.l.b16 %v3125
        %v3261 = vunpack.c.l.b16 %v3126
        %v3262 = vunpack.c.l.b16 %v3127
        %v3263 = vunpack.c.l.b16 %v3128
        %v3264 = vunpack.c.l.b16 %v3129
        %v3265 = vunpack.c.l.b16 %v3130
        %v3266 = vunpack.c.l.b16 %v3131
        %v3267 = vunpack.c.l.b16 %v3132
        %v3268 = vunpack.c.l.b16 %v3133
        %v3269 = vunpack.c.l.b16 %v3134
        %v3270 = vunpack.c.l.b16 %v3135
        %v3271 = vunpack.c.l.b16 %v3136
        %v3272 = vunpack.c.l.b16 %v3137
        %v3273 = vunpack.c.l.b16 %v3138
        %v3274 = vunpack.c.l.b16 %v3139
        %v3275 = vunpack.c.l.b16 %v3140
        %v3276 = vunpack.c.l.b16 %v3141
        %v3277 = vunpack.c.l.b16 %v3142
        %v3278 = vpack.c.b16 %v3215, %v3214
        %v3279 = vpack.c.b16 %v3217, %v3216
        %v3280 = vpack.c.b16 %v3219, %v3218
        %v3281 = vpack.c.b16 %v3221, %v3220
        %v3282 = vpack.c.b16 %v3223, %v3222
        %v3283 = vpack.c.b16 %v3225, %v3224
        %v3284 = vpack.c.b16 %v3227, %v3226
        %v3285 = vpack.c.b16 %v3229, %v3228
        %v3286 = vpack.c.b16 %v3231, %v3230
        %v3287 = vpack.c.b16 %v3233, %v3232
        %v3288 = vpack.c.b16 %v3235, %v3234
        %v3289 = vpack.c.b16 %v3237, %v3236
        %v3290 = vpack.c.b16 %v3239, %v3238
        %v3291 = vpack.c.b16 %v3241, %v3240
        %v3292 = vpack.c.b16 %v3243, %v3242
        %v3293 = vpack.c.b16 %v3245, %v3244
        %v3294 = vpack.c.b16 %v3247, %v3246
        %v3295 = vpack.c.b16 %v3249, %v3248
        %v3296 = vpack.c.b16 %v3251, %v3250
        %v3297 = vpack.c.b16 %v3253, %v3252
        %v3298 = vpack.c.b16 %v3255, %v3254
        %v3299 = vpack.c.b16 %v3257, %v3256
        %v3300 = vpack.c.b16 %v3259, %v3258
        %v3301 = vpack.c.b16 %v3261, %v3260
        %v3302 = vpack.c.b16 %v3263, %v3262
        %v3303 = vpack.c.b16 %v3265, %v3264
        %v3304 = vpack.c.b16 %v3267, %v3266
        %v3305 = vpack.c.b16 %v3269, %v3268
        %v3306 = vpack.c.b16 %v3271, %v3270
        %v3307 = vpack.c.b16 %v3273, %v3272
        %v3308 = vpack.c.b16 %v3275, %v3274
        %v3309 = vpack.c.b16 %v3277, %v3276
        %3342 = vmatprep.subr.bf16.mxu0 0
        %3343 = vmatpush1.bf16.msra.mxu0 %v3278
        %3344 = vmatprep.subr.bf16.mxu0 0
        %3345 = vmatpush1.bf16.msra.mxu0 %v3279
        %3346 = vmatprep.subr.bf16.mxu0 0
        %3347 = vmatpush1.bf16.msra.mxu0 %v3280
        %3348 = vmatprep.subr.bf16.mxu0 0
        %3349 = vmatpush1.bf16.msra.mxu0 %v3281
        %3350 = vmatprep.subr.bf16.mxu0 0
        %3351 = vmatpush1.bf16.msra.mxu0 %v3282
        %3352 = vmatprep.subr.bf16.mxu0 0
        %3353 = vmatpush1.bf16.msra.mxu0 %v3283
        %3354 = vmatprep.subr.bf16.mxu0 0
        %3355 = vmatpush1.bf16.msra.mxu0 %v3284
        %3356 = vmatprep.subr.bf16.mxu0 0
        %3357 = vmatpush1.bf16.msra.mxu0 %v3285
        %3358 = vmatprep.subr.bf16.mxu0 0
        %3359 = vmatpush1.bf16.msra.mxu0 %v3286
        %3360 = vmatprep.subr.bf16.mxu0 0
        %3361 = vmatpush1.bf16.msra.mxu0 %v3287
        %3362 = vmatprep.subr.bf16.mxu0 0
        %3363 = vmatpush1.bf16.msra.mxu0 %v3288
        %3364 = vmatprep.subr.bf16.mxu0 0
        %3365 = vmatpush1.bf16.msra.mxu0 %v3289
        %3366 = vmatprep.subr.bf16.mxu0 0
        %3367 = vmatpush1.bf16.msra.mxu0 %v3290
        %3368 = vmatprep.subr.bf16.mxu0 0
        %3369 = vmatpush1.bf16.msra.mxu0 %v3291
        %3370 = vmatprep.subr.bf16.mxu0 0
        %3371 = vmatpush1.bf16.msra.mxu0 %v3292
        %3372 = vmatprep.subr.bf16.mxu0 0
        %3373 = vmatpush1.bf16.msra.mxu0 %v3293
        %3374 = vmatprep.mubr.bf16.mxu0 %v3076
        %3375 = vmatmul.mubr.bf16.gmra.mrb[0].mxu0 %v3075
        %v3376 = vpop.f32.mrb[0].mxu0
        %v3377 = vadd.f32 %v3148, %v3376
        %v3378 = vpop.f32.mrb[0].mxu0
        %v3379 = vpop.f32.mrb[0].mxu0
        %v3380 = vadd.f32 %v3148, %v3379
        %v3381 = vpop.f32.mrb[0].mxu0
        %3382 = vdwg.mxu0
        %3383 = vmatprep.subr.bf16.mxu0 0
        %3384 = vmatpush1.bf16.msra.mxu0 %v3294
        %3385 = vmatprep.subr.bf16.mxu0 0
        %3386 = vmatpush1.bf16.msra.mxu0 %v3295
        %3387 = vmatprep.subr.bf16.mxu0 0
        %3388 = vmatpush1.bf16.msra.mxu0 %v3296
        %3389 = vmatprep.subr.bf16.mxu0 0
        %3390 = vmatpush1.bf16.msra.mxu0 %v3297
        %3391 = vmatprep.subr.bf16.mxu0 0
        %3392 = vmatpush1.bf16.msra.mxu0 %v3298
        %3393 = vmatprep.subr.bf16.mxu0 0
        %3394 = vmatpush1.bf16.msra.mxu0 %v3299
        %3395 = vmatprep.subr.bf16.mxu0 0
        %3396 = vmatpush1.bf16.msra.mxu0 %v3300
        %3397 = vmatprep.subr.bf16.mxu0 0
        %3398 = vmatpush1.bf16.msra.mxu0 %v3301
        %3399 = vmatprep.subr.bf16.mxu0 0
        %3400 = vmatpush1.bf16.msra.mxu0 %v3302
        %3401 = vmatprep.subr.bf16.mxu0 0
        %3402 = vmatpush1.bf16.msra.mxu0 %v3303
        %3403 = vmatprep.subr.bf16.mxu0 0
        %3404 = vmatpush1.bf16.msra.mxu0 %v3304
        %3405 = vmatprep.subr.bf16.mxu0 0
        %3406 = vmatpush1.bf16.msra.mxu0 %v3305
        %3407 = vmatprep.subr.bf16.mxu0 0
        %3408 = vmatpush1.bf16.msra.mxu0 %v3306
        %3409 = vmatprep.subr.bf16.mxu0 0
        %3410 = vmatpush1.bf16.msra.mxu0 %v3307
        %3411 = vmatprep.subr.bf16.mxu0 0
        %3412 = vmatpush1.bf16.msra.mxu0 %v3308
        %3413 = vmatprep.subr.bf16.mxu0 0
        %3414 = vmatpush1.bf16.msra.mxu0 %v3309
        %3415 = vmatprep.mubr.bf16.mxu0 %v3078
        %3416 = vmatmul.mubr.bf16.gmra.mrb[0].mxu0 %v3077
        %v3417 = vpop.f32.mrb[0].mxu0
        %v3418 = vadd.f32 %v3377, %v3417
        %v3419 = vpop.f32.mrb[0].mxu0
        %v3420 = vpop.f32.mrb[0].mxu0
        %v3421 = vadd.f32 %v3380, %v3420
        %v3422 = vpop.f32.mrb[0].mxu0
        %3423 = vdwg.mxu0
        %v3424 = vadd.f32 %v2700, %v3418
        %v3425 = vadd.f32 %v2701, %v3421
        %3426 = vadd.xlane.f32.xlu0 %v3424
        %v3427 = vpop.xlane.xlu0 %3426
        %3428 = vadd.xlane.f32.xlu0 %v3425
        %v3429 = vpop.xlane.xlu0 %3428
        %v3430 = vmul.f32 %v3427, %v2665
        %v3431 = vmul.f32 %v3429, %v2665
        %v3432 = vsub.f32 %v3424, %v3430
        %v3433 = vsub.f32 %v3425, %v3431
        %v3434 = vmul.f32 %v3432, %v3432
        %v3435 = vmul.f32 %v3433, %v3433
        %3436 = vadd.xlane.f32.xlu0 %v3434
        %v3437 = vpop.xlane.xlu0 %3436
        %3438 = vadd.xlane.f32.xlu0 %v3435
        %v3439 = vpop.xlane.xlu0 %3438
        %v3440 = vmul.f32 %v3437, %v2665
        %v3441 = vmul.f32 %v3439, %v2665
        %v3442 = vadd.f32 %v3440, 1e-12
        %v3443 = vadd.f32 %v3441, 1e-12
        %v3444 = vrsqrt.pop %v3442
        %v3445 = vrsqrt.pop %v3443
        %v3446 = vmul.f32 %v3432, %v3444
        %v3447 = vmul.f32 %v3433, %v3445
        %v3448 = vld [vmem:[%s1380] sm:$0x1]
        %v3450 = vlaneseq
        %v3451 = vshrl.u32 %v3450, 7
        %v3452 = vsub.s32 0, %v3451
        %v3453 = vrot.slane %v3448, %v3452
        %v3455 = vmul.f32 %v3446, %v3453
        %v3456 = vmul.f32 %v3447, %v3453
        %v3457 = vld [vmem:[%s1388] sm:$0x1]
        %v3459 = vlaneseq
        %v3460 = vshrl.u32 %v3459, 7
        %v3461 = vsub.s32 0, %v3460
        %v3462 = vrot.slane %v3457, %v3461
        %v3464 = vadd.f32 %v3455, %v3462
        %v3465 = vadd.f32 %v3456, %v3462
        %3466 = vst [vmem:[#allocation2] sm:$0xff] %v3464
        %3467 = vst [vmem:[#allocation2 + $0x8] sm:$0xff] %v3465
        %p3468 = scmp.eq.s32.totalorder %s106, 1
        // Predicated region
        $region245: #{tpu_custom_call.1} parent=143 // pred_check
          %p3469 = pneg %p3468
        $region246: #{tpu_custom_call.1} parent=143 // pred_check_branch
          %3471 = sbr.rel (%p3469) target = $region248
        $region247: #{tpu_custom_call.1} parent=143 // pred_region
          %v3472 = vld [vmem:[#allocation2] sm:$0xff]
          %v3473 = vld [vmem:[#allocation2 + $0x8] sm:$0xff]
          %v3474 = vld [vmem:[%s5] sm:$0xff]
          %v3475 = vld [vmem:[%s5 + $0x8] sm:$0xff]
          %v3476 = vpack.c.bf16 %v3473, %v3472
          %v3477 = vld [vmem:[%s37] sm:$0xf]
          %v3478 = vld [vmem:[%s37 + $0x4] sm:$0xf]
          %v3479 = vld [vmem:[%s37 + $0x8] sm:$0xf]
          %v3480 = vld [vmem:[%s37 + $0xc] sm:$0xf]
          %v3481 = vld [vmem:[%s37 + $0x10] sm:$0xf]
          %v3482 = vld [vmem:[%s37 + $0x14] sm:$0xf]
          %v3483 = vld [vmem:[%s37 + $0x18] sm:$0xf]
          %v3484 = vld [vmem:[%s37 + $0x1c] sm:$0xf]
          %v3485 = vld [vmem:[%s37 + $0x20] sm:$0xf]
          %v3486 = vld [vmem:[%s37 + $0x24] sm:$0xf]
          %v3487 = vld [vmem:[%s37 + $0x28] sm:$0xf]
          %v3488 = vld [vmem:[%s37 + $0x2c] sm:$0xf]
          %v3489 = vld [vmem:[%s37 + $0x30] sm:$0xf]
          %v3490 = vld [vmem:[%s37 + $0x34] sm:$0xf]
          %v3491 = vld [vmem:[%s37 + $0x38] sm:$0xf]
          %v3492 = vld [vmem:[%s37 + $0x3c] sm:$0xf]
          %v3493 = vld [vmem:[#allocation26] sm:$0x1]
          %v3495 = vlaneseq
          %v3496 = vshrl.u32 %v3495, 7
          %v3497 = vsub.s32 0, %v3496
          %v3498 = vrot.slane %v3493, %v3497
          %v3516 = vunpack.c.l.b16 %v3477
          %v3517 = vunpack.c.l.b16 %v3478
          %v3518 = vunpack.c.l.b16 %v3479
          %v3519 = vunpack.c.l.b16 %v3480
          %v3520 = vunpack.c.l.b16 %v3481
          %v3521 = vunpack.c.l.b16 %v3482
          %v3522 = vunpack.c.l.b16 %v3483
          %v3523 = vunpack.c.l.b16 %v3484
          %v3524 = vunpack.c.l.b16 %v3485
          %v3525 = vunpack.c.l.b16 %v3486
          %v3526 = vunpack.c.l.b16 %v3487
          %v3527 = vunpack.c.l.b16 %v3488
          %v3528 = vunpack.c.l.b16 %v3489
          %v3529 = vunpack.c.l.b16 %v3490
          %v3530 = vunpack.c.l.b16 %v3491
          %v3531 = vunpack.c.l.b16 %v3492
          %v3532 = vpack.c.b16 %v3517, %v3516
          %v3533 = vpack.c.b16 %v3519, %v3518
          %v3534 = vpack.c.b16 %v3521, %v3520
          %v3535 = vpack.c.b16 %v3523, %v3522
          %v3536 = vpack.c.b16 %v3525, %v3524
          %v3537 = vpack.c.b16 %v3527, %v3526
          %v3538 = vpack.c.b16 %v3529, %v3528
          %v3539 = vpack.c.b16 %v3531, %v3530
          %3548 = vmatprep.subr.bf16.mxu0 0
          %3549 = vmatpush1.bf16.msra.mxu0 %v3532
          %3550 = vmatprep.subr.bf16.mxu0 0
          %3551 = vmatpush1.bf16.msra.mxu0 %v3533
          %3552 = vmatprep.subr.bf16.mxu0 0
          %3553 = vmatpush1.bf16.msra.mxu0 %v3534
          %3554 = vmatprep.subr.bf16.mxu0 0
          %3555 = vmatpush1.bf16.msra.mxu0 %v3535
          %3556 = vmatprep.subr.bf16.mxu0 0
          %3557 = vmatpush1.bf16.msra.mxu0 %v3536
          %3558 = vmatprep.subr.bf16.mxu0 0
          %3559 = vmatpush1.bf16.msra.mxu0 %v3537
          %3560 = vmatprep.subr.bf16.mxu0 0
          %3561 = vmatpush1.bf16.msra.mxu0 %v3538
          %3562 = vmatprep.subr.bf16.mxu0 0
          %3563 = vmatpush1.bf16.msra.mxu0 %v3539
          %3564 = vmatprep.subr.bf16.mxu0 0
          %3565 = vmatpush1.bf16.msra.mxu0 0
          %3566 = vmatprep.subr.bf16.mxu0 0
          %3567 = vmatpush1.bf16.msra.mxu0 0
          %3568 = vmatprep.subr.bf16.mxu0 0
          %3569 = vmatpush1.bf16.msra.mxu0 0
          %3570 = vmatprep.subr.bf16.mxu0 0
          %3571 = vmatpush1.bf16.msra.mxu0 0
          %3572 = vmatprep.subr.bf16.mxu0 0
          %3573 = vmatpush1.bf16.msra.mxu0 0
          %3574 = vmatprep.subr.bf16.mxu0 0
          %3575 = vmatpush1.bf16.msra.mxu0 0
          %3576 = vmatprep.subr.bf16.mxu0 0
          %3577 = vmatpush1.bf16.msra.mxu0 0
          %3578 = vmatprep.subr.bf16.mxu0 0
          %3579 = vmatpush1.bf16.msra.mxu0 0
          %3580 = vmatprep.mubr.bf16.mxu0 0
          %3581 = vmatmul.mubr.bf16.gmra.mrb[0].mxu0 %v3476
          %v3582 = vpop.f32.mrb[0].mxu0
          %v3583 = vadd.f32 %v3498, %v3582
          %v3584 = vpop.f32.mrb[0].mxu0
          %v3585 = vpop.f32.mrb[0].mxu0
          %v3586 = vadd.f32 %v3498, %v3585
          %v3587 = vpop.f32.mrb[0].mxu0
          %3588 = vdwg.mxu0
          %v3589 = vmax.f32 %v3583, 0.0
          %v3590 = vmax.f32 %v3586, 0.0
          %v3591 = vpack.c.bf16 %v3590, %v3589
          %v3592 = vld [vmem:[#allocation27] sm:$0xf]
          %v3593 = vld [vmem:[#allocation27 + $0x4] sm:$0xf]
          %v3594 = vld [vmem:[#allocation27 + $0x8] sm:$0xf]
          %v3595 = vld [vmem:[#allocation27 + $0xc] sm:$0xf]
          %v3596 = vld [vmem:[#allocation27 + $0x10] sm:$0xf]
          %v3597 = vld [vmem:[#allocation27 + $0x14] sm:$0xf]
          %v3598 = vld [vmem:[#allocation27 + $0x18] sm:$0xf]
          %v3599 = vld [vmem:[#allocation27 + $0x1c] sm:$0xf]
          %v3600 = vld [vmem:[#allocation27 + $0x20] sm:$0xf]
          %v3601 = vld [vmem:[#allocation27 + $0x24] sm:$0xf]
          %v3602 = vld [vmem:[#allocation27 + $0x28] sm:$0xf]
          %v3603 = vld [vmem:[#allocation27 + $0x2c] sm:$0xf]
          %v3604 = vld [vmem:[#allocation27 + $0x30] sm:$0xf]
          %v3605 = vld [vmem:[#allocation27 + $0x34] sm:$0xf]
          %v3606 = vld [vmem:[#allocation27 + $0x38] sm:$0xf]
          %v3607 = vld [vmem:[#allocation27 + $0x3c] sm:$0xf]
          %v3608 = vld [vmem:[#allocation29] sm:$0x1]
          %v3610 = vlaneseq
          %v3611 = vshrl.u32 %v3610, 7
          %v3612 = vsub.s32 0, %v3611
          %v3613 = vrot.slane %v3608, %v3612
          %v3631 = vunpack.c.l.b16 %v3592
          %v3632 = vunpack.c.l.b16 %v3593
          %v3633 = vunpack.c.l.b16 %v3594
          %v3634 = vunpack.c.l.b16 %v3595
          %v3635 = vunpack.c.l.b16 %v3596
          %v3636 = vunpack.c.l.b16 %v3597
          %v3637 = vunpack.c.l.b16 %v3598
          %v3638 = vunpack.c.l.b16 %v3599
          %v3639 = vunpack.c.l.b16 %v3600
          %v3640 = vunpack.c.l.b16 %v3601
          %v3641 = vunpack.c.l.b16 %v3602
          %v3642 = vunpack.c.l.b16 %v3603
          %v3643 = vunpack.c.l.b16 %v3604
          %v3644 = vunpack.c.l.b16 %v3605
          %v3645 = vunpack.c.l.b16 %v3606
          %v3646 = vunpack.c.l.b16 %v3607
          %v3647 = vpack.c.b16 %v3632, %v3631
          %v3648 = vpack.c.b16 %v3634, %v3633
          %v3649 = vpack.c.b16 %v3636, %v3635
          %v3650 = vpack.c.b16 %v3638, %v3637
          %v3651 = vpack.c.b16 %v3640, %v3639
          %v3652 = vpack.c.b16 %v3642, %v3641
          %v3653 = vpack.c.b16 %v3644, %v3643
          %v3654 = vpack.c.b16 %v3646, %v3645
          %3663 = vmatprep.subr.bf16.mxu0 0
          %3664 = vmatpush1.bf16.msra.mxu0 %v3647
          %3665 = vmatprep.subr.bf16.mxu0 0
          %3666 = vmatpush1.bf16.msra.mxu0 %v3648
          %3667 = vmatprep.subr.bf16.mxu0 0
          %3668 = vmatpush1.bf16.msra.mxu0 %v3649
          %3669 = vmatprep.subr.bf16.mxu0 0
          %3670 = vmatpush1.bf16.msra.mxu0 %v3650
          %3671 = vmatprep.subr.bf16.mxu0 0
          %3672 = vmatpush1.bf16.msra.mxu0 %v3651
          %3673 = vmatprep.subr.bf16.mxu0 0
          %3674 = vmatpush1.bf16.msra.mxu0 %v3652
          %3675 = vmatprep.subr.bf16.mxu0 0
          %3676 = vmatpush1.bf16.msra.mxu0 %v3653
          %3677 = vmatprep.subr.bf16.mxu0 0
          %3678 = vmatpush1.bf16.msra.mxu0 %v3654
          %3679 = vmatprep.subr.bf16.mxu0 0
          %3680 = vmatpush1.bf16.msra.mxu0 0
          %3681 = vmatprep.subr.bf16.mxu0 0
          %3682 = vmatpush1.bf16.msra.mxu0 0
          %3683 = vmatprep.subr.bf16.mxu0 0
          %3684 = vmatpush1.bf16.msra.mxu0 0
          %3685 = vmatprep.subr.bf16.mxu0 0
          %3686 = vmatpush1.bf16.msra.mxu0 0
          %3687 = vmatprep.subr.bf16.mxu0 0
          %3688 = vmatpush1.bf16.msra.mxu0 0
          %3689 = vmatprep.subr.bf16.mxu0 0
          %3690 = vmatpush1.bf16.msra.mxu0 0
          %3691 = vmatprep.subr.bf16.mxu0 0
          %3692 = vmatpush1.bf16.msra.mxu0 0
          %3693 = vmatprep.subr.bf16.mxu0 0
          %3694 = vmatpush1.bf16.msra.mxu0 0
          %3695 = vmatprep.mubr.bf16.mxu0 0
          %3696 = vmatmul.mubr.bf16.gmra.mrb[0].mxu0 %v3591
          %v3697 = vpop.f32.mrb[0].mxu0
          %v3698 = vadd.f32 %v3613, %v3697
          %v3699 = vpop.f32.mrb[0].mxu0
          %v3700 = vpop.f32.mrb[0].mxu0
          %v3701 = vadd.f32 %v3613, %v3700
          %v3702 = vpop.f32.mrb[0].mxu0
          %3703 = vdwg.mxu0
          %3706 = vrot.lane.b32.xlu0 %v3698, 127
          %v3707 = vpop.permute.xlu0 %3706
          %3708 = vrot.lane.b32.xlu0 %v3701, 127
          %v3709 = vpop.permute.xlu0 %3708
          %v3712 = vmax.f32 %v3698, %v3707
          %v3713 = vmax.f32 %v3701, %v3709
          %vm3714 = vcmp.eq.f32.partialorder %v3698, %v3712
          %vm3715 = vcmp.eq.f32.partialorder %v3701, %v3713
          %v3716 = vsel %vm3714, 1, 0
          %v3717 = vsel %vm3715, 1, 0
          %v3718 = vcvt.s32.f32 %v3716
          %v3719 = vcvt.s32.f32 %v3717
          %3722 = vrot.lane.b32.xlu0 %v3712, 1
          %v3723 = vpop.permute.xlu0 %3722
          %3724 = vrot.lane.b32.xlu0 %v3713, 1
          %v3725 = vpop.permute.xlu0 %3724
          %vm3728 = vcmp.eq.f32.partialorder %v3698, %v3723
          %vm3729 = vcmp.eq.f32.partialorder %v3701, %v3725
          %v3730 = vsel %vm3728, 1, 0
          %v3731 = vsel %vm3729, 1, 0
          %v3732 = vcvt.s32.f32 %v3730
          %v3733 = vcvt.s32.f32 %v3731
          %v3734 = vmul.f32 %v3718, %v3474
          %v3735 = vmul.f32 %v3719, %v3475
          %3738 = vrot.lane.b32.xlu0 %v3474, 1
          %v3739 = vpop.permute.xlu0 %3738
          %3740 = vrot.lane.b32.xlu0 %v3475, 1
          %v3741 = vpop.permute.xlu0 %3740
          %v3744 = vmul.f32 %v3732, %v3739
          %v3745 = vmul.f32 %v3733, %v3741
          %v3746 = vsub.f32 1.0, %v3474
          %v3747 = vsub.f32 1.0, %v3475
          %3750 = vrot.lane.b32.xlu0 %v3746, 1
          %v3751 = vpop.permute.xlu0 %3750
          %3752 = vrot.lane.b32.xlu0 %v3747, 1
          %v3753 = vpop.permute.xlu0 %3752
          %v3756 = vadd.f32 %v3744, %v3751
          %v3757 = vadd.f32 %v3745, %v3753
          %vm3758 = vcmask 7168
          %v3759 = vsel %vm3758, %v3734, %v3756
          %v3760 = vsel %vm3758, %v3735, %v3757
          %vm3761 = vcmask 15360
          %v3762 = vsel %vm3761, %v3759, 0.0
          %v3763 = vsel %vm3761, %v3760, 0.0
          %3764 = vst [vmem:[#allocation44] sm:$0xff] %v3762
          %3765 = vst [vmem:[#allocation44 + $0x8] sm:$0xff] %v3763
          %3767 = vset.pattern.permute.xlu0 0
          %3768 = vperm.xlu0 %3767, %v3734
          %v3769 = vpop.permute.xlu0 %3768
          %3772 = vset.pattern.permute.xlu0 0
          %3773 = vperm.xlu0 %3772, %v3735
          %v3774 = vpop.permute.xlu0 %3773
          %v3776 = vmul.f32 %v3472, %v3769
          %v3777 = vmul.f32 %v3473, %v3774
          %v3778 = vld [vmem:[%s7] sm:$0x1]
          %v3779 = vld [vmem:[%s7 + $0x1] sm:$0x1]
          %v3782 = vlaneseq
          %v3783 = vshrl.u32 %v3782, 7
          %v3784 = vsub.s32 0, %v3783
          %v3785 = vrot.slane %v3778, %v3784
          %v3786 = vlaneseq
          %v3787 = vshrl.u32 %v3786, 7
          %v3788 = vsub.s32 0, %v3787
          %v3789 = vrot.slane %v3779, %v3788
          %v3792 = vmul.f32 %v3785, %v3474
          %v3793 = vmul.f32 %v3789, %v3475
          %v3794 = vpack.c.bf16 %v3776, %v3776
          %v3795 = vpack.c.bf16 %v3777, %v3777
          %v3796 = vld [vmem:[#allocation30] sm:$0xf]
          %v3797 = vld [vmem:[#allocation30 + $0x4] sm:$0xf]
          %v3798 = vld [vmem:[#allocation30 + $0x8] sm:$0xf]
          %v3799 = vld [vmem:[#allocation30 + $0xc] sm:$0xf]
          %v3800 = vld [vmem:[#allocation30 + $0x10] sm:$0xf]
          %v3801 = vld [vmem:[#allocation30 + $0x14] sm:$0xf]
          %v3802 = vld [vmem:[#allocation30 + $0x18] sm:$0xf]
          %v3803 = vld [vmem:[#allocation30 + $0x1c] sm:$0xf]
          %v3804 = vld [vmem:[#allocation30 + $0x20] sm:$0xf]
          %v3805 = vld [vmem:[#allocation30 + $0x24] sm:$0xf]
          %v3806 = vld [vmem:[#allocation30 + $0x28] sm:$0xf]
          %v3807 = vld [vmem:[#allocation30 + $0x2c] sm:$0xf]
          %v3808 = vld [vmem:[#allocation30 + $0x30] sm:$0xf]
          %v3809 = vld [vmem:[#allocation30 + $0x34] sm:$0xf]
          %v3810 = vld [vmem:[#allocation30 + $0x38] sm:$0xf]
          %v3811 = vld [vmem:[#allocation30 + $0x3c] sm:$0xf]
          %v3812 = vld [vmem:[#allocation32] sm:$0x1]
          %v3814 = vlaneseq
          %v3815 = vshrl.u32 %v3814, 7
          %v3816 = vsub.s32 0, %v3815
          %v3817 = vrot.slane %v3812, %v3816
          %v3821 = vunpack.c.l.b16 %v3794
          %v3822 = vunpack.c.l.b16 %v3795
          %v3823 = vrot.slane %v3822, 7
          %vm3824 = vcmask 1041409
          %v3825 = vsel %vm3824, %v3823, %v3821
          %v3826 = vpack.c.b16 %v3825, %v3825
          %v3844 = vunpack.c.l.b16 %v3796
          %v3845 = vunpack.c.l.b16 %v3797
          %v3846 = vunpack.c.l.b16 %v3798
          %v3847 = vunpack.c.l.b16 %v3799
          %v3848 = vunpack.c.l.b16 %v3800
          %v3849 = vunpack.c.l.b16 %v3801
          %v3850 = vunpack.c.l.b16 %v3802
          %v3851 = vunpack.c.l.b16 %v3803
          %v3852 = vunpack.c.l.b16 %v3804
          %v3853 = vunpack.c.l.b16 %v3805
          %v3854 = vunpack.c.l.b16 %v3806
          %v3855 = vunpack.c.l.b16 %v3807
          %v3856 = vunpack.c.l.b16 %v3808
          %v3857 = vunpack.c.l.b16 %v3809
          %v3858 = vunpack.c.l.b16 %v3810
          %v3859 = vunpack.c.l.b16 %v3811
          %v3860 = vpack.c.b16 %v3845, %v3844
          %v3861 = vpack.c.b16 %v3847, %v3846
          %v3862 = vpack.c.b16 %v3849, %v3848
          %v3863 = vpack.c.b16 %v3851, %v3850
          %v3864 = vpack.c.b16 %v3853, %v3852
          %v3865 = vpack.c.b16 %v3855, %v3854
          %v3866 = vpack.c.b16 %v3857, %v3856
          %v3867 = vpack.c.b16 %v3859, %v3858
          %3876 = vmatprep.subr.bf16.mxu0 0
          %3877 = vmatpush1.bf16.msra.mxu0 %v3860
          %3878 = vmatprep.subr.bf16.mxu0 0
          %3879 = vmatpush1.bf16.msra.mxu0 %v3861
          %3880 = vmatprep.subr.bf16.mxu0 0
          %3881 = vmatpush1.bf16.msra.mxu0 %v3862
          %3882 = vmatprep.subr.bf16.mxu0 0
          %3883 = vmatpush1.bf16.msra.mxu0 %v3863
          %3884 = vmatprep.subr.bf16.mxu0 0
          %3885 = vmatpush1.bf16.msra.mxu0 %v3864
          %3886 = vmatprep.subr.bf16.mxu0 0
          %3887 = vmatpush1.bf16.msra.mxu0 %v3865
          %3888 = vmatprep.subr.bf16.mxu0 0
          %3889 = vmatpush1.bf16.msra.mxu0 %v3866
          %3890 = vmatprep.subr.bf16.mxu0 0
          %3891 = vmatpush1.bf16.msra.mxu0 %v3867
          %3892 = vmatprep.subr.bf16.mxu0 0
          %3893 = vmatpush1.bf16.msra.mxu0 0
          %3894 = vmatprep.subr.bf16.mxu0 0
          %3895 = vmatpush1.bf16.msra.mxu0 0
          %3896 = vmatprep.subr.bf16.mxu0 0
          %3897 = vmatpush1.bf16.msra.mxu0 0
          %3898 = vmatprep.subr.bf16.mxu0 0
          %3899 = vmatpush1.bf16.msra.mxu0 0
          %3900 = vmatprep.subr.bf16.mxu0 0
          %3901 = vmatpush1.bf16.msra.mxu0 0
          %3902 = vmatprep.subr.bf16.mxu0 0
          %3903 = vmatpush1.bf16.msra.mxu0 0
          %3904 = vmatprep.subr.bf16.mxu0 0
          %3905 = vmatpush1.bf16.msra.mxu0 0
          %3906 = vmatprep.subr.bf16.mxu0 0
          %3907 = vmatpush1.bf16.msra.mxu0 0
          %3908 = vmatprep.mubr.bf16.mxu0 0
          %3909 = vmatmul.mubr.bf16.gmra.mrb[0].mxu0 %v3826
          %v3910 = vpop.f32.mrb[0].mxu0
          %v3911 = vadd.f32 %v3817, %v3910
          %v3912 = vpop.f32.mrb[0].mxu0
          %v3913 = vpop.f32.mrb[0].mxu0
          %v3914 = vpop.f32.mrb[0].mxu0
          %3915 = vdwg.mxu0
          %v3916 = vmax.f32 %v3911, 0.0
          %v3917 = vpack.c.bf16 %v3916, %v3916
          %v3918 = vld [vmem:[#allocation33] sm:$0xf]
          %v3919 = vld [vmem:[#allocation33 + $0x4] sm:$0xf]
          %v3920 = vld [vmem:[#allocation33 + $0x8] sm:$0xf]
          %v3921 = vld [vmem:[#allocation33 + $0xc] sm:$0xf]
          %v3922 = vld [vmem:[#allocation33 + $0x10] sm:$0xf]
          %v3923 = vld [vmem:[#allocation33 + $0x14] sm:$0xf]
          %v3924 = vld [vmem:[#allocation33 + $0x18] sm:$0xf]
          %v3925 = vld [vmem:[#allocation33 + $0x1c] sm:$0xf]
          %v3926 = vld [vmem:[#allocation33 + $0x20] sm:$0xf]
          %v3927 = vld [vmem:[#allocation33 + $0x24] sm:$0xf]
          %v3928 = vld [vmem:[#allocation33 + $0x28] sm:$0xf]
          %v3929 = vld [vmem:[#allocation33 + $0x2c] sm:$0xf]
          %v3930 = vld [vmem:[#allocation33 + $0x30] sm:$0xf]
          %v3931 = vld [vmem:[#allocation33 + $0x34] sm:$0xf]
          %v3932 = vld [vmem:[#allocation33 + $0x38] sm:$0xf]
          %v3933 = vld [vmem:[#allocation33 + $0x3c] sm:$0xf]
          %v3934 = vld [vmem:[#allocation35] sm:$0x1]
          %v3936 = vlaneseq
          %v3937 = vshrl.u32 %v3936, 7
          %v3938 = vsub.s32 0, %v3937
          %v3939 = vrot.slane %v3934, %v3938
          %v3957 = vunpack.c.l.b16 %v3918
          %v3958 = vunpack.c.l.b16 %v3919
          %v3959 = vunpack.c.l.b16 %v3920
          %v3960 = vunpack.c.l.b16 %v3921
          %v3961 = vunpack.c.l.b16 %v3922
          %v3962 = vunpack.c.l.b16 %v3923
          %v3963 = vunpack.c.l.b16 %v3924
          %v3964 = vunpack.c.l.b16 %v3925
          %v3965 = vunpack.c.l.b16 %v3926
          %v3966 = vunpack.c.l.b16 %v3927
          %v3967 = vunpack.c.l.b16 %v3928
          %v3968 = vunpack.c.l.b16 %v3929
          %v3969 = vunpack.c.l.b16 %v3930
          %v3970 = vunpack.c.l.b16 %v3931
          %v3971 = vunpack.c.l.b16 %v3932
          %v3972 = vunpack.c.l.b16 %v3933
          %v3973 = vpack.c.b16 %v3958, %v3957
          %v3974 = vpack.c.b16 %v3960, %v3959
          %v3975 = vpack.c.b16 %v3962, %v3961
          %v3976 = vpack.c.b16 %v3964, %v3963
          %v3977 = vpack.c.b16 %v3966, %v3965
          %v3978 = vpack.c.b16 %v3968, %v3967
          %v3979 = vpack.c.b16 %v3970, %v3969
          %v3980 = vpack.c.b16 %v3972, %v3971
          %3989 = vmatprep.subr.bf16.mxu0 0
          %3990 = vmatpush1.bf16.msra.mxu0 %v3973
          %3991 = vmatprep.subr.bf16.mxu0 0
          %3992 = vmatpush1.bf16.msra.mxu0 %v3974
          %3993 = vmatprep.subr.bf16.mxu0 0
          %3994 = vmatpush1.bf16.msra.mxu0 %v3975
          %3995 = vmatprep.subr.bf16.mxu0 0
          %3996 = vmatpush1.bf16.msra.mxu0 %v3976
          %3997 = vmatprep.subr.bf16.mxu0 0
          %3998 = vmatpush1.bf16.msra.mxu0 %v3977
          %3999 = vmatprep.subr.bf16.mxu0 0
          %4000 = vmatpush1.bf16.msra.mxu0 %v3978
          %4001 = vmatprep.subr.bf16.mxu0 0
          %4002 = vmatpush1.bf16.msra.mxu0 %v3979
          %4003 = vmatprep.subr.bf16.mxu0 0
          %4004 = vmatpush1.bf16.msra.mxu0 %v3980
          %4005 = vmatprep.subr.bf16.mxu0 0
          %4006 = vmatpush1.bf16.msra.mxu0 0
          %4007 = vmatprep.subr.bf16.mxu0 0
          %4008 = vmatpush1.bf16.msra.mxu0 0
          %4009 = vmatprep.subr.bf16.mxu0 0
          %4010 = vmatpush1.bf16.msra.mxu0 0
          %4011 = vmatprep.subr.bf16.mxu0 0
          %4012 = vmatpush1.bf16.msra.mxu0 0
          %4013 = vmatprep.subr.bf16.mxu0 0
          %4014 = vmatpush1.bf16.msra.mxu0 0
          %4015 = vmatprep.subr.bf16.mxu0 0
          %4016 = vmatpush1.bf16.msra.mxu0 0
          %4017 = vmatprep.subr.bf16.mxu0 0
          %4018 = vmatpush1.bf16.msra.mxu0 0
          %4019 = vmatprep.subr.bf16.mxu0 0
          %4020 = vmatpush1.bf16.msra.mxu0 0
          %4021 = vmatprep.mubr.bf16.mxu0 0
          %4022 = vmatmul.mubr.bf16.gmra.mrb[0].mxu0 %v3917
          %v4023 = vpop.f32.mrb[0].mxu0
          %v4024 = vadd.f32 %v3939, %v4023
          %v4025 = vpop.f32.mrb[0].mxu0
          %v4026 = vpop.f32.mrb[0].mxu0
          %v4027 = vpop.f32.mrb[0].mxu0
          %4028 = vdwg.mxu0
          %4029 = vst [vmem:[#allocation41] sm:$0x3] %v4024
          %v4030 = vld [vmem:[#allocation36] sm:$0xf]
          %v4031 = vld [vmem:[#allocation36 + $0x4] sm:$0xf]
          %v4032 = vld [vmem:[#allocation36 + $0x8] sm:$0xf]
          %v4033 = vld [vmem:[#allocation36 + $0xc] sm:$0xf]
          %v4034 = vld [vmem:[#allocation36 + $0x10] sm:$0xf]
          %v4035 = vld [vmem:[#allocation36 + $0x14] sm:$0xf]
          %v4036 = vld [vmem:[#allocation36 + $0x18] sm:$0xf]
          %v4037 = vld [vmem:[#allocation36 + $0x1c] sm:$0xf]
          %v4038 = vld [vmem:[#allocation36 + $0x20] sm:$0xf]
          %v4039 = vld [vmem:[#allocation36 + $0x24] sm:$0xf]
          %v4040 = vld [vmem:[#allocation36 + $0x28] sm:$0xf]
          %v4041 = vld [vmem:[#allocation36 + $0x2c] sm:$0xf]
          %v4042 = vld [vmem:[#allocation36 + $0x30] sm:$0xf]
          %v4043 = vld [vmem:[#allocation36 + $0x34] sm:$0xf]
          %v4044 = vld [vmem:[#allocation36 + $0x38] sm:$0xf]
          %v4045 = vld [vmem:[#allocation36 + $0x3c] sm:$0xf]
          %v4046 = vld [vmem:[#allocation38] sm:$0x1]
          %4048 = vset.pattern.permute.xlu0 0
          %4049 = vperm.xlu0 %4048, %v3792
          %v4050 = vpop.permute.xlu0 %4049
          %4053 = vset.pattern.permute.xlu0 0
          %4054 = vperm.xlu0 %4053, %v3793
          %v4055 = vpop.permute.xlu0 %4054
          %v4058 = vlaneseq
          %v4059 = vshrl.u32 %v4058, 7
          %v4060 = vsub.s32 0, %v4059
          %v4061 = vrot.slane %v4046, %v4060
          %v4063 = vmul.f32 %v4050, %v4061
          %v4064 = vmul.f32 %v4055, %v4061
          %v4081 = vunpack.c.l.b16 %v4030
          %v4082 = vunpack.c.l.b16 %v4031
          %v4083 = vunpack.c.l.b16 %v4032
          %v4084 = vunpack.c.l.b16 %v4033
          %v4085 = vunpack.c.l.b16 %v4034
          %v4086 = vunpack.c.l.b16 %v4035
          %v4087 = vunpack.c.l.b16 %v4036
          %v4088 = vunpack.c.l.b16 %v4037
          %v4089 = vunpack.c.l.b16 %v4038
          %v4090 = vunpack.c.l.b16 %v4039
          %v4091 = vunpack.c.l.b16 %v4040
          %v4092 = vunpack.c.l.b16 %v4041
          %v4093 = vunpack.c.l.b16 %v4042
          %v4094 = vunpack.c.l.b16 %v4043
          %v4095 = vunpack.c.l.b16 %v4044
          %v4096 = vunpack.c.l.b16 %v4045
          %v4097 = vpack.c.b16 %v4082, %v4081
          %v4098 = vpack.c.b16 %v4084, %v4083
          %v4099 = vpack.c.b16 %v4086, %v4085
          %v4100 = vpack.c.b16 %v4088, %v4087
          %v4101 = vpack.c.b16 %v4090, %v4089
          %v4102 = vpack.c.b16 %v4092, %v4091
          %v4103 = vpack.c.b16 %v4094, %v4093
          %v4104 = vpack.c.b16 %v4096, %v4095
          %v4115 = vrot.slane %v4064, 7
          %v4116 = vsel %vm3824, %v4115, %v4063
          %4118 = vmatprep.subr.bf16.mxu0 0
          %4119 = vmatpush1.bf16.msra.mxu0 %v4097
          %4120 = vmatprep.subr.bf16.mxu0 0
          %4121 = vmatpush1.bf16.msra.mxu0 %v4098
          %4122 = vmatprep.subr.bf16.mxu0 0
          %4123 = vmatpush1.bf16.msra.mxu0 %v4099
          %4124 = vmatprep.subr.bf16.mxu0 0
          %4125 = vmatpush1.bf16.msra.mxu0 %v4100
          %4126 = vmatprep.subr.bf16.mxu0 0
          %4127 = vmatpush1.bf16.msra.mxu0 %v4101
          %4128 = vmatprep.subr.bf16.mxu0 0
          %4129 = vmatpush1.bf16.msra.mxu0 %v4102
          %4130 = vmatprep.subr.bf16.mxu0 0
          %4131 = vmatpush1.bf16.msra.mxu0 %v4103
          %4132 = vmatprep.subr.bf16.mxu0 0
          %4133 = vmatpush1.bf16.msra.mxu0 %v4104
          %4134 = vmatprep.subr.bf16.mxu0 0
          %4135 = vmatpush1.bf16.msra.mxu0 0
          %4136 = vmatprep.subr.bf16.mxu0 0
          %4137 = vmatpush1.bf16.msra.mxu0 0
          %4138 = vmatprep.subr.bf16.mxu0 0
          %4139 = vmatpush1.bf16.msra.mxu0 0
          %4140 = vmatprep.subr.bf16.mxu0 0
          %4141 = vmatpush1.bf16.msra.mxu0 0
          %4142 = vmatprep.subr.bf16.mxu0 0
          %4143 = vmatpush1.bf16.msra.mxu0 0
          %4144 = vmatprep.subr.bf16.mxu0 0
          %4145 = vmatpush1.bf16.msra.mxu0 0
          %4146 = vmatprep.subr.bf16.mxu0 0
          %4147 = vmatpush1.bf16.msra.mxu0 0
          %4148 = vmatprep.subr.bf16.mxu0 0
          %4149 = vmatpush1.bf16.msra.mxu0 0
          %4150 = vmatprep.mubr.bf16.mxu0 0
          %4151 = vmatmul.mubr.bf16.gmra.mrb[0].mxu0 %v3826
          %v4152 = vpop.f32.mrb[0].mxu0
          %v4153 = vadd.f32 %v4116, %v4152
          %v4154 = vpop.f32.mrb[0].mxu0
          %v4155 = vpop.f32.mrb[0].mxu0
          %v4156 = vpop.f32.mrb[0].mxu0
          %4157 = vdwg.mxu0
          %v4158 = vld [vmem:[#allocation39] sm:$0x1]
          %v4160 = vlaneseq
          %v4161 = vshrl.u32 %v4160, 7
          %v4162 = vsub.s32 0, %v4161
          %v4163 = vrot.slane %v4158, %v4162
          %v4165 = vadd.f32 %v4153, %v4163
          %v4166 = vmax.f32 %v4165, 0.0
          %v4167 = vpack.c.bf16 %v4166, %v4166
          %v4168 = vld [vmem:[%s59] sm:$0xf]
          %v4169 = vld [vmem:[%s59 + $0x4] sm:$0xf]
          %v4170 = vld [vmem:[%s59 + $0x8] sm:$0xf]
          %v4171 = vld [vmem:[%s59 + $0xc] sm:$0xf]
          %v4172 = vld [vmem:[%s59 + $0x10] sm:$0xf]
          %v4173 = vld [vmem:[%s59 + $0x14] sm:$0xf]
          %v4174 = vld [vmem:[%s59 + $0x18] sm:$0xf]
          %v4175 = vld [vmem:[%s59 + $0x1c] sm:$0xf]
          %v4176 = vld [vmem:[%s59 + $0x20] sm:$0xf]
          %v4177 = vld [vmem:[%s59 + $0x24] sm:$0xf]
          %v4178 = vld [vmem:[%s59 + $0x28] sm:$0xf]
          %v4179 = vld [vmem:[%s59 + $0x2c] sm:$0xf]
          %v4180 = vld [vmem:[%s59 + $0x30] sm:$0xf]
          %v4181 = vld [vmem:[%s59 + $0x34] sm:$0xf]
          %v4182 = vld [vmem:[%s59 + $0x38] sm:$0xf]
          %v4183 = vld [vmem:[%s59 + $0x3c] sm:$0xf]
          %v4184 = vld [vmem:[%s61] sm:$0x1]
          %v4186 = vlaneseq
          %v4187 = vshrl.u32 %v4186, 7
          %v4188 = vsub.s32 0, %v4187
          %v4189 = vrot.slane %v4184, %v4188
          %v4207 = vunpack.c.l.b16 %v4168
          %v4208 = vunpack.c.l.b16 %v4169
          %v4209 = vunpack.c.l.b16 %v4170
          %v4210 = vunpack.c.l.b16 %v4171
          %v4211 = vunpack.c.l.b16 %v4172
          %v4212 = vunpack.c.l.b16 %v4173
          %v4213 = vunpack.c.l.b16 %v4174
          %v4214 = vunpack.c.l.b16 %v4175
          %v4215 = vunpack.c.l.b16 %v4176
          %v4216 = vunpack.c.l.b16 %v4177
          %v4217 = vunpack.c.l.b16 %v4178
          %v4218 = vunpack.c.l.b16 %v4179
          %v4219 = vunpack.c.l.b16 %v4180
          %v4220 = vunpack.c.l.b16 %v4181
          %v4221 = vunpack.c.l.b16 %v4182
          %v4222 = vunpack.c.l.b16 %v4183
          %v4223 = vpack.c.b16 %v4208, %v4207
          %v4224 = vpack.c.b16 %v4210, %v4209
          %v4225 = vpack.c.b16 %v4212, %v4211
          %v4226 = vpack.c.b16 %v4214, %v4213
          %v4227 = vpack.c.b16 %v4216, %v4215
          %v4228 = vpack.c.b16 %v4218, %v4217
          %v4229 = vpack.c.b16 %v4220, %v4219
          %v4230 = vpack.c.b16 %v4222, %v4221
          %4239 = vmatprep.subr.bf16.mxu0 0
          %4240 = vmatpush1.bf16.msra.mxu0 %v4223
          %4241 = vmatprep.subr.bf16.mxu0 0
          %4242 = vmatpush1.bf16.msra.mxu0 %v4224
          %4243 = vmatprep.subr.bf16.mxu0 0
          %4244 = vmatpush1.bf16.msra.mxu0 %v4225
          %4245 = vmatprep.subr.bf16.mxu0 0
          %4246 = vmatpush1.bf16.msra.mxu0 %v4226
          %4247 = vmatprep.subr.bf16.mxu0 0
          %4248 = vmatpush1.bf16.msra.mxu0 %v4227
          %4249 = vmatprep.subr.bf16.mxu0 0
          %4250 = vmatpush1.bf16.msra.mxu0 %v4228
          %4251 = vmatprep.subr.bf16.mxu0 0
          %4252 = vmatpush1.bf16.msra.mxu0 %v4229
          %4253 = vmatprep.subr.bf16.mxu0 0
          %4254 = vmatpush1.bf16.msra.mxu0 %v4230
          %4255 = vmatprep.subr.bf16.mxu0 0
          %4256 = vmatpush1.bf16.msra.mxu0 0
          %4257 = vmatprep.subr.bf16.mxu0 0
          %4258 = vmatpush1.bf16.msra.mxu0 0
          %4259 = vmatprep.subr.bf16.mxu0 0
          %4260 = vmatpush1.bf16.msra.mxu0 0
          %4261 = vmatprep.subr.bf16.mxu0 0
          %4262 = vmatpush1.bf16.msra.mxu0 0
          %4263 = vmatprep.subr.bf16.mxu0 0
          %4264 = vmatpush1.bf16.msra.mxu0 0
          %4265 = vmatprep.subr.bf16.mxu0 0
          %4266 = vmatpush1.bf16.msra.mxu0 0
          %4267 = vmatprep.subr.bf16.mxu0 0
          %4268 = vmatpush1.bf16.msra.mxu0 0
          %4269 = vmatprep.subr.bf16.mxu0 0
          %4270 = vmatpush1.bf16.msra.mxu0 0
          %4271 = vmatprep.mubr.bf16.mxu0 0
          %4272 = vmatmul.mubr.bf16.gmra.mrb[0].mxu0 %v4167
          %v4273 = vpop.f32.mrb[0].mxu0
          %v4274 = vadd.f32 %v4189, %v4273
          %v4275 = vpop.f32.mrb[0].mxu0
          %v4276 = vpop.f32.mrb[0].mxu0
          %v4277 = vpop.f32.mrb[0].mxu0
          %4278 = vdwg.mxu0
          %4279 = vst [vmem:[#allocation42] sm:$0x3] %v4274
        $region248: #{tpu_custom_call.1} parent=143 // pred_fallthru
          _
        // Predicated region
        $region249: #{tpu_custom_call.1} parent=143 // pred_check
          %p4280 = pneg %p830
        $region250: #{tpu_custom_call.1} parent=143 // pred_check_branch
          %4282 = sbr.rel (%p4280) target = $region252
        $region251: #{tpu_custom_call.1} parent=143 // pred_region
          %s4284 = ssub.s32 32, 32
          %4285 = vsyncadd [#allocation5], %s4284
          %s4287 = sshll.u32 [#allocation41], 4
          %s4288 = int_to_ptr.vmem [resolvable:$true] %s4287
          %4290 = dma.vmem_to_hbm [thread:$0]  %s4288, 32, %s63, [#allocation5]
        $region252: #{tpu_custom_call.1} parent=143 // pred_fallthru
          _
        // Predicated region
        $region253: #{tpu_custom_call.1} parent=143 // pred_check
          %p4291 = pneg %p851
        $region254: #{tpu_custom_call.1} parent=143 // pred_check_branch
          %4293 = sbr.rel (%p4291) target = $region256
        $region255: #{tpu_custom_call.1} parent=143 // pred_region
          %s4295 = ssub.s32 32, 32
          %4296 = vsyncadd [#allocation43], %s4295
          %s4298 = sshll.u32 [#allocation42], 4
          %s4299 = int_to_ptr.vmem [resolvable:$true] %s4298
          %4301 = dma.vmem_to_hbm [thread:$0]  %s4299, 32, %s65, [#allocation43]
        $region256: #{tpu_custom_call.1} parent=143 // pred_fallthru
          _
        // Predicated region
        $region257: #{tpu_custom_call.1} parent=143 // pred_check
          %p4302 = pneg %p872
        $region258: #{tpu_custom_call.1} parent=143 // pred_check_branch
          %4304 = sbr.rel (%p4302) target = $region260
        $region259: #{tpu_custom_call.1} parent=143 // pred_region
          %s4306 = ssub.s32 256, 256
          %4307 = vsyncadd [#allocation43], %s4306
          %s4308 = sshll.u32 [#allocation44], 4
          %s4309 = int_to_ptr.vmem [resolvable:$true] %s4308
          %4314 = dma.vmem_to_hbm [thread:$0]  %s4309, 256, %s67, [#allocation43], 128, 128, 8
        $region260: #{tpu_custom_call.1} parent=143 // pred_fallthru
          _
        // Predicated region
        $region261: #{tpu_custom_call.1} parent=143 // pred_check
          %p4315 = pneg %p830
        $region262: #{tpu_custom_call.1} parent=143 // pred_check_branch
          %4317 = sbr.rel (%p4315) target = $region264
        $region263: #{tpu_custom_call.1} parent=143 // pred_region
          %4318 = dma.done [#allocation5], 32
        $region264: #{tpu_custom_call.1} parent=143 // pred_fallthru
          _
        // Predicated region
        $region265: #{tpu_custom_call.1} parent=143 // pred_check
          %p4319 = pneg %p851
        $region266: #{tpu_custom_call.1} parent=143 // pred_check_branch
          %4321 = sbr.rel (%p4319) target = $region268
        $region267: #{tpu_custom_call.1} parent=143 // pred_region
          %4322 = dma.done [#allocation43], 32
        $region268: #{tpu_custom_call.1} parent=143 // pred_fallthru
          _
        // Predicated region
        $region269: #{tpu_custom_call.1} parent=143 // pred_check
          %p4323 = pneg %p872
        $region270: #{tpu_custom_call.1} parent=143 // pred_check_branch
          %4325 = sbr.rel (%p4323) target = $region272
        $region271: #{tpu_custom_call.1} parent=143 // pred_region
          %4326 = dma.done [#allocation43], 256
        $region272: #{tpu_custom_call.1} parent=143 // pred_fallthru
          _
      $region144: #{tpu_custom_call.1} parent=5 // pred_fallthru
        _
      %p4327 = scmp.le.s32.totalorder 2, %s101
      // Predicated region
      $region273: #{tpu_custom_call.1} parent=5 // pred_check
        %p4328 = pneg %p4327
      $region274: #{tpu_custom_call.1} parent=5 // pred_check_branch
        %4330 = sbr.rel (%p4328) target = $region276
      $region275: #{tpu_custom_call.1} parent=5 // pred_region
        %s4331 = ssub.s32 %s101, 2
      $region276: #{tpu_custom_call.1} parent=5 // pred_fallthru
        _
    $region6: #{tpu_custom_call.1} parent=1 // loop_footer
      %s105 = sadd.s32 1, %s101
    $region7: #{tpu_custom_call.1} parent=1 // loop_footer_branch
      %100 = sbr.rel target = $region3
    $region8: #{tpu_custom_call.1} parent=1 // loop_exit
      _
    %4332 = vsyncpa [#allocation4], 1
    %s4333 = scalar_lea.sflag [#allocation4], 1
    %4334 = vsyncpa %s4333, 1
    %4335 = vsyncpa [#allocation7], 1
    %4336 = vsyncpa [#allocation10], 1
    %s4337 = scalar_lea.sflag [#allocation10], 1
    %4338 = vsyncpa %s4337, 1
    %4339 = vsyncpa [#allocation13], 1
    %s4340 = scalar_lea.sflag [#allocation13], 1
    %4341 = vsyncpa %s4340, 1
    %4342 = vsyncpa [#allocation16], 1
    %s4343 = scalar_lea.sflag [#allocation16], 1
    %4344 = vsyncpa %s4343, 1
    %4345 = vsyncpa [#allocation19], 1
    %s4346 = scalar_lea.sflag [#allocation19], 1
    %4347 = vsyncpa %s4346, 1
    %4348 = vsyncpa [#allocation22], 1
    %s4349 = scalar_lea.sflag [#allocation22], 1
    %4350 = vsyncpa %s4349, 1
    %4351 = vsyncpa [#allocation25], 1
    %s4352 = scalar_lea.sflag [#allocation25], 1
    %4353 = vsyncpa %s4352, 1
    %4354 = vsyncpa [#allocation28], 1
    %4355 = vsyncpa [#allocation31], 1
    %4356 = vsyncpa [#allocation34], 1
    %4357 = vsyncpa [#allocation37], 1
    %4358 = vsyncpa [#allocation40], 1
    %4359 = vsyncpa [#allocation5], 1
    %s4360 = scalar_lea.sflag [#allocation5], 1
    %4361 = vsyncpa %s4360, 1
    %4362 = vsyncpa [#allocation43], 1

</llo_original>
